<compile_context>
chip_gen: v6e
topology: v6e:2x2x1
jax: 0.10.0
libtpu: 0.0.40
codegen_flags: <defaults>
</compile_context>

<pallas_src>
import functools

import jax
import jax.numpy as jnp
from jax import lax
from jax.experimental import pallas as pl
from jax.experimental.pallas import tpu as pltpu

KSIZE = 7
PAD = 3  # padding for kernel_size=7


def _spatial_attention_kernel(x_ref, w_ref, o_ref,
                              sum_ref, max_ref, pad_ref, plane_ref,
                              *, C, H, W):
    """Grid = (B, C // c_chunk); channel axis is the (last, "arbitrary") reduction.

    x_ref    : VMEM (1, c_chunk, H*W)       lane-dense input channel chunk
    w_ref    : SMEM (2*K*K,)                flattened conv weight (OIHW order)
    o_ref    : VMEM (1, H, W)               sigmoid(conv) output
    sum_ref  : VMEM (1, H*W) f32            running channel sum (lane-dense)
    max_ref  : VMEM (1, H*W) f32            running channel max (lane-dense)
    pad_ref  : VMEM (2, H+2P, W+2P) f32     zero-padded [avg; max] planes
    plane_ref: VMEM (K, H+2P, W) f32        lane-shifted planes (reused per channel)
    """
    c = pl.program_id(1)
    nc = pl.num_programs(1)
    HW = H * W
    Hp = H + 2 * PAD
    Wp = W + 2 * PAD

    # ---- fused, vectorized channel reduction for this chunk (VALU + one
    #      cross-sublane reduce), accumulated straight into the VMEM refs ----
    xc = x_ref[0].astype(jnp.float32)                      # (c_chunk, HW)
    chunk_sum = jnp.sum(xc, axis=0, keepdims=True)         # (1, HW)
    chunk_max = jnp.max(xc, axis=0, keepdims=True)         # (1, HW)

    @pl.when(c == 0)
    def _():
        sum_ref[...] = chunk_sum
        max_ref[...] = chunk_max

    @pl.when(c > 0)
    def _():
        sum_ref[...] = sum_ref[...] + chunk_sum
        max_ref[...] = jnp.maximum(max_ref[...], chunk_max)

    # ---- last chunk: 7x7 conv (VPU, scalar weights from SMEM) + sigmoid ----
    @pl.when(c == nc - 1)
    def _():
        # Zero only the border strips; the interior is fully overwritten below.
        for ci in range(2):
            pad_ref[ci, 0:PAD, :] = jnp.zeros((PAD, Wp), jnp.float32)
            pad_ref[ci, PAD + H:Hp, :] = jnp.zeros((PAD, Wp), jnp.float32)
            pad_ref[ci, :, 0:PAD] = jnp.zeros((Hp, PAD), jnp.float32)
            pad_ref[ci, :, PAD + W:Wp] = jnp.zeros((Hp, PAD), jnp.float32)

        # Relayout the lane-dense accumulators into the 2D padded planes,
        # one W-wide row at a time (only done once per image).
        inv_c = jnp.float32(1.0 / C)
        for h in range(H):
            row_s = sum_ref[0:1, h * W:(h + 1) * W] * inv_c        # (1, W) mean
            row_m = max_ref[0:1, h * W:(h + 1) * W]                # (1, W) max
            pad_ref[0, PAD + h:PAD + h + 1, PAD:PAD + W] = row_s
            pad_ref[1, PAD + h:PAD + h + 1, PAD:PAD + W] = row_m

        # 7 lane (kj) shifts staged once per channel; the 7 sublane (ki)
        # offsets reuse them via cheap address-offset loads.  Channels are
        # processed sequentially so plane_ref is half the old size.
        # 4 partial accumulators break the 98-term serial dependency chain.
        NUM_ACC = 4
        accs = [jnp.zeros((H, W), jnp.float32) for _ in range(NUM_ACC)]
        t = 0
        for ci in range(2):
            for kj in range(KSIZE):
                plane_ref[kj] = pad_ref[ci, :, kj:kj + W]          # lane shift
            for ki in range(KSIZE):
                for kj in range(KSIZE):
                    tap = plane_ref[kj, ki:ki + H, :]              # sublane offset only
                    widx = ci * KSIZE * KSIZE + ki * KSIZE + kj
                    accs[t % NUM_ACC] = accs[t % NUM_ACC] + tap * w_ref[widx]
                    t += 1
        acc = (accs[0] + accs[1]) + (accs[2] + accs[3])

        o_ref[0] = jax.nn.sigmoid(acc).astype(o_ref.dtype)


def _round_up(n, m):
    return ((n + m - 1) // m) * m


def _pick_chunk(C, HW, itemsize, target_block_bytes=4 << 20):
    """Largest divisor of C whose lane-dense block fits ~target_block_bytes.

    Respects the BlockSpec (8,128) rule on the sublane dim: c_chunk must be a
    multiple of 8 or equal to C.
    """
    lane_hw = _round_up(HW, 128)
    budget = max(1, target_block_bytes // (lane_hw * itemsize))
    divisors = [d for d in range(1, C + 1) if C % d == 0]
    ok = [d for d in divisors if (d % 8 == 0) or (d == C)]
    if not ok:
        ok = [C]
    fits = [d for d in ok if d <= budget]
    return max(fits) if fits else min(ok)


def _vmem_limit_bytes(c_chunk, H, W, itemsize):
    """Estimate VMEM need (double-buffered blocks + scratch) and add headroom."""
    HW = H * W
    Hp, Wp = H + 2 * PAD, W + 2 * PAD
    need = 0
    need += 2 * _round_up(c_chunk, 8) * _round_up(HW, 128) * itemsize   # input (2x buf)
    need += 2 * _round_up(H, 8) * _round_up(W, 128) * itemsize          # output (2x buf)
    need += 2 * 8 * _round_up(HW, 128) * 4                              # sum/max accum
    need += 2 * _round_up(Hp, 8) * _round_up(Wp, 128) * 4               # pad_ref
    need += KSIZE * _round_up(Hp, 8) * _round_up(W, 128) * 4            # plane_ref
    limit = max(2 * need + (4 << 20), 32 << 20)                         # >= v5e default
    return int(min(limit, 48 << 20))                                    # < v7x physical


def spatial_attention(x, weight):
    """x: (B, C, H, W); weight: (1, 2, K, K), no bias -> (B, 1, H, W)."""
    B, C, H, W = x.shape
    HW = H * W
    itemsize = x.dtype.itemsize

    c_chunk = _pick_chunk(C, HW, itemsize)
    nc = C // c_chunk

    x_flat = x.reshape(B, C, HW)                       # free view: NCHW is contiguous
    w_flat = weight.reshape(-1).astype(jnp.float32)    # (2*K*K,) scalars in SMEM

    kernel = functools.partial(_spatial_attention_kernel, C=C, H=H, W=W)

    cost = pl.CostEstimate(
        flops=int(B * HW * (2 * C + 4 * KSIZE * KSIZE + 4)),
        transcendentals=int(B * HW),
        bytes_accessed=int((B * C * HW + B * HW) * itemsize + w_flat.size * 4),
    )

    out = pl.pallas_call(
        kernel,
        out_shape=jax.ShapeDtypeStruct((B, H, W), x.dtype),
        grid_spec=pltpu.PrefetchScalarGridSpec(
            num_scalar_prefetch=0,
            grid=(B, nc),
            in_specs=[
                # lane-dense input chunk: last dim HW (full), sublane dim c_chunk
                pl.BlockSpec((1, c_chunk, HW), lambda b, c: (b, c, 0)),
                pl.BlockSpec(memory_space=pltpu.MemorySpace.SMEM),   # weights as scalars
            ],
            out_specs=pl.BlockSpec((1, H, W), lambda b, c: (b, 0, 0)),
            scratch_shapes=[
                pltpu.VMEM((1, HW), jnp.float32),                          # running sum
                pltpu.VMEM((1, HW), jnp.float32),                          # running max
                pltpu.VMEM((2, H + 2 * PAD, W + 2 * PAD), jnp.float32),    # padded [avg; max]
                pltpu.VMEM((KSIZE, H + 2 * PAD, W), jnp.float32),          # lane-shift staging
            ],
        ),
        compiler_params=pltpu.CompilerParams(
            dimension_semantics=("parallel", "arbitrary"),
            vmem_limit_bytes=_vmem_limit_bytes(c_chunk, H, W, itemsize),
        ),
        cost_estimate=cost,
    )(x_flat, w_flat)

    return out.reshape(B, 1, H, W)


def spatial_attention_ref(x, weight):
    """Pure-JAX reference (mirrors the PyTorch forward)."""
    avg = jnp.mean(x, axis=1, keepdims=True)
    mx = jnp.max(x, axis=1, keepdims=True)
    feat = jnp.concatenate([avg, mx], axis=1)  # (B, 2, H, W)
    y = lax.conv_general_dilated(
        feat, weight,
        window_strides=(1, 1),
        padding=((PAD, PAD), (PAD, PAD)),
        dimension_numbers=("NCHW", "OIHW", "NCHW"),
    )
    return jax.nn.sigmoid(y)


if __name__ == "__main__":
    key = jax.random.PRNGKey(0)
    kx, kw = jax.random.split(key)

    B, C, H, W = 2, 4, 16, 16
    x = jax.random.normal(kx, (B, C, H, W), dtype=jnp.float32)

    # Deterministic conv1 weight init: shape (out=1, in=2, 7, 7), no bias.
    fan_in = 2 * KSIZE * KSIZE
    bound = 1.0 / (fan_in ** 0.5)
    weight = jax.random.uniform(
        kw, (1, 2, KSIZE, KSIZE), dtype=jnp.float32, minval=-bound, maxval=bound
    )

    out = jax.block_until_ready(spatial_attention(x, weight))
    ref = spatial_attention_ref(x, weight)

    assert out.shape == (B, 1, H, W)
    assert jnp.allclose(out, ref, atol=1e-5, rtol=1e-5)

    print("KERNEL_OK")
</pallas_src>

<mosaic_0001>
module attributes {stable_mosaic.version = 11 : i64} {
  func.func @_spatial_attention_kernel(%arg0: i32, %arg1: i32, %arg2: memref<1x4x256xf32, #tpu.memory_space<vmem>>, %arg3: memref<98xf32, #tpu.memory_space<smem>>, %arg4: memref<1x16x16xf32, #tpu.memory_space<vmem>>, %arg5: memref<1x256xf32, #tpu.memory_space<vmem>>, %arg6: memref<1x256xf32, #tpu.memory_space<vmem>>, %arg7: memref<2x22x22xf32, #tpu.memory_space<vmem>>, %arg8: memref<7x22x16xf32, #tpu.memory_space<vmem>>) attributes {dimension_semantics = [#tpu.dimension_semantics<parallel>, #tpu.dimension_semantics<arbitrary>], iteration_bounds = array<i64: 2, 1>, scalar_prefetch = 0 : i64, scratch_operands = 4 : i64, tpu.core_type = #tpu.core_type<tc>, window_params = [{transform_indices = @transform_0, window_bounds = array<i64: 1, 4, 256>}, {transform_indices = @transform_1, window_bounds = array<i64: 98>}, {transform_indices = @transform_2, window_bounds = array<i64: 1, 16, 16>}]} {
    %c0 = arith.constant 0 : index
    %c0_0 = arith.constant 0 : index
    %c0_1 = arith.constant 0 : index
    %0 = vector.load %arg2[%c0, %c0_0, %c0_1] : memref<1x4x256xf32, #tpu.memory_space<vmem>>, vector<1x4x256xf32>
    %1 = vector.shape_cast %0 : vector<1x4x256xf32> to vector<4x256xf32>
    %cst = arith.constant dense<0.000000e+00> : vector<256xf32>
    %2 = vector.multi_reduction <add>, %1, %cst [0] : vector<4x256xf32> to vector<256xf32>
    %3 = vector.shape_cast %2 : vector<256xf32> to vector<1x256xf32>
    %cst_2 = arith.constant dense<0xFF800000> : vector<256xf32>
    %4 = vector.multi_reduction <maximumf>, %1, %cst_2 [0] : vector<4x256xf32> to vector<256xf32>
    %5 = vector.shape_cast %4 : vector<256xf32> to vector<1x256xf32>
    %c0_i32 = arith.constant 0 : i32
    %6 = arith.cmpi eq, %arg1, %c0_i32 : i32
    %7 = arith.extui %6 : i1 to i32
    %c0_i32_3 = arith.constant 0 : i32
    %8 = arith.cmpi ne, %7, %c0_i32_3 : i32
    scf.if %8 {
      %c0_8 = arith.constant 0 : index
      %c0_9 = arith.constant 0 : index
      %15 = vector.load %arg5[%c0_8, %c0_9] : memref<1x256xf32, #tpu.memory_space<vmem>>, vector<1x256xf32>
      tpu.vector_store %arg5[%c0_8, %c0_9], %3 {strides = array<i32>} : memref<1x256xf32, #tpu.memory_space<vmem>>, vector<1x256xf32>,
      %c0_10 = arith.constant 0 : index
      %c0_11 = arith.constant 0 : index
      %16 = vector.load %arg6[%c0_10, %c0_11] : memref<1x256xf32, #tpu.memory_space<vmem>>, vector<1x256xf32>
      tpu.vector_store %arg6[%c0_10, %c0_11], %5 {strides = array<i32>} : memref<1x256xf32, #tpu.memory_space<vmem>>, vector<1x256xf32>,
    } else {
    }
    %c0_i32_4 = arith.constant 0 : i32
    %9 = arith.cmpi sgt, %arg1, %c0_i32_4 : i32
    %10 = arith.extui %9 : i1 to i32
    %c0_i32_5 = arith.constant 0 : i32
    %11 = arith.cmpi ne, %10, %c0_i32_5 : i32
    scf.if %11 {
      %c0_8 = arith.constant 0 : index
      %c0_9 = arith.constant 0 : index
      %15 = vector.load %arg5[%c0_8, %c0_9] : memref<1x256xf32, #tpu.memory_space<vmem>>, vector<1x256xf32>
      %16 = arith.addf %15, %3 : vector<1x256xf32>
      %c0_10 = arith.constant 0 : index
      %c0_11 = arith.constant 0 : index
      %17 = vector.load %arg5[%c0_10, %c0_11] : memref<1x256xf32, #tpu.memory_space<vmem>>, vector<1x256xf32>
      tpu.vector_store %arg5[%c0_10, %c0_11], %16 {strides = array<i32>} : memref<1x256xf32, #tpu.memory_space<vmem>>, vector<1x256xf32>,
      %c0_12 = arith.constant 0 : index
      %c0_13 = arith.constant 0 : index
      %18 = vector.load %arg6[%c0_12, %c0_13] : memref<1x256xf32, #tpu.memory_space<vmem>>, vector<1x256xf32>
      %19 = arith.maximumf %18, %5 : vector<1x256xf32>
      %c0_14 = arith.constant 0 : index
      %c0_15 = arith.constant 0 : index
      %20 = vector.load %arg6[%c0_14, %c0_15] : memref<1x256xf32, #tpu.memory_space<vmem>>, vector<1x256xf32>
      tpu.vector_store %arg6[%c0_14, %c0_15], %19 {strides = array<i32>} : memref<1x256xf32, #tpu.memory_space<vmem>>, vector<1x256xf32>,
    } else {
    }
    %c0_i32_6 = arith.constant 0 : i32
    %12 = arith.cmpi eq, %arg1, %c0_i32_6 : i32
    %13 = arith.extui %12 : i1 to i32
    %c0_i32_7 = arith.constant 0 : i32
    %14 = arith.cmpi ne, %13, %c0_i32_7 : i32
    scf.if %14 {
      %cst_8 = arith.constant 0.000000e+00 : f32
      %15 = vector.broadcast %cst_8 : f32 to vector<3x22xf32>
      %c0_9 = arith.constant 0 : index
      %c0_10 = arith.constant 0 : index
      %c0_11 = arith.constant 0 : index
      %16 = vector.load %arg7[%c0_9, %c0_10, %c0_11] : memref<2x22x22xf32, #tpu.memory_space<vmem>>, vector<1x3x22xf32>
      %17 = vector.shape_cast %16 : vector<1x3x22xf32> to vector<3x22xf32>
      %18 = vector.shape_cast %15 : vector<3x22xf32> to vector<1x3x22xf32>
      tpu.vector_store %arg7[%c0_9, %c0_10, %c0_11], %18 {strides = array<i32>} : memref<2x22x22xf32, #tpu.memory_space<vmem>>, vector<1x3x22xf32>,
      %cst_12 = arith.constant 0.000000e+00 : f32
      %19 = vector.broadcast %cst_12 : f32 to vector<3x22xf32>
      %c0_13 = arith.constant 0 : index
      %c19 = arith.constant 19 : index
      %c0_14 = arith.constant 0 : index
      %20 = vector.load %arg7[%c0_13, %c19, %c0_14] : memref<2x22x22xf32, #tpu.memory_space<vmem>>, vector<1x3x22xf32>
      %21 = vector.shape_cast %20 : vector<1x3x22xf32> to vector<3x22xf32>
      %22 = vector.shape_cast %19 : vector<3x22xf32> to vector<1x3x22xf32>
      tpu.vector_store %arg7[%c0_13, %c19, %c0_14], %22 {strides = array<i32>} : memref<2x22x22xf32, #tpu.memory_space<vmem>>, vector<1x3x22xf32>,
      %cst_15 = arith.constant 0.000000e+00 : f32
      %23 = vector.broadcast %cst_15 : f32 to vector<22x3xf32>
      %c0_16 = arith.constant 0 : index
      %c0_17 = arith.constant 0 : index
      %c0_18 = arith.constant 0 : index
      %24 = vector.load %arg7[%c0_16, %c0_17, %c0_18] : memref<2x22x22xf32, #tpu.memory_space<vmem>>, vector<1x22x3xf32>
      %25 = vector.shape_cast %24 : vector<1x22x3xf32> to vector<22x3xf32>
      %26 = vector.shape_cast %23 : vector<22x3xf32> to vector<1x22x3xf32>
      tpu.vector_store %arg7[%c0_16, %c0_17, %c0_18], %26 {strides = array<i32>} : memref<2x22x22xf32, #tpu.memory_space<vmem>>, vector<1x22x3xf32>,
      %cst_19 = arith.constant 0.000000e+00 : f32
      %27 = vector.broadcast %cst_19 : f32 to vector<22x3xf32>
      %c0_20 = arith.constant 0 : index
      %c0_21 = arith.constant 0 : index
      %c19_22 = arith.constant 19 : index
      %28 = vector.load %arg7[%c0_20, %c0_21, %c19_22] : memref<2x22x22xf32, #tpu.memory_space<vmem>>, vector<1x22x3xf32>
      %29 = vector.shape_cast %28 : vector<1x22x3xf32> to vector<22x3xf32>
      %30 = vector.shape_cast %27 : vector<22x3xf32> to vector<1x22x3xf32>
      tpu.vector_store %arg7[%c0_20, %c0_21, %c19_22], %30 {strides = array<i32>} : memref<2x22x22xf32, #tpu.memory_space<vmem>>, vector<1x22x3xf32>,
      %cst_23 = arith.constant 0.000000e+00 : f32
      %31 = vector.broadcast %cst_23 : f32 to vector<3x22xf32>
      %c1 = arith.constant 1 : index
      %c0_24 = arith.constant 0 : index
      %c0_25 = arith.constant 0 : index
      %32 = vector.load %arg7[%c1, %c0_24, %c0_25] : memref<2x22x22xf32, #tpu.memory_space<vmem>>, vector<1x3x22xf32>
      %33 = vector.shape_cast %32 : vector<1x3x22xf32> to vector<3x22xf32>
      %34 = vector.shape_cast %31 : vector<3x22xf32> to vector<1x3x22xf32>
      tpu.vector_store %arg7[%c1, %c0_24, %c0_25], %34 {strides = array<i32>} : memref<2x22x22xf32, #tpu.memory_space<vmem>>, vector<1x3x22xf32>,
      %cst_26 = arith.constant 0.000000e+00 : f32
      %35 = vector.broadcast %cst_26 : f32 to vector<3x22xf32>
      %c1_27 = arith.constant 1 : index
      %c19_28 = arith.constant 19 : index
      %c0_29 = arith.constant 0 : index
      %36 = vector.load %arg7[%c1_27, %c19_28, %c0_29] : memref<2x22x22xf32, #tpu.memory_space<vmem>>, vector<1x3x22xf32>
      %37 = vector.shape_cast %36 : vector<1x3x22xf32> to vector<3x22xf32>
      %38 = vector.shape_cast %35 : vector<3x22xf32> to vector<1x3x22xf32>
      tpu.vector_store %arg7[%c1_27, %c19_28, %c0_29], %38 {strides = array<i32>} : memref<2x22x22xf32, #tpu.memory_space<vmem>>, vector<1x3x22xf32>,
      %cst_30 = arith.constant 0.000000e+00 : f32
      %39 = vector.broadcast %cst_30 : f32 to vector<22x3xf32>
      %c1_31 = arith.constant 1 : index
      %c0_32 = arith.constant 0 : index
      %c0_33 = arith.constant 0 : index
      %40 = vector.load %arg7[%c1_31, %c0_32, %c0_33] : memref<2x22x22xf32, #tpu.memory_space<vmem>>, vector<1x22x3xf32>
      %41 = vector.shape_cast %40 : vector<1x22x3xf32> to vector<22x3xf32>
      %42 = vector.shape_cast %39 : vector<22x3xf32> to vector<1x22x3xf32>
      tpu.vector_store %arg7[%c1_31, %c0_32, %c0_33], %42 {strides = array<i32>} : memref<2x22x22xf32, #tpu.memory_space<vmem>>, vector<1x22x3xf32>,
      %cst_34 = arith.constant 0.000000e+00 : f32
      %43 = vector.broadcast %cst_34 : f32 to vector<22x3xf32>
      %c1_35 = arith.constant 1 : index
      %c0_36 = arith.constant 0 : index
      %c19_37 = arith.constant 19 : index
      %44 = vector.load %arg7[%c1_35, %c0_36, %c19_37] : memref<2x22x22xf32, #tpu.memory_space<vmem>>, vector<1x22x3xf32>
      %45 = vector.shape_cast %44 : vector<1x22x3xf32> to vector<22x3xf32>
      %46 = vector.shape_cast %43 : vector<22x3xf32> to vector<1x22x3xf32>
      tpu.vector_store %arg7[%c1_35, %c0_36, %c19_37], %46 {strides = array<i32>} : memref<2x22x22xf32, #tpu.memory_space<vmem>>, vector<1x22x3xf32>,
      %c0_38 = arith.constant 0 : index
      %c0_39 = arith.constant 0 : index
      %47 = vector.load %arg5[%c0_38, %c0_39] : memref<1x256xf32, #tpu.memory_space<vmem>>, vector<1x16xf32>
      %cst_40 = arith.constant 2.500000e-01 : f32
      %48 = vector.broadcast %cst_40 : f32 to vector<1x16xf32>
      %49 = arith.mulf %47, %48 : vector<1x16xf32>
      %c0_41 = arith.constant 0 : index
      %c0_42 = arith.constant 0 : index
      %50 = vector.load %arg6[%c0_41, %c0_42] : memref<1x256xf32, #tpu.memory_space<vmem>>, vector<1x16xf32>
      %c0_43 = arith.constant 0 : index
      %c3 = arith.constant 3 : index
      %c3_44 = arith.constant 3 : index
      %51 = vector.load %arg7[%c0_43, %c3, %c3_44] : memref<2x22x22xf32, #tpu.memory_space<vmem>>, vector<1x1x16xf32>
      %52 = vector.shape_cast %51 : vector<1x1x16xf32> to vector<1x16xf32>
      %53 = vector.shape_cast %49 : vector<1x16xf32> to vector<1x1x16xf32>
      tpu.vector_store %arg7[%c0_43, %c3, %c3_44], %53 {strides = array<i32>} : memref<2x22x22xf32, #tpu.memory_space<vmem>>, vector<1x1x16xf32>,
      %c1_45 = arith.constant 1 : index
      %c3_46 = arith.constant 3 : index
      %c3_47 = arith.constant 3 : index
      %54 = vector.load %arg7[%c1_45, %c3_46, %c3_47] : memref<2x22x22xf32, #tpu.memory_space<vmem>>, vector<1x1x16xf32>
      %55 = vector.shape_cast %54 : vector<1x1x16xf32> to vector<1x16xf32>
      %56 = vector.shape_cast %50 : vector<1x16xf32> to vector<1x1x16xf32>
      tpu.vector_store %arg7[%c1_45, %c3_46, %c3_47], %56 {strides = array<i32>} : memref<2x22x22xf32, #tpu.memory_space<vmem>>, vector<1x1x16xf32>,
      %c0_48 = arith.constant 0 : index
      %c16 = arith.constant 16 : index
      %57 = vector.load %arg5[%c0_48, %c16] : memref<1x256xf32, #tpu.memory_space<vmem>>, vector<1x16xf32>
      %cst_49 = arith.constant 2.500000e-01 : f32
      %58 = vector.broadcast %cst_49 : f32 to vector<1x16xf32>
      %59 = arith.mulf %57, %58 : vector<1x16xf32>
      %c0_50 = arith.constant 0 : index
      %c16_51 = arith.constant 16 : index
      %60 = vector.load %arg6[%c0_50, %c16_51] : memref<1x256xf32, #tpu.memory_space<vmem>>, vector<1x16xf32>
      %c0_52 = arith.constant 0 : index
      %c4 = arith.constant 4 : index
      %c3_53 = arith.constant 3 : index
      %61 = vector.load %arg7[%c0_52, %c4, %c3_53] : memref<2x22x22xf32, #tpu.memory_space<vmem>>, vector<1x1x16xf32>
      %62 = vector.shape_cast %61 : vector<1x1x16xf32> to vector<1x16xf32>
      %63 = vector.shape_cast %59 : vector<1x16xf32> to vector<1x1x16xf32>
      tpu.vector_store %arg7[%c0_52, %c4, %c3_53], %63 {strides = array<i32>} : memref<2x22x22xf32, #tpu.memory_space<vmem>>, vector<1x1x16xf32>,
      %c1_54 = arith.constant 1 : index
      %c4_55 = arith.constant 4 : index
      %c3_56 = arith.constant 3 : index
      %64 = vector.load %arg7[%c1_54, %c4_55, %c3_56] : memref<2x22x22xf32, #tpu.memory_space<vmem>>, vector<1x1x16xf32>
      %65 = vector.shape_cast %64 : vector<1x1x16xf32> to vector<1x16xf32>
      %66 = vector.shape_cast %60 : vector<1x16xf32> to vector<1x1x16xf32>
      tpu.vector_store %arg7[%c1_54, %c4_55, %c3_56], %66 {strides = array<i32>} : memref<2x22x22xf32, #tpu.memory_space<vmem>>, vector<1x1x16xf32>,
      %c0_57 = arith.constant 0 : index
      %c32 = arith.constant 32 : index
      %67 = vector.load %arg5[%c0_57, %c32] : memref<1x256xf32, #tpu.memory_space<vmem>>, vector<1x16xf32>
      %cst_58 = arith.constant 2.500000e-01 : f32
      %68 = vector.broadcast %cst_58 : f32 to vector<1x16xf32>
      %69 = arith.mulf %67, %68 : vector<1x16xf32>
      %c0_59 = arith.constant 0 : index
      %c32_60 = arith.constant 32 : index
      %70 = vector.load %arg6[%c0_59, %c32_60] : memref<1x256xf32, #tpu.memory_space<vmem>>, vector<1x16xf32>
      %c0_61 = arith.constant 0 : index
      %c5 = arith.constant 5 : index
      %c3_62 = arith.constant 3 : index
      %71 = vector.load %arg7[%c0_61, %c5, %c3_62] : memref<2x22x22xf32, #tpu.memory_space<vmem>>, vector<1x1x16xf32>
      %72 = vector.shape_cast %71 : vector<1x1x16xf32> to vector<1x16xf32>
      %73 = vector.shape_cast %69 : vector<1x16xf32> to vector<1x1x16xf32>
      tpu.vector_store %arg7[%c0_61, %c5, %c3_62], %73 {strides = array<i32>} : memref<2x22x22xf32, #tpu.memory_space<vmem>>, vector<1x1x16xf32>,
      %c1_63 = arith.constant 1 : index
      %c5_64 = arith.constant 5 : index
      %c3_65 = arith.constant 3 : index
      %74 = vector.load %arg7[%c1_63, %c5_64, %c3_65] : memref<2x22x22xf32, #tpu.memory_space<vmem>>, vector<1x1x16xf32>
      %75 = vector.shape_cast %74 : vector<1x1x16xf32> to vector<1x16xf32>
      %76 = vector.shape_cast %70 : vector<1x16xf32> to vector<1x1x16xf32>
      tpu.vector_store %arg7[%c1_63, %c5_64, %c3_65], %76 {strides = array<i32>} : memref<2x22x22xf32, #tpu.memory_space<vmem>>, vector<1x1x16xf32>,
      %c0_66 = arith.constant 0 : index
      %c48 = arith.constant 48 : index
      %77 = vector.load %arg5[%c0_66, %c48] : memref<1x256xf32, #tpu.memory_space<vmem>>, vector<1x16xf32>
      %cst_67 = arith.constant 2.500000e-01 : f32
      %78 = vector.broadcast %cst_67 : f32 to vector<1x16xf32>
      %79 = arith.mulf %77, %78 : vector<1x16xf32>
      %c0_68 = arith.constant 0 : index
      %c48_69 = arith.constant 48 : index
      %80 = vector.load %arg6[%c0_68, %c48_69] : memref<1x256xf32, #tpu.memory_space<vmem>>, vector<1x16xf32>
      %c0_70 = arith.constant 0 : index
      %c6 = arith.constant 6 : index
      %c3_71 = arith.constant 3 : index
      %81 = vector.load %arg7[%c0_70, %c6, %c3_71] : memref<2x22x22xf32, #tpu.memory_space<vmem>>, vector<1x1x16xf32>
      %82 = vector.shape_cast %81 : vector<1x1x16xf32> to vector<1x16xf32>
      %83 = vector.shape_cast %79 : vector<1x16xf32> to vector<1x1x16xf32>
      tpu.vector_store %arg7[%c0_70, %c6, %c3_71], %83 {strides = array<i32>} : memref<2x22x22xf32, #tpu.memory_space<vmem>>, vector<1x1x16xf32>,
      %c1_72 = arith.constant 1 : index
      %c6_73 = arith.constant 6 : index
      %c3_74 = arith.constant 3 : index
      %84 = vector.load %arg7[%c1_72, %c6_73, %c3_74] : memref<2x22x22xf32, #tpu.memory_space<vmem>>, vector<1x1x16xf32>
      %85 = vector.shape_cast %84 : vector<1x1x16xf32> to vector<1x16xf32>
      %86 = vector.shape_cast %80 : vector<1x16xf32> to vector<1x1x16xf32>
      tpu.vector_store %arg7[%c1_72, %c6_73, %c3_74], %86 {strides = array<i32>} : memref<2x22x22xf32, #tpu.memory_space<vmem>>, vector<1x1x16xf32>,
      %c0_75 = arith.constant 0 : index
      %c64 = arith.constant 64 : index
      %87 = vector.load %arg5[%c0_75, %c64] : memref<1x256xf32, #tpu.memory_space<vmem>>, vector<1x16xf32>
      %cst_76 = arith.constant 2.500000e-01 : f32
      %88 = vector.broadcast %cst_76 : f32 to vector<1x16xf32>
      %89 = arith.mulf %87, %88 : vector<1x16xf32>
      %c0_77 = arith.constant 0 : index
      %c64_78 = arith.constant 64 : index
      %90 = vector.load %arg6[%c0_77, %c64_78] : memref<1x256xf32, #tpu.memory_space<vmem>>, vector<1x16xf32>
      %c0_79 = arith.constant 0 : index
      %c7 = arith.constant 7 : index
      %c3_80 = arith.constant 3 : index
      %91 = vector.load %arg7[%c0_79, %c7, %c3_80] : memref<2x22x22xf32, #tpu.memory_space<vmem>>, vector<1x1x16xf32>
      %92 = vector.shape_cast %91 : vector<1x1x16xf32> to vector<1x16xf32>
      %93 = vector.shape_cast %89 : vector<1x16xf32> to vector<1x1x16xf32>
      tpu.vector_store %arg7[%c0_79, %c7, %c3_80], %93 {strides = array<i32>} : memref<2x22x22xf32, #tpu.memory_space<vmem>>, vector<1x1x16xf32>,
      %c1_81 = arith.constant 1 : index
      %c7_82 = arith.constant 7 : index
      %c3_83 = arith.constant 3 : index
      %94 = vector.load %arg7[%c1_81, %c7_82, %c3_83] : memref<2x22x22xf32, #tpu.memory_space<vmem>>, vector<1x1x16xf32>
      %95 = vector.shape_cast %94 : vector<1x1x16xf32> to vector<1x16xf32>
      %96 = vector.shape_cast %90 : vector<1x16xf32> to vector<1x1x16xf32>
      tpu.vector_store %arg7[%c1_81, %c7_82, %c3_83], %96 {strides = array<i32>} : memref<2x22x22xf32, #tpu.memory_space<vmem>>, vector<1x1x16xf32>,
      %c0_84 = arith.constant 0 : index
      %c80 = arith.constant 80 : index
      %97 = vector.load %arg5[%c0_84, %c80] : memref<1x256xf32, #tpu.memory_space<vmem>>, vector<1x16xf32>
      %cst_85 = arith.constant 2.500000e-01 : f32
      %98 = vector.broadcast %cst_85 : f32 to vector<1x16xf32>
      %99 = arith.mulf %97, %98 : vector<1x16xf32>
      %c0_86 = arith.constant 0 : index
      %c80_87 = arith.constant 80 : index
      %100 = vector.load %arg6[%c0_86, %c80_87] : memref<1x256xf32, #tpu.memory_space<vmem>>, vector<1x16xf32>
      %c0_88 = arith.constant 0 : index
      %c8 = arith.constant 8 : index
      %c3_89 = arith.constant 3 : index
      %101 = vector.load %arg7[%c0_88, %c8, %c3_89] : memref<2x22x22xf32, #tpu.memory_space<vmem>>, vector<1x1x16xf32>
      %102 = vector.shape_cast %101 : vector<1x1x16xf32> to vector<1x16xf32>
      %103 = vector.shape_cast %99 : vector<1x16xf32> to vector<1x1x16xf32>
      tpu.vector_store %arg7[%c0_88, %c8, %c3_89], %103 {strides = array<i32>} : memref<2x22x22xf32, #tpu.memory_space<vmem>>, vector<1x1x16xf32>,
      %c1_90 = arith.constant 1 : index
      %c8_91 = arith.constant 8 : index
      %c3_92 = arith.constant 3 : index
      %104 = vector.load %arg7[%c1_90, %c8_91, %c3_92] : memref<2x22x22xf32, #tpu.memory_space<vmem>>, vector<1x1x16xf32>
      %105 = vector.shape_cast %104 : vector<1x1x16xf32> to vector<1x16xf32>
      %106 = vector.shape_cast %100 : vector<1x16xf32> to vector<1x1x16xf32>
      tpu.vector_store %arg7[%c1_90, %c8_91, %c3_92], %106 {strides = array<i32>} : memref<2x22x22xf32, #tpu.memory_space<vmem>>, vector<1x1x16xf32>,
      %c0_93 = arith.constant 0 : index
      %c96 = arith.constant 96 : index
      %107 = vector.load %arg5[%c0_93, %c96] : memref<1x256xf32, #tpu.memory_space<vmem>>, vector<1x16xf32>
      %cst_94 = arith.constant 2.500000e-01 : f32
      %108 = vector.broadcast %cst_94 : f32 to vector<1x16xf32>
      %109 = arith.mulf %107, %108 : vector<1x16xf32>
      %c0_95 = arith.constant 0 : index
      %c96_96 = arith.constant 96 : index
      %110 = vector.load %arg6[%c0_95, %c96_96] : memref<1x256xf32, #tpu.memory_space<vmem>>, vector<1x16xf32>
      %c0_97 = arith.constant 0 : index
      %c9 = arith.constant 9 : index
      %c3_98 = arith.constant 3 : index
      %111 = vector.load %arg7[%c0_97, %c9, %c3_98] : memref<2x22x22xf32, #tpu.memory_space<vmem>>, vector<1x1x16xf32>
      %112 = vector.shape_cast %111 : vector<1x1x16xf32> to vector<1x16xf32>
      %113 = vector.shape_cast %109 : vector<1x16xf32> to vector<1x1x16xf32>
      tpu.vector_store %arg7[%c0_97, %c9, %c3_98], %113 {strides = array<i32>} : memref<2x22x22xf32, #tpu.memory_space<vmem>>, vector<1x1x16xf32>,
      %c1_99 = arith.constant 1 : index
      %c9_100 = arith.constant 9 : index
      %c3_101 = arith.constant 3 : index
      %114 = vector.load %arg7[%c1_99, %c9_100, %c3_101] : memref<2x22x22xf32, #tpu.memory_space<vmem>>, vector<1x1x16xf32>
      %115 = vector.shape_cast %114 : vector<1x1x16xf32> to vector<1x16xf32>
      %116 = vector.shape_cast %110 : vector<1x16xf32> to vector<1x1x16xf32>
      tpu.vector_store %arg7[%c1_99, %c9_100, %c3_101], %116 {strides = array<i32>} : memref<2x22x22xf32, #tpu.memory_space<vmem>>, vector<1x1x16xf32>,
      %c0_102 = arith.constant 0 : index
      %c112 = arith.constant 112 : index
      %117 = vector.load %arg5[%c0_102, %c112] : memref<1x256xf32, #tpu.memory_space<vmem>>, vector<1x16xf32>
      %cst_103 = arith.constant 2.500000e-01 : f32
      %118 = vector.broadcast %cst_103 : f32 to vector<1x16xf32>
      %119 = arith.mulf %117, %118 : vector<1x16xf32>
      %c0_104 = arith.constant 0 : index
      %c112_105 = arith.constant 112 : index
      %120 = vector.load %arg6[%c0_104, %c112_105] : memref<1x256xf32, #tpu.memory_space<vmem>>, vector<1x16xf32>
      %c0_106 = arith.constant 0 : index
      %c10 = arith.constant 10 : index
      %c3_107 = arith.constant 3 : index
      %121 = vector.load %arg7[%c0_106, %c10, %c3_107] : memref<2x22x22xf32, #tpu.memory_space<vmem>>, vector<1x1x16xf32>
      %122 = vector.shape_cast %121 : vector<1x1x16xf32> to vector<1x16xf32>
      %123 = vector.shape_cast %119 : vector<1x16xf32> to vector<1x1x16xf32>
      tpu.vector_store %arg7[%c0_106, %c10, %c3_107], %123 {strides = array<i32>} : memref<2x22x22xf32, #tpu.memory_space<vmem>>, vector<1x1x16xf32>,
      %c1_108 = arith.constant 1 : index
      %c10_109 = arith.constant 10 : index
      %c3_110 = arith.constant 3 : index
      %124 = vector.load %arg7[%c1_108, %c10_109, %c3_110] : memref<2x22x22xf32, #tpu.memory_space<vmem>>, vector<1x1x16xf32>
      %125 = vector.shape_cast %124 : vector<1x1x16xf32> to vector<1x16xf32>
      %126 = vector.shape_cast %120 : vector<1x16xf32> to vector<1x1x16xf32>
      tpu.vector_store %arg7[%c1_108, %c10_109, %c3_110], %126 {strides = array<i32>} : memref<2x22x22xf32, #tpu.memory_space<vmem>>, vector<1x1x16xf32>,
      %c0_111 = arith.constant 0 : index
      %c128 = arith.constant 128 : index
      %127 = vector.load %arg5[%c0_111, %c128] : memref<1x256xf32, #tpu.memory_space<vmem>>, vector<1x16xf32>
      %cst_112 = arith.constant 2.500000e-01 : f32
      %128 = vector.broadcast %cst_112 : f32 to vector<1x16xf32>
      %129 = arith.mulf %127, %128 : vector<1x16xf32>
      %c0_113 = arith.constant 0 : index
      %c128_114 = arith.constant 128 : index
      %130 = vector.load %arg6[%c0_113, %c128_114] : memref<1x256xf32, #tpu.memory_space<vmem>>, vector<1x16xf32>
      %c0_115 = arith.constant 0 : index
      %c11 = arith.constant 11 : index
      %c3_116 = arith.constant 3 : index
      %131 = vector.load %arg7[%c0_115, %c11, %c3_116] : memref<2x22x22xf32, #tpu.memory_space<vmem>>, vector<1x1x16xf32>
      %132 = vector.shape_cast %131 : vector<1x1x16xf32> to vector<1x16xf32>
      %133 = vector.shape_cast %129 : vector<1x16xf32> to vector<1x1x16xf32>
      tpu.vector_store %arg7[%c0_115, %c11, %c3_116], %133 {strides = array<i32>} : memref<2x22x22xf32, #tpu.memory_space<vmem>>, vector<1x1x16xf32>,
      %c1_117 = arith.constant 1 : index
      %c11_118 = arith.constant 11 : index
      %c3_119 = arith.constant 3 : index
      %134 = vector.load %arg7[%c1_117, %c11_118, %c3_119] : memref<2x22x22xf32, #tpu.memory_space<vmem>>, vector<1x1x16xf32>
      %135 = vector.shape_cast %134 : vector<1x1x16xf32> to vector<1x16xf32>
      %136 = vector.shape_cast %130 : vector<1x16xf32> to vector<1x1x16xf32>
      tpu.vector_store %arg7[%c1_117, %c11_118, %c3_119], %136 {strides = array<i32>} : memref<2x22x22xf32, #tpu.memory_space<vmem>>, vector<1x1x16xf32>,
      %c0_120 = arith.constant 0 : index
      %c144 = arith.constant 144 : index
      %137 = vector.load %arg5[%c0_120, %c144] : memref<1x256xf32, #tpu.memory_space<vmem>>, vector<1x16xf32>
      %cst_121 = arith.constant 2.500000e-01 : f32
      %138 = vector.broadcast %cst_121 : f32 to vector<1x16xf32>
      %139 = arith.mulf %137, %138 : vector<1x16xf32>
      %c0_122 = arith.constant 0 : index
      %c144_123 = arith.constant 144 : index
      %140 = vector.load %arg6[%c0_122, %c144_123] : memref<1x256xf32, #tpu.memory_space<vmem>>, vector<1x16xf32>
      %c0_124 = arith.constant 0 : index
      %c12 = arith.constant 12 : index
      %c3_125 = arith.constant 3 : index
      %141 = vector.load %arg7[%c0_124, %c12, %c3_125] : memref<2x22x22xf32, #tpu.memory_space<vmem>>, vector<1x1x16xf32>
      %142 = vector.shape_cast %141 : vector<1x1x16xf32> to vector<1x16xf32>
      %143 = vector.shape_cast %139 : vector<1x16xf32> to vector<1x1x16xf32>
      tpu.vector_store %arg7[%c0_124, %c12, %c3_125], %143 {strides = array<i32>} : memref<2x22x22xf32, #tpu.memory_space<vmem>>, vector<1x1x16xf32>,
      %c1_126 = arith.constant 1 : index
      %c12_127 = arith.constant 12 : index
      %c3_128 = arith.constant 3 : index
      %144 = vector.load %arg7[%c1_126, %c12_127, %c3_128] : memref<2x22x22xf32, #tpu.memory_space<vmem>>, vector<1x1x16xf32>
      %145 = vector.shape_cast %144 : vector<1x1x16xf32> to vector<1x16xf32>
      %146 = vector.shape_cast %140 : vector<1x16xf32> to vector<1x1x16xf32>
      tpu.vector_store %arg7[%c1_126, %c12_127, %c3_128], %146 {strides = array<i32>} : memref<2x22x22xf32, #tpu.memory_space<vmem>>, vector<1x1x16xf32>,
      %c0_129 = arith.constant 0 : index
      %c160 = arith.constant 160 : index
      %147 = vector.load %arg5[%c0_129, %c160] : memref<1x256xf32, #tpu.memory_space<vmem>>, vector<1x16xf32>
      %cst_130 = arith.constant 2.500000e-01 : f32
      %148 = vector.broadcast %cst_130 : f32 to vector<1x16xf32>
      %149 = arith.mulf %147, %148 : vector<1x16xf32>
      %c0_131 = arith.constant 0 : index
      %c160_132 = arith.constant 160 : index
      %150 = vector.load %arg6[%c0_131, %c160_132] : memref<1x256xf32, #tpu.memory_space<vmem>>, vector<1x16xf32>
      %c0_133 = arith.constant 0 : index
      %c13 = arith.constant 13 : index
      %c3_134 = arith.constant 3 : index
      %151 = vector.load %arg7[%c0_133, %c13, %c3_134] : memref<2x22x22xf32, #tpu.memory_space<vmem>>, vector<1x1x16xf32>
      %152 = vector.shape_cast %151 : vector<1x1x16xf32> to vector<1x16xf32>
      %153 = vector.shape_cast %149 : vector<1x16xf32> to vector<1x1x16xf32>
      tpu.vector_store %arg7[%c0_133, %c13, %c3_134], %153 {strides = array<i32>} : memref<2x22x22xf32, #tpu.memory_space<vmem>>, vector<1x1x16xf32>,
      %c1_135 = arith.constant 1 : index
      %c13_136 = arith.constant 13 : index
      %c3_137 = arith.constant 3 : index
      %154 = vector.load %arg7[%c1_135, %c13_136, %c3_137] : memref<2x22x22xf32, #tpu.memory_space<vmem>>, vector<1x1x16xf32>
      %155 = vector.shape_cast %154 : vector<1x1x16xf32> to vector<1x16xf32>
      %156 = vector.shape_cast %150 : vector<1x16xf32> to vector<1x1x16xf32>
      tpu.vector_store %arg7[%c1_135, %c13_136, %c3_137], %156 {strides = array<i32>} : memref<2x22x22xf32, #tpu.memory_space<vmem>>, vector<1x1x16xf32>,
      %c0_138 = arith.constant 0 : index
      %c176 = arith.constant 176 : index
      %157 = vector.load %arg5[%c0_138, %c176] : memref<1x256xf32, #tpu.memory_space<vmem>>, vector<1x16xf32>
      %cst_139 = arith.constant 2.500000e-01 : f32
      %158 = vector.broadcast %cst_139 : f32 to vector<1x16xf32>
      %159 = arith.mulf %157, %158 : vector<1x16xf32>
      %c0_140 = arith.constant 0 : index
      %c176_141 = arith.constant 176 : index
      %160 = vector.load %arg6[%c0_140, %c176_141] : memref<1x256xf32, #tpu.memory_space<vmem>>, vector<1x16xf32>
      %c0_142 = arith.constant 0 : index
      %c14 = arith.constant 14 : index
      %c3_143 = arith.constant 3 : index
      %161 = vector.load %arg7[%c0_142, %c14, %c3_143] : memref<2x22x22xf32, #tpu.memory_space<vmem>>, vector<1x1x16xf32>
      %162 = vector.shape_cast %161 : vector<1x1x16xf32> to vector<1x16xf32>
      %163 = vector.shape_cast %159 : vector<1x16xf32> to vector<1x1x16xf32>
      tpu.vector_store %arg7[%c0_142, %c14, %c3_143], %163 {strides = array<i32>} : memref<2x22x22xf32, #tpu.memory_space<vmem>>, vector<1x1x16xf32>,
      %c1_144 = arith.constant 1 : index
      %c14_145 = arith.constant 14 : index
      %c3_146 = arith.constant 3 : index
      %164 = vector.load %arg7[%c1_144, %c14_145, %c3_146] : memref<2x22x22xf32, #tpu.memory_space<vmem>>, vector<1x1x16xf32>
      %165 = vector.shape_cast %164 : vector<1x1x16xf32> to vector<1x16xf32>
      %166 = vector.shape_cast %160 : vector<1x16xf32> to vector<1x1x16xf32>
      tpu.vector_store %arg7[%c1_144, %c14_145, %c3_146], %166 {strides = array<i32>} : memref<2x22x22xf32, #tpu.memory_space<vmem>>, vector<1x1x16xf32>,
      %c0_147 = arith.constant 0 : index
      %c192 = arith.constant 192 : index
      %167 = vector.load %arg5[%c0_147, %c192] : memref<1x256xf32, #tpu.memory_space<vmem>>, vector<1x16xf32>
      %cst_148 = arith.constant 2.500000e-01 : f32
      %168 = vector.broadcast %cst_148 : f32 to vector<1x16xf32>
      %169 = arith.mulf %167, %168 : vector<1x16xf32>
      %c0_149 = arith.constant 0 : index
      %c192_150 = arith.constant 192 : index
      %170 = vector.load %arg6[%c0_149, %c192_150] : memref<1x256xf32, #tpu.memory_space<vmem>>, vector<1x16xf32>
      %c0_151 = arith.constant 0 : index
      %c15 = arith.constant 15 : index
      %c3_152 = arith.constant 3 : index
      %171 = vector.load %arg7[%c0_151, %c15, %c3_152] : memref<2x22x22xf32, #tpu.memory_space<vmem>>, vector<1x1x16xf32>
      %172 = vector.shape_cast %171 : vector<1x1x16xf32> to vector<1x16xf32>
      %173 = vector.shape_cast %169 : vector<1x16xf32> to vector<1x1x16xf32>
      tpu.vector_store %arg7[%c0_151, %c15, %c3_152], %173 {strides = array<i32>} : memref<2x22x22xf32, #tpu.memory_space<vmem>>, vector<1x1x16xf32>,
      %c1_153 = arith.constant 1 : index
      %c15_154 = arith.constant 15 : index
      %c3_155 = arith.constant 3 : index
      %174 = vector.load %arg7[%c1_153, %c15_154, %c3_155] : memref<2x22x22xf32, #tpu.memory_space<vmem>>, vector<1x1x16xf32>
      %175 = vector.shape_cast %174 : vector<1x1x16xf32> to vector<1x16xf32>
      %176 = vector.shape_cast %170 : vector<1x16xf32> to vector<1x1x16xf32>
      tpu.vector_store %arg7[%c1_153, %c15_154, %c3_155], %176 {strides = array<i32>} : memref<2x22x22xf32, #tpu.memory_space<vmem>>, vector<1x1x16xf32>,
      %c0_156 = arith.constant 0 : index
      %c208 = arith.constant 208 : index
      %177 = vector.load %arg5[%c0_156, %c208] : memref<1x256xf32, #tpu.memory_space<vmem>>, vector<1x16xf32>
      %cst_157 = arith.constant 2.500000e-01 : f32
      %178 = vector.broadcast %cst_157 : f32 to vector<1x16xf32>
      %179 = arith.mulf %177, %178 : vector<1x16xf32>
      %c0_158 = arith.constant 0 : index
      %c208_159 = arith.constant 208 : index
      %180 = vector.load %arg6[%c0_158, %c208_159] : memref<1x256xf32, #tpu.memory_space<vmem>>, vector<1x16xf32>
      %c0_160 = arith.constant 0 : index
      %c16_161 = arith.constant 16 : index
      %c3_162 = arith.constant 3 : index
      %181 = vector.load %arg7[%c0_160, %c16_161, %c3_162] : memref<2x22x22xf32, #tpu.memory_space<vmem>>, vector<1x1x16xf32>
      %182 = vector.shape_cast %181 : vector<1x1x16xf32> to vector<1x16xf32>
      %183 = vector.shape_cast %179 : vector<1x16xf32> to vector<1x1x16xf32>
      tpu.vector_store %arg7[%c0_160, %c16_161, %c3_162], %183 {strides = array<i32>} : memref<2x22x22xf32, #tpu.memory_space<vmem>>, vector<1x1x16xf32>,
      %c1_163 = arith.constant 1 : index
      %c16_164 = arith.constant 16 : index
      %c3_165 = arith.constant 3 : index
      %184 = vector.load %arg7[%c1_163, %c16_164, %c3_165] : memref<2x22x22xf32, #tpu.memory_space<vmem>>, vector<1x1x16xf32>
      %185 = vector.shape_cast %184 : vector<1x1x16xf32> to vector<1x16xf32>
      %186 = vector.shape_cast %180 : vector<1x16xf32> to vector<1x1x16xf32>
      tpu.vector_store %arg7[%c1_163, %c16_164, %c3_165], %186 {strides = array<i32>} : memref<2x22x22xf32, #tpu.memory_space<vmem>>, vector<1x1x16xf32>,
      %c0_166 = arith.constant 0 : index
      %c224 = arith.constant 224 : index
      %187 = vector.load %arg5[%c0_166, %c224] : memref<1x256xf32, #tpu.memory_space<vmem>>, vector<1x16xf32>
      %cst_167 = arith.constant 2.500000e-01 : f32
      %188 = vector.broadcast %cst_167 : f32 to vector<1x16xf32>
      %189 = arith.mulf %187, %188 : vector<1x16xf32>
      %c0_168 = arith.constant 0 : index
      %c224_169 = arith.constant 224 : index
      %190 = vector.load %arg6[%c0_168, %c224_169] : memref<1x256xf32, #tpu.memory_space<vmem>>, vector<1x16xf32>
      %c0_170 = arith.constant 0 : index
      %c17 = arith.constant 17 : index
      %c3_171 = arith.constant 3 : index
      %191 = vector.load %arg7[%c0_170, %c17, %c3_171] : memref<2x22x22xf32, #tpu.memory_space<vmem>>, vector<1x1x16xf32>
      %192 = vector.shape_cast %191 : vector<1x1x16xf32> to vector<1x16xf32>
      %193 = vector.shape_cast %189 : vector<1x16xf32> to vector<1x1x16xf32>
      tpu.vector_store %arg7[%c0_170, %c17, %c3_171], %193 {strides = array<i32>} : memref<2x22x22xf32, #tpu.memory_space<vmem>>, vector<1x1x16xf32>,
      %c1_172 = arith.constant 1 : index
      %c17_173 = arith.constant 17 : index
      %c3_174 = arith.constant 3 : index
      %194 = vector.load %arg7[%c1_172, %c17_173, %c3_174] : memref<2x22x22xf32, #tpu.memory_space<vmem>>, vector<1x1x16xf32>
      %195 = vector.shape_cast %194 : vector<1x1x16xf32> to vector<1x16xf32>
      %196 = vector.shape_cast %190 : vector<1x16xf32> to vector<1x1x16xf32>
      tpu.vector_store %arg7[%c1_172, %c17_173, %c3_174], %196 {strides = array<i32>} : memref<2x22x22xf32, #tpu.memory_space<vmem>>, vector<1x1x16xf32>,
      %c0_175 = arith.constant 0 : index
      %c240 = arith.constant 240 : index
      %197 = vector.load %arg5[%c0_175, %c240] : memref<1x256xf32, #tpu.memory_space<vmem>>, vector<1x16xf32>
      %cst_176 = arith.constant 2.500000e-01 : f32
      %198 = vector.broadcast %cst_176 : f32 to vector<1x16xf32>
      %199 = arith.mulf %197, %198 : vector<1x16xf32>
      %c0_177 = arith.constant 0 : index
      %c240_178 = arith.constant 240 : index
      %200 = vector.load %arg6[%c0_177, %c240_178] : memref<1x256xf32, #tpu.memory_space<vmem>>, vector<1x16xf32>
      %c0_179 = arith.constant 0 : index
      %c18 = arith.constant 18 : index
      %c3_180 = arith.constant 3 : index
      %201 = vector.load %arg7[%c0_179, %c18, %c3_180] : memref<2x22x22xf32, #tpu.memory_space<vmem>>, vector<1x1x16xf32>
      %202 = vector.shape_cast %201 : vector<1x1x16xf32> to vector<1x16xf32>
      %203 = vector.shape_cast %199 : vector<1x16xf32> to vector<1x1x16xf32>
      tpu.vector_store %arg7[%c0_179, %c18, %c3_180], %203 {strides = array<i32>} : memref<2x22x22xf32, #tpu.memory_space<vmem>>, vector<1x1x16xf32>,
      %c1_181 = arith.constant 1 : index
      %c18_182 = arith.constant 18 : index
      %c3_183 = arith.constant 3 : index
      %204 = vector.load %arg7[%c1_181, %c18_182, %c3_183] : memref<2x22x22xf32, #tpu.memory_space<vmem>>, vector<1x1x16xf32>
      %205 = vector.shape_cast %204 : vector<1x1x16xf32> to vector<1x16xf32>
      %206 = vector.shape_cast %200 : vector<1x16xf32> to vector<1x1x16xf32>
      tpu.vector_store %arg7[%c1_181, %c18_182, %c3_183], %206 {strides = array<i32>} : memref<2x22x22xf32, #tpu.memory_space<vmem>>, vector<1x1x16xf32>,
      %cst_184 = arith.constant 0.000000e+00 : f32
      %207 = vector.broadcast %cst_184 : f32 to vector<16x16xf32>
      %cst_185 = arith.constant 0.000000e+00 : f32
      %208 = vector.broadcast %cst_185 : f32 to vector<16x16xf32>
      %cst_186 = arith.constant 0.000000e+00 : f32
      %209 = vector.broadcast %cst_186 : f32 to vector<16x16xf32>
      %cst_187 = arith.constant 0.000000e+00 : f32
      %210 = vector.broadcast %cst_187 : f32 to vector<16x16xf32>
      %c0_188 = arith.constant 0 : index
      %c0_189 = arith.constant 0 : index
      %c0_190 = arith.constant 0 : index
      %211 = vector.load %arg7[%c0_188, %c0_189, %c0_190] : memref<2x22x22xf32, #tpu.memory_space<vmem>>, vector<1x22x16xf32>
      %212 = vector.shape_cast %211 : vector<1x22x16xf32> to vector<22x16xf32>
      %c0_191 = arith.constant 0 : index
      %c0_192 = arith.constant 0 : index
      %c0_193 = arith.constant 0 : index
      %213 = vector.load %arg8[%c0_191, %c0_192, %c0_193] : memref<7x22x16xf32, #tpu.memory_space<vmem>>, vector<1x22x16xf32>
      %214 = vector.shape_cast %213 : vector<1x22x16xf32> to vector<22x16xf32>
      %215 = vector.shape_cast %212 : vector<22x16xf32> to vector<1x22x16xf32>
      tpu.vector_store %arg8[%c0_191, %c0_192, %c0_193], %215 {strides = array<i32>} : memref<7x22x16xf32, #tpu.memory_space<vmem>>, vector<1x22x16xf32>,
      %c0_194 = arith.constant 0 : index
      %c0_195 = arith.constant 0 : index
      %c1_196 = arith.constant 1 : index
      %216 = vector.load %arg7[%c0_194, %c0_195, %c1_196] : memref<2x22x22xf32, #tpu.memory_space<vmem>>, vector<1x22x16xf32>
      %217 = vector.shape_cast %216 : vector<1x22x16xf32> to vector<22x16xf32>
      %c1_197 = arith.constant 1 : index
      %c0_198 = arith.constant 0 : index
      %c0_199 = arith.constant 0 : index
      %218 = vector.load %arg8[%c1_197, %c0_198, %c0_199] : memref<7x22x16xf32, #tpu.memory_space<vmem>>, vector<1x22x16xf32>
      %219 = vector.shape_cast %218 : vector<1x22x16xf32> to vector<22x16xf32>
      %220 = vector.shape_cast %217 : vector<22x16xf32> to vector<1x22x16xf32>
      tpu.vector_store %arg8[%c1_197, %c0_198, %c0_199], %220 {strides = array<i32>} : memref<7x22x16xf32, #tpu.memory_space<vmem>>, vector<1x22x16xf32>,
      %c0_200 = arith.constant 0 : index
      %c0_201 = arith.constant 0 : index
      %c2 = arith.constant 2 : index
      %221 = vector.load %arg7[%c0_200, %c0_201, %c2] : memref<2x22x22xf32, #tpu.memory_space<vmem>>, vector<1x22x16xf32>
      %222 = vector.shape_cast %221 : vector<1x22x16xf32> to vector<22x16xf32>
      %c2_202 = arith.constant 2 : index
      %c0_203 = arith.constant 0 : index
      %c0_204 = arith.constant 0 : index
      %223 = vector.load %arg8[%c2_202, %c0_203, %c0_204] : memref<7x22x16xf32, #tpu.memory_space<vmem>>, vector<1x22x16xf32>
      %224 = vector.shape_cast %223 : vector<1x22x16xf32> to vector<22x16xf32>
      %225 = vector.shape_cast %222 : vector<22x16xf32> to vector<1x22x16xf32>
      tpu.vector_store %arg8[%c2_202, %c0_203, %c0_204], %225 {strides = array<i32>} : memref<7x22x16xf32, #tpu.memory_space<vmem>>, vector<1x22x16xf32>,
      %c0_205 = arith.constant 0 : index
      %c0_206 = arith.constant 0 : index
      %c3_207 = arith.constant 3 : index
      %226 = vector.load %arg7[%c0_205, %c0_206, %c3_207] : memref<2x22x22xf32, #tpu.memory_space<vmem>>, vector<1x22x16xf32>
      %227 = vector.shape_cast %226 : vector<1x22x16xf32> to vector<22x16xf32>
      %c3_208 = arith.constant 3 : index
      %c0_209 = arith.constant 0 : index
      %c0_210 = arith.constant 0 : index
      %228 = vector.load %arg8[%c3_208, %c0_209, %c0_210] : memref<7x22x16xf32, #tpu.memory_space<vmem>>, vector<1x22x16xf32>
      %229 = vector.shape_cast %228 : vector<1x22x16xf32> to vector<22x16xf32>
      %230 = vector.shape_cast %227 : vector<22x16xf32> to vector<1x22x16xf32>
      tpu.vector_store %arg8[%c3_208, %c0_209, %c0_210], %230 {strides = array<i32>} : memref<7x22x16xf32, #tpu.memory_space<vmem>>, vector<1x22x16xf32>,
      %c0_211 = arith.constant 0 : index
      %c0_212 = arith.constant 0 : index
      %c4_213 = arith.constant 4 : index
      %231 = vector.load %arg7[%c0_211, %c0_212, %c4_213] : memref<2x22x22xf32, #tpu.memory_space<vmem>>, vector<1x22x16xf32>
      %232 = vector.shape_cast %231 : vector<1x22x16xf32> to vector<22x16xf32>
      %c4_214 = arith.constant 4 : index
      %c0_215 = arith.constant 0 : index
      %c0_216 = arith.constant 0 : index
      %233 = vector.load %arg8[%c4_214, %c0_215, %c0_216] : memref<7x22x16xf32, #tpu.memory_space<vmem>>, vector<1x22x16xf32>
      %234 = vector.shape_cast %233 : vector<1x22x16xf32> to vector<22x16xf32>
      %235 = vector.shape_cast %232 : vector<22x16xf32> to vector<1x22x16xf32>
      tpu.vector_store %arg8[%c4_214, %c0_215, %c0_216], %235 {strides = array<i32>} : memref<7x22x16xf32, #tpu.memory_space<vmem>>, vector<1x22x16xf32>,
      %c0_217 = arith.constant 0 : index
      %c0_218 = arith.constant 0 : index
      %c5_219 = arith.constant 5 : index
      %236 = vector.load %arg7[%c0_217, %c0_218, %c5_219] : memref<2x22x22xf32, #tpu.memory_space<vmem>>, vector<1x22x16xf32>
      %237 = vector.shape_cast %236 : vector<1x22x16xf32> to vector<22x16xf32>
      %c5_220 = arith.constant 5 : index
      %c0_221 = arith.constant 0 : index
      %c0_222 = arith.constant 0 : index
      %238 = vector.load %arg8[%c5_220, %c0_221, %c0_222] : memref<7x22x16xf32, #tpu.memory_space<vmem>>, vector<1x22x16xf32>
      %239 = vector.shape_cast %238 : vector<1x22x16xf32> to vector<22x16xf32>
      %240 = vector.shape_cast %237 : vector<22x16xf32> to vector<1x22x16xf32>
      tpu.vector_store %arg8[%c5_220, %c0_221, %c0_222], %240 {strides = array<i32>} : memref<7x22x16xf32, #tpu.memory_space<vmem>>, vector<1x22x16xf32>,
      %c0_223 = arith.constant 0 : index
      %c0_224 = arith.constant 0 : index
      %c6_225 = arith.constant 6 : index
      %241 = vector.load %arg7[%c0_223, %c0_224, %c6_225] : memref<2x22x22xf32, #tpu.memory_space<vmem>>, vector<1x22x16xf32>
      %242 = vector.shape_cast %241 : vector<1x22x16xf32> to vector<22x16xf32>
      %c6_226 = arith.constant 6 : index
      %c0_227 = arith.constant 0 : index
      %c0_228 = arith.constant 0 : index
      %243 = vector.load %arg8[%c6_226, %c0_227, %c0_228] : memref<7x22x16xf32, #tpu.memory_space<vmem>>, vector<1x22x16xf32>
      %244 = vector.shape_cast %243 : vector<1x22x16xf32> to vector<22x16xf32>
      %245 = vector.shape_cast %242 : vector<22x16xf32> to vector<1x22x16xf32>
      tpu.vector_store %arg8[%c6_226, %c0_227, %c0_228], %245 {strides = array<i32>} : memref<7x22x16xf32, #tpu.memory_space<vmem>>, vector<1x22x16xf32>,
      %c0_229 = arith.constant 0 : index
      %c0_230 = arith.constant 0 : index
      %c0_231 = arith.constant 0 : index
      %246 = vector.load %arg8[%c0_229, %c0_230, %c0_231] : memref<7x22x16xf32, #tpu.memory_space<vmem>>, vector<1x16x16xf32>
      %247 = vector.shape_cast %246 : vector<1x16x16xf32> to vector<16x16xf32>
      %c0_232 = arith.constant 0 : index
      %248 = memref.load %arg3[%c0_232] : memref<98xf32, #tpu.memory_space<smem>>
      %249 = vector.broadcast %248 : f32 to vector<16x16xf32>
      %250 = arith.mulf %247, %249 : vector<16x16xf32>
      %251 = arith.addf %207, %250 : vector<16x16xf32>
      %c1_233 = arith.constant 1 : index
      %c0_234 = arith.constant 0 : index
      %c0_235 = arith.constant 0 : index
      %252 = vector.load %arg8[%c1_233, %c0_234, %c0_235] : memref<7x22x16xf32, #tpu.memory_space<vmem>>, vector<1x16x16xf32>
      %253 = vector.shape_cast %252 : vector<1x16x16xf32> to vector<16x16xf32>
      %c1_236 = arith.constant 1 : index
      %254 = memref.load %arg3[%c1_236] : memref<98xf32, #tpu.memory_space<smem>>
      %255 = vector.broadcast %254 : f32 to vector<16x16xf32>
      %256 = arith.mulf %253, %255 : vector<16x16xf32>
      %257 = arith.addf %208, %256 : vector<16x16xf32>
      %c2_237 = arith.constant 2 : index
      %c0_238 = arith.constant 0 : index
      %c0_239 = arith.constant 0 : index
      %258 = vector.load %arg8[%c2_237, %c0_238, %c0_239] : memref<7x22x16xf32, #tpu.memory_space<vmem>>, vector<1x16x16xf32>
      %259 = vector.shape_cast %258 : vector<1x16x16xf32> to vector<16x16xf32>
      %c2_240 = arith.constant 2 : index
      %260 = memref.load %arg3[%c2_240] : memref<98xf32, #tpu.memory_space<smem>>
      %261 = vector.broadcast %260 : f32 to vector<16x16xf32>
      %262 = arith.mulf %259, %261 : vector<16x16xf32>
      %263 = arith.addf %209, %262 : vector<16x16xf32>
      %c3_241 = arith.constant 3 : index
      %c0_242 = arith.constant 0 : index
      %c0_243 = arith.constant 0 : index
      %264 = vector.load %arg8[%c3_241, %c0_242, %c0_243] : memref<7x22x16xf32, #tpu.memory_space<vmem>>, vector<1x16x16xf32>
      %265 = vector.shape_cast %264 : vector<1x16x16xf32> to vector<16x16xf32>
      %c3_244 = arith.constant 3 : index
      %266 = memref.load %arg3[%c3_244] : memref<98xf32, #tpu.memory_space<smem>>
      %267 = vector.broadcast %266 : f32 to vector<16x16xf32>
      %268 = arith.mulf %265, %267 : vector<16x16xf32>
      %269 = arith.addf %210, %268 : vector<16x16xf32>
      %c4_245 = arith.constant 4 : index
      %c0_246 = arith.constant 0 : index
      %c0_247 = arith.constant 0 : index
      %270 = vector.load %arg8[%c4_245, %c0_246, %c0_247] : memref<7x22x16xf32, #tpu.memory_space<vmem>>, vector<1x16x16xf32>
      %271 = vector.shape_cast %270 : vector<1x16x16xf32> to vector<16x16xf32>
      %c4_248 = arith.constant 4 : index
      %272 = memref.load %arg3[%c4_248] : memref<98xf32, #tpu.memory_space<smem>>
      %273 = vector.broadcast %272 : f32 to vector<16x16xf32>
      %274 = arith.mulf %271, %273 : vector<16x16xf32>
      %275 = arith.addf %251, %274 : vector<16x16xf32>
      %c5_249 = arith.constant 5 : index
      %c0_250 = arith.constant 0 : index
      %c0_251 = arith.constant 0 : index
      %276 = vector.load %arg8[%c5_249, %c0_250, %c0_251] : memref<7x22x16xf32, #tpu.memory_space<vmem>>, vector<1x16x16xf32>
      %277 = vector.shape_cast %276 : vector<1x16x16xf32> to vector<16x16xf32>
      %c5_252 = arith.constant 5 : index
      %278 = memref.load %arg3[%c5_252] : memref<98xf32, #tpu.memory_space<smem>>
      %279 = vector.broadcast %278 : f32 to vector<16x16xf32>
      %280 = arith.mulf %277, %279 : vector<16x16xf32>
      %281 = arith.addf %257, %280 : vector<16x16xf32>
      %c6_253 = arith.constant 6 : index
      %c0_254 = arith.constant 0 : index
      %c0_255 = arith.constant 0 : index
      %282 = vector.load %arg8[%c6_253, %c0_254, %c0_255] : memref<7x22x16xf32, #tpu.memory_space<vmem>>, vector<1x16x16xf32>
      %283 = vector.shape_cast %282 : vector<1x16x16xf32> to vector<16x16xf32>
      %c6_256 = arith.constant 6 : index
      %284 = memref.load %arg3[%c6_256] : memref<98xf32, #tpu.memory_space<smem>>
      %285 = vector.broadcast %284 : f32 to vector<16x16xf32>
      %286 = arith.mulf %283, %285 : vector<16x16xf32>
      %287 = arith.addf %263, %286 : vector<16x16xf32>
      %c0_257 = arith.constant 0 : index
      %c1_258 = arith.constant 1 : index
      %c0_259 = arith.constant 0 : index
      %288 = vector.load %arg8[%c0_257, %c1_258, %c0_259] : memref<7x22x16xf32, #tpu.memory_space<vmem>>, vector<1x16x16xf32>
      %289 = vector.shape_cast %288 : vector<1x16x16xf32> to vector<16x16xf32>
      %c7_260 = arith.constant 7 : index
      %290 = memref.load %arg3[%c7_260] : memref<98xf32, #tpu.memory_space<smem>>
      %291 = vector.broadcast %290 : f32 to vector<16x16xf32>
      %292 = arith.mulf %289, %291 : vector<16x16xf32>
      %293 = arith.addf %269, %292 : vector<16x16xf32>
      %c1_261 = arith.constant 1 : index
      %c1_262 = arith.constant 1 : index
      %c0_263 = arith.constant 0 : index
      %294 = vector.load %arg8[%c1_261, %c1_262, %c0_263] : memref<7x22x16xf32, #tpu.memory_space<vmem>>, vector<1x16x16xf32>
      %295 = vector.shape_cast %294 : vector<1x16x16xf32> to vector<16x16xf32>
      %c8_264 = arith.constant 8 : index
      %296 = memref.load %arg3[%c8_264] : memref<98xf32, #tpu.memory_space<smem>>
      %297 = vector.broadcast %296 : f32 to vector<16x16xf32>
      %298 = arith.mulf %295, %297 : vector<16x16xf32>
      %299 = arith.addf %275, %298 : vector<16x16xf32>
      %c2_265 = arith.constant 2 : index
      %c1_266 = arith.constant 1 : index
      %c0_267 = arith.constant 0 : index
      %300 = vector.load %arg8[%c2_265, %c1_266, %c0_267] : memref<7x22x16xf32, #tpu.memory_space<vmem>>, vector<1x16x16xf32>
      %301 = vector.shape_cast %300 : vector<1x16x16xf32> to vector<16x16xf32>
      %c9_268 = arith.constant 9 : index
      %302 = memref.load %arg3[%c9_268] : memref<98xf32, #tpu.memory_space<smem>>
      %303 = vector.broadcast %302 : f32 to vector<16x16xf32>
      %304 = arith.mulf %301, %303 : vector<16x16xf32>
      %305 = arith.addf %281, %304 : vector<16x16xf32>
      %c3_269 = arith.constant 3 : index
      %c1_270 = arith.constant 1 : index
      %c0_271 = arith.constant 0 : index
      %306 = vector.load %arg8[%c3_269, %c1_270, %c0_271] : memref<7x22x16xf32, #tpu.memory_space<vmem>>, vector<1x16x16xf32>
      %307 = vector.shape_cast %306 : vector<1x16x16xf32> to vector<16x16xf32>
      %c10_272 = arith.constant 10 : index
      %308 = memref.load %arg3[%c10_272] : memref<98xf32, #tpu.memory_space<smem>>
      %309 = vector.broadcast %308 : f32 to vector<16x16xf32>
      %310 = arith.mulf %307, %309 : vector<16x16xf32>
      %311 = arith.addf %287, %310 : vector<16x16xf32>
      %c4_273 = arith.constant 4 : index
      %c1_274 = arith.constant 1 : index
      %c0_275 = arith.constant 0 : index
      %312 = vector.load %arg8[%c4_273, %c1_274, %c0_275] : memref<7x22x16xf32, #tpu.memory_space<vmem>>, vector<1x16x16xf32>
      %313 = vector.shape_cast %312 : vector<1x16x16xf32> to vector<16x16xf32>
      %c11_276 = arith.constant 11 : index
      %314 = memref.load %arg3[%c11_276] : memref<98xf32, #tpu.memory_space<smem>>
      %315 = vector.broadcast %314 : f32 to vector<16x16xf32>
      %316 = arith.mulf %313, %315 : vector<16x16xf32>
      %317 = arith.addf %293, %316 : vector<16x16xf32>
      %c5_277 = arith.constant 5 : index
      %c1_278 = arith.constant 1 : index
      %c0_279 = arith.constant 0 : index
      %318 = vector.load %arg8[%c5_277, %c1_278, %c0_279] : memref<7x22x16xf32, #tpu.memory_space<vmem>>, vector<1x16x16xf32>
      %319 = vector.shape_cast %318 : vector<1x16x16xf32> to vector<16x16xf32>
      %c12_280 = arith.constant 12 : index
      %320 = memref.load %arg3[%c12_280] : memref<98xf32, #tpu.memory_space<smem>>
      %321 = vector.broadcast %320 : f32 to vector<16x16xf32>
      %322 = arith.mulf %319, %321 : vector<16x16xf32>
      %323 = arith.addf %299, %322 : vector<16x16xf32>
      %c6_281 = arith.constant 6 : index
      %c1_282 = arith.constant 1 : index
      %c0_283 = arith.constant 0 : index
      %324 = vector.load %arg8[%c6_281, %c1_282, %c0_283] : memref<7x22x16xf32, #tpu.memory_space<vmem>>, vector<1x16x16xf32>
      %325 = vector.shape_cast %324 : vector<1x16x16xf32> to vector<16x16xf32>
      %c13_284 = arith.constant 13 : index
      %326 = memref.load %arg3[%c13_284] : memref<98xf32, #tpu.memory_space<smem>>
      %327 = vector.broadcast %326 : f32 to vector<16x16xf32>
      %328 = arith.mulf %325, %327 : vector<16x16xf32>
      %329 = arith.addf %305, %328 : vector<16x16xf32>
      %c0_285 = arith.constant 0 : index
      %c2_286 = arith.constant 2 : index
      %c0_287 = arith.constant 0 : index
      %330 = vector.load %arg8[%c0_285, %c2_286, %c0_287] : memref<7x22x16xf32, #tpu.memory_space<vmem>>, vector<1x16x16xf32>
      %331 = vector.shape_cast %330 : vector<1x16x16xf32> to vector<16x16xf32>
      %c14_288 = arith.constant 14 : index
      %332 = memref.load %arg3[%c14_288] : memref<98xf32, #tpu.memory_space<smem>>
      %333 = vector.broadcast %332 : f32 to vector<16x16xf32>
      %334 = arith.mulf %331, %333 : vector<16x16xf32>
      %335 = arith.addf %311, %334 : vector<16x16xf32>
      %c1_289 = arith.constant 1 : index
      %c2_290 = arith.constant 2 : index
      %c0_291 = arith.constant 0 : index
      %336 = vector.load %arg8[%c1_289, %c2_290, %c0_291] : memref<7x22x16xf32, #tpu.memory_space<vmem>>, vector<1x16x16xf32>
      %337 = vector.shape_cast %336 : vector<1x16x16xf32> to vector<16x16xf32>
      %c15_292 = arith.constant 15 : index
      %338 = memref.load %arg3[%c15_292] : memref<98xf32, #tpu.memory_space<smem>>
      %339 = vector.broadcast %338 : f32 to vector<16x16xf32>
      %340 = arith.mulf %337, %339 : vector<16x16xf32>
      %341 = arith.addf %317, %340 : vector<16x16xf32>
      %c2_293 = arith.constant 2 : index
      %c2_294 = arith.constant 2 : index
      %c0_295 = arith.constant 0 : index
      %342 = vector.load %arg8[%c2_293, %c2_294, %c0_295] : memref<7x22x16xf32, #tpu.memory_space<vmem>>, vector<1x16x16xf32>
      %343 = vector.shape_cast %342 : vector<1x16x16xf32> to vector<16x16xf32>
      %c16_296 = arith.constant 16 : index
      %344 = memref.load %arg3[%c16_296] : memref<98xf32, #tpu.memory_space<smem>>
      %345 = vector.broadcast %344 : f32 to vector<16x16xf32>
      %346 = arith.mulf %343, %345 : vector<16x16xf32>
      %347 = arith.addf %323, %346 : vector<16x16xf32>
      %c3_297 = arith.constant 3 : index
      %c2_298 = arith.constant 2 : index
      %c0_299 = arith.constant 0 : index
      %348 = vector.load %arg8[%c3_297, %c2_298, %c0_299] : memref<7x22x16xf32, #tpu.memory_space<vmem>>, vector<1x16x16xf32>
      %349 = vector.shape_cast %348 : vector<1x16x16xf32> to vector<16x16xf32>
      %c17_300 = arith.constant 17 : index
      %350 = memref.load %arg3[%c17_300] : memref<98xf32, #tpu.memory_space<smem>>
      %351 = vector.broadcast %350 : f32 to vector<16x16xf32>
      %352 = arith.mulf %349, %351 : vector<16x16xf32>
      %353 = arith.addf %329, %352 : vector<16x16xf32>
      %c4_301 = arith.constant 4 : index
      %c2_302 = arith.constant 2 : index
      %c0_303 = arith.constant 0 : index
      %354 = vector.load %arg8[%c4_301, %c2_302, %c0_303] : memref<7x22x16xf32, #tpu.memory_space<vmem>>, vector<1x16x16xf32>
      %355 = vector.shape_cast %354 : vector<1x16x16xf32> to vector<16x16xf32>
      %c18_304 = arith.constant 18 : index
      %356 = memref.load %arg3[%c18_304] : memref<98xf32, #tpu.memory_space<smem>>
      %357 = vector.broadcast %356 : f32 to vector<16x16xf32>
      %358 = arith.mulf %355, %357 : vector<16x16xf32>
      %359 = arith.addf %335, %358 : vector<16x16xf32>
      %c5_305 = arith.constant 5 : index
      %c2_306 = arith.constant 2 : index
      %c0_307 = arith.constant 0 : index
      %360 = vector.load %arg8[%c5_305, %c2_306, %c0_307] : memref<7x22x16xf32, #tpu.memory_space<vmem>>, vector<1x16x16xf32>
      %361 = vector.shape_cast %360 : vector<1x16x16xf32> to vector<16x16xf32>
      %c19_308 = arith.constant 19 : index
      %362 = memref.load %arg3[%c19_308] : memref<98xf32, #tpu.memory_space<smem>>
      %363 = vector.broadcast %362 : f32 to vector<16x16xf32>
      %364 = arith.mulf %361, %363 : vector<16x16xf32>
      %365 = arith.addf %341, %364 : vector<16x16xf32>
      %c6_309 = arith.constant 6 : index
      %c2_310 = arith.constant 2 : index
      %c0_311 = arith.constant 0 : index
      %366 = vector.load %arg8[%c6_309, %c2_310, %c0_311] : memref<7x22x16xf32, #tpu.memory_space<vmem>>, vector<1x16x16xf32>
      %367 = vector.shape_cast %366 : vector<1x16x16xf32> to vector<16x16xf32>
      %c20 = arith.constant 20 : index
      %368 = memref.load %arg3[%c20] : memref<98xf32, #tpu.memory_space<smem>>
      %369 = vector.broadcast %368 : f32 to vector<16x16xf32>
      %370 = arith.mulf %367, %369 : vector<16x16xf32>
      %371 = arith.addf %347, %370 : vector<16x16xf32>
      %c0_312 = arith.constant 0 : index
      %c3_313 = arith.constant 3 : index
      %c0_314 = arith.constant 0 : index
      %372 = vector.load %arg8[%c0_312, %c3_313, %c0_314] : memref<7x22x16xf32, #tpu.memory_space<vmem>>, vector<1x16x16xf32>
      %373 = vector.shape_cast %372 : vector<1x16x16xf32> to vector<16x16xf32>
      %c21 = arith.constant 21 : index
      %374 = memref.load %arg3[%c21] : memref<98xf32, #tpu.memory_space<smem>>
      %375 = vector.broadcast %374 : f32 to vector<16x16xf32>
      %376 = arith.mulf %373, %375 : vector<16x16xf32>
      %377 = arith.addf %353, %376 : vector<16x16xf32>
      %c1_315 = arith.constant 1 : index
      %c3_316 = arith.constant 3 : index
      %c0_317 = arith.constant 0 : index
      %378 = vector.load %arg8[%c1_315, %c3_316, %c0_317] : memref<7x22x16xf32, #tpu.memory_space<vmem>>, vector<1x16x16xf32>
      %379 = vector.shape_cast %378 : vector<1x16x16xf32> to vector<16x16xf32>
      %c22 = arith.constant 22 : index
      %380 = memref.load %arg3[%c22] : memref<98xf32, #tpu.memory_space<smem>>
      %381 = vector.broadcast %380 : f32 to vector<16x16xf32>
      %382 = arith.mulf %379, %381 : vector<16x16xf32>
      %383 = arith.addf %359, %382 : vector<16x16xf32>
      %c2_318 = arith.constant 2 : index
      %c3_319 = arith.constant 3 : index
      %c0_320 = arith.constant 0 : index
      %384 = vector.load %arg8[%c2_318, %c3_319, %c0_320] : memref<7x22x16xf32, #tpu.memory_space<vmem>>, vector<1x16x16xf32>
      %385 = vector.shape_cast %384 : vector<1x16x16xf32> to vector<16x16xf32>
      %c23 = arith.constant 23 : index
      %386 = memref.load %arg3[%c23] : memref<98xf32, #tpu.memory_space<smem>>
      %387 = vector.broadcast %386 : f32 to vector<16x16xf32>
      %388 = arith.mulf %385, %387 : vector<16x16xf32>
      %389 = arith.addf %365, %388 : vector<16x16xf32>
      %c3_321 = arith.constant 3 : index
      %c3_322 = arith.constant 3 : index
      %c0_323 = arith.constant 0 : index
      %390 = vector.load %arg8[%c3_321, %c3_322, %c0_323] : memref<7x22x16xf32, #tpu.memory_space<vmem>>, vector<1x16x16xf32>
      %391 = vector.shape_cast %390 : vector<1x16x16xf32> to vector<16x16xf32>
      %c24 = arith.constant 24 : index
      %392 = memref.load %arg3[%c24] : memref<98xf32, #tpu.memory_space<smem>>
      %393 = vector.broadcast %392 : f32 to vector<16x16xf32>
      %394 = arith.mulf %391, %393 : vector<16x16xf32>
      %395 = arith.addf %371, %394 : vector<16x16xf32>
      %c4_324 = arith.constant 4 : index
      %c3_325 = arith.constant 3 : index
      %c0_326 = arith.constant 0 : index
      %396 = vector.load %arg8[%c4_324, %c3_325, %c0_326] : memref<7x22x16xf32, #tpu.memory_space<vmem>>, vector<1x16x16xf32>
      %397 = vector.shape_cast %396 : vector<1x16x16xf32> to vector<16x16xf32>
      %c25 = arith.constant 25 : index
      %398 = memref.load %arg3[%c25] : memref<98xf32, #tpu.memory_space<smem>>
      %399 = vector.broadcast %398 : f32 to vector<16x16xf32>
      %400 = arith.mulf %397, %399 : vector<16x16xf32>
      %401 = arith.addf %377, %400 : vector<16x16xf32>
      %c5_327 = arith.constant 5 : index
      %c3_328 = arith.constant 3 : index
      %c0_329 = arith.constant 0 : index
      %402 = vector.load %arg8[%c5_327, %c3_328, %c0_329] : memref<7x22x16xf32, #tpu.memory_space<vmem>>, vector<1x16x16xf32>
      %403 = vector.shape_cast %402 : vector<1x16x16xf32> to vector<16x16xf32>
      %c26 = arith.constant 26 : index
      %404 = memref.load %arg3[%c26] : memref<98xf32, #tpu.memory_space<smem>>
      %405 = vector.broadcast %404 : f32 to vector<16x16xf32>
      %406 = arith.mulf %403, %405 : vector<16x16xf32>
      %407 = arith.addf %383, %406 : vector<16x16xf32>
      %c6_330 = arith.constant 6 : index
      %c3_331 = arith.constant 3 : index
      %c0_332 = arith.constant 0 : index
      %408 = vector.load %arg8[%c6_330, %c3_331, %c0_332] : memref<7x22x16xf32, #tpu.memory_space<vmem>>, vector<1x16x16xf32>
      %409 = vector.shape_cast %408 : vector<1x16x16xf32> to vector<16x16xf32>
      %c27 = arith.constant 27 : index
      %410 = memref.load %arg3[%c27] : memref<98xf32, #tpu.memory_space<smem>>
      %411 = vector.broadcast %410 : f32 to vector<16x16xf32>
      %412 = arith.mulf %409, %411 : vector<16x16xf32>
      %413 = arith.addf %389, %412 : vector<16x16xf32>
      %c0_333 = arith.constant 0 : index
      %c4_334 = arith.constant 4 : index
      %c0_335 = arith.constant 0 : index
      %414 = vector.load %arg8[%c0_333, %c4_334, %c0_335] : memref<7x22x16xf32, #tpu.memory_space<vmem>>, vector<1x16x16xf32>
      %415 = vector.shape_cast %414 : vector<1x16x16xf32> to vector<16x16xf32>
      %c28 = arith.constant 28 : index
      %416 = memref.load %arg3[%c28] : memref<98xf32, #tpu.memory_space<smem>>
      %417 = vector.broadcast %416 : f32 to vector<16x16xf32>
      %418 = arith.mulf %415, %417 : vector<16x16xf32>
      %419 = arith.addf %395, %418 : vector<16x16xf32>
      %c1_336 = arith.constant 1 : index
      %c4_337 = arith.constant 4 : index
      %c0_338 = arith.constant 0 : index
      %420 = vector.load %arg8[%c1_336, %c4_337, %c0_338] : memref<7x22x16xf32, #tpu.memory_space<vmem>>, vector<1x16x16xf32>
      %421 = vector.shape_cast %420 : vector<1x16x16xf32> to vector<16x16xf32>
      %c29 = arith.constant 29 : index
      %422 = memref.load %arg3[%c29] : memref<98xf32, #tpu.memory_space<smem>>
      %423 = vector.broadcast %422 : f32 to vector<16x16xf32>
      %424 = arith.mulf %421, %423 : vector<16x16xf32>
      %425 = arith.addf %401, %424 : vector<16x16xf32>
      %c2_339 = arith.constant 2 : index
      %c4_340 = arith.constant 4 : index
      %c0_341 = arith.constant 0 : index
      %426 = vector.load %arg8[%c2_339, %c4_340, %c0_341] : memref<7x22x16xf32, #tpu.memory_space<vmem>>, vector<1x16x16xf32>
      %427 = vector.shape_cast %426 : vector<1x16x16xf32> to vector<16x16xf32>
      %c30 = arith.constant 30 : index
      %428 = memref.load %arg3[%c30] : memref<98xf32, #tpu.memory_space<smem>>
      %429 = vector.broadcast %428 : f32 to vector<16x16xf32>
      %430 = arith.mulf %427, %429 : vector<16x16xf32>
      %431 = arith.addf %407, %430 : vector<16x16xf32>
      %c3_342 = arith.constant 3 : index
      %c4_343 = arith.constant 4 : index
      %c0_344 = arith.constant 0 : index
      %432 = vector.load %arg8[%c3_342, %c4_343, %c0_344] : memref<7x22x16xf32, #tpu.memory_space<vmem>>, vector<1x16x16xf32>
      %433 = vector.shape_cast %432 : vector<1x16x16xf32> to vector<16x16xf32>
      %c31 = arith.constant 31 : index
      %434 = memref.load %arg3[%c31] : memref<98xf32, #tpu.memory_space<smem>>
      %435 = vector.broadcast %434 : f32 to vector<16x16xf32>
      %436 = arith.mulf %433, %435 : vector<16x16xf32>
      %437 = arith.addf %413, %436 : vector<16x16xf32>
      %c4_345 = arith.constant 4 : index
      %c4_346 = arith.constant 4 : index
      %c0_347 = arith.constant 0 : index
      %438 = vector.load %arg8[%c4_345, %c4_346, %c0_347] : memref<7x22x16xf32, #tpu.memory_space<vmem>>, vector<1x16x16xf32>
      %439 = vector.shape_cast %438 : vector<1x16x16xf32> to vector<16x16xf32>
      %c32_348 = arith.constant 32 : index
      %440 = memref.load %arg3[%c32_348] : memref<98xf32, #tpu.memory_space<smem>>
      %441 = vector.broadcast %440 : f32 to vector<16x16xf32>
      %442 = arith.mulf %439, %441 : vector<16x16xf32>
      %443 = arith.addf %419, %442 : vector<16x16xf32>
      %c5_349 = arith.constant 5 : index
      %c4_350 = arith.constant 4 : index
      %c0_351 = arith.constant 0 : index
      %444 = vector.load %arg8[%c5_349, %c4_350, %c0_351] : memref<7x22x16xf32, #tpu.memory_space<vmem>>, vector<1x16x16xf32>
      %445 = vector.shape_cast %444 : vector<1x16x16xf32> to vector<16x16xf32>
      %c33 = arith.constant 33 : index
      %446 = memref.load %arg3[%c33] : memref<98xf32, #tpu.memory_space<smem>>
      %447 = vector.broadcast %446 : f32 to vector<16x16xf32>
      %448 = arith.mulf %445, %447 : vector<16x16xf32>
      %449 = arith.addf %425, %448 : vector<16x16xf32>
      %c6_352 = arith.constant 6 : index
      %c4_353 = arith.constant 4 : index
      %c0_354 = arith.constant 0 : index
      %450 = vector.load %arg8[%c6_352, %c4_353, %c0_354] : memref<7x22x16xf32, #tpu.memory_space<vmem>>, vector<1x16x16xf32>
      %451 = vector.shape_cast %450 : vector<1x16x16xf32> to vector<16x16xf32>
      %c34 = arith.constant 34 : index
      %452 = memref.load %arg3[%c34] : memref<98xf32, #tpu.memory_space<smem>>
      %453 = vector.broadcast %452 : f32 to vector<16x16xf32>
      %454 = arith.mulf %451, %453 : vector<16x16xf32>
      %455 = arith.addf %431, %454 : vector<16x16xf32>
      %c0_355 = arith.constant 0 : index
      %c5_356 = arith.constant 5 : index
      %c0_357 = arith.constant 0 : index
      %456 = vector.load %arg8[%c0_355, %c5_356, %c0_357] : memref<7x22x16xf32, #tpu.memory_space<vmem>>, vector<1x16x16xf32>
      %457 = vector.shape_cast %456 : vector<1x16x16xf32> to vector<16x16xf32>
      %c35 = arith.constant 35 : index
      %458 = memref.load %arg3[%c35] : memref<98xf32, #tpu.memory_space<smem>>
      %459 = vector.broadcast %458 : f32 to vector<16x16xf32>
      %460 = arith.mulf %457, %459 : vector<16x16xf32>
      %461 = arith.addf %437, %460 : vector<16x16xf32>
      %c1_358 = arith.constant 1 : index
      %c5_359 = arith.constant 5 : index
      %c0_360 = arith.constant 0 : index
      %462 = vector.load %arg8[%c1_358, %c5_359, %c0_360] : memref<7x22x16xf32, #tpu.memory_space<vmem>>, vector<1x16x16xf32>
      %463 = vector.shape_cast %462 : vector<1x16x16xf32> to vector<16x16xf32>
      %c36 = arith.constant 36 : index
      %464 = memref.load %arg3[%c36] : memref<98xf32, #tpu.memory_space<smem>>
      %465 = vector.broadcast %464 : f32 to vector<16x16xf32>
      %466 = arith.mulf %463, %465 : vector<16x16xf32>
      %467 = arith.addf %443, %466 : vector<16x16xf32>
      %c2_361 = arith.constant 2 : index
      %c5_362 = arith.constant 5 : index
      %c0_363 = arith.constant 0 : index
      %468 = vector.load %arg8[%c2_361, %c5_362, %c0_363] : memref<7x22x16xf32, #tpu.memory_space<vmem>>, vector<1x16x16xf32>
      %469 = vector.shape_cast %468 : vector<1x16x16xf32> to vector<16x16xf32>
      %c37 = arith.constant 37 : index
      %470 = memref.load %arg3[%c37] : memref<98xf32, #tpu.memory_space<smem>>
      %471 = vector.broadcast %470 : f32 to vector<16x16xf32>
      %472 = arith.mulf %469, %471 : vector<16x16xf32>
      %473 = arith.addf %449, %472 : vector<16x16xf32>
      %c3_364 = arith.constant 3 : index
      %c5_365 = arith.constant 5 : index
      %c0_366 = arith.constant 0 : index
      %474 = vector.load %arg8[%c3_364, %c5_365, %c0_366] : memref<7x22x16xf32, #tpu.memory_space<vmem>>, vector<1x16x16xf32>
      %475 = vector.shape_cast %474 : vector<1x16x16xf32> to vector<16x16xf32>
      %c38 = arith.constant 38 : index
      %476 = memref.load %arg3[%c38] : memref<98xf32, #tpu.memory_space<smem>>
      %477 = vector.broadcast %476 : f32 to vector<16x16xf32>
      %478 = arith.mulf %475, %477 : vector<16x16xf32>
      %479 = arith.addf %455, %478 : vector<16x16xf32>
      %c4_367 = arith.constant 4 : index
      %c5_368 = arith.constant 5 : index
      %c0_369 = arith.constant 0 : index
      %480 = vector.load %arg8[%c4_367, %c5_368, %c0_369] : memref<7x22x16xf32, #tpu.memory_space<vmem>>, vector<1x16x16xf32>
      %481 = vector.shape_cast %480 : vector<1x16x16xf32> to vector<16x16xf32>
      %c39 = arith.constant 39 : index
      %482 = memref.load %arg3[%c39] : memref<98xf32, #tpu.memory_space<smem>>
      %483 = vector.broadcast %482 : f32 to vector<16x16xf32>
      %484 = arith.mulf %481, %483 : vector<16x16xf32>
      %485 = arith.addf %461, %484 : vector<16x16xf32>
      %c5_370 = arith.constant 5 : index
      %c5_371 = arith.constant 5 : index
      %c0_372 = arith.constant 0 : index
      %486 = vector.load %arg8[%c5_370, %c5_371, %c0_372] : memref<7x22x16xf32, #tpu.memory_space<vmem>>, vector<1x16x16xf32>
      %487 = vector.shape_cast %486 : vector<1x16x16xf32> to vector<16x16xf32>
      %c40 = arith.constant 40 : index
      %488 = memref.load %arg3[%c40] : memref<98xf32, #tpu.memory_space<smem>>
      %489 = vector.broadcast %488 : f32 to vector<16x16xf32>
      %490 = arith.mulf %487, %489 : vector<16x16xf32>
      %491 = arith.addf %467, %490 : vector<16x16xf32>
      %c6_373 = arith.constant 6 : index
      %c5_374 = arith.constant 5 : index
      %c0_375 = arith.constant 0 : index
      %492 = vector.load %arg8[%c6_373, %c5_374, %c0_375] : memref<7x22x16xf32, #tpu.memory_space<vmem>>, vector<1x16x16xf32>
      %493 = vector.shape_cast %492 : vector<1x16x16xf32> to vector<16x16xf32>
      %c41 = arith.constant 41 : index
      %494 = memref.load %arg3[%c41] : memref<98xf32, #tpu.memory_space<smem>>
      %495 = vector.broadcast %494 : f32 to vector<16x16xf32>
      %496 = arith.mulf %493, %495 : vector<16x16xf32>
      %497 = arith.addf %473, %496 : vector<16x16xf32>
      %c0_376 = arith.constant 0 : index
      %c6_377 = arith.constant 6 : index
      %c0_378 = arith.constant 0 : index
      %498 = vector.load %arg8[%c0_376, %c6_377, %c0_378] : memref<7x22x16xf32, #tpu.memory_space<vmem>>, vector<1x16x16xf32>
      %499 = vector.shape_cast %498 : vector<1x16x16xf32> to vector<16x16xf32>
      %c42 = arith.constant 42 : index
      %500 = memref.load %arg3[%c42] : memref<98xf32, #tpu.memory_space<smem>>
      %501 = vector.broadcast %500 : f32 to vector<16x16xf32>
      %502 = arith.mulf %499, %501 : vector<16x16xf32>
      %503 = arith.addf %479, %502 : vector<16x16xf32>
      %c1_379 = arith.constant 1 : index
      %c6_380 = arith.constant 6 : index
      %c0_381 = arith.constant 0 : index
      %504 = vector.load %arg8[%c1_379, %c6_380, %c0_381] : memref<7x22x16xf32, #tpu.memory_space<vmem>>, vector<1x16x16xf32>
      %505 = vector.shape_cast %504 : vector<1x16x16xf32> to vector<16x16xf32>
      %c43 = arith.constant 43 : index
      %506 = memref.load %arg3[%c43] : memref<98xf32, #tpu.memory_space<smem>>
      %507 = vector.broadcast %506 : f32 to vector<16x16xf32>
      %508 = arith.mulf %505, %507 : vector<16x16xf32>
      %509 = arith.addf %485, %508 : vector<16x16xf32>
      %c2_382 = arith.constant 2 : index
      %c6_383 = arith.constant 6 : index
      %c0_384 = arith.constant 0 : index
      %510 = vector.load %arg8[%c2_382, %c6_383, %c0_384] : memref<7x22x16xf32, #tpu.memory_space<vmem>>, vector<1x16x16xf32>
      %511 = vector.shape_cast %510 : vector<1x16x16xf32> to vector<16x16xf32>
      %c44 = arith.constant 44 : index
      %512 = memref.load %arg3[%c44] : memref<98xf32, #tpu.memory_space<smem>>
      %513 = vector.broadcast %512 : f32 to vector<16x16xf32>
      %514 = arith.mulf %511, %513 : vector<16x16xf32>
      %515 = arith.addf %491, %514 : vector<16x16xf32>
      %c3_385 = arith.constant 3 : index
      %c6_386 = arith.constant 6 : index
      %c0_387 = arith.constant 0 : index
      %516 = vector.load %arg8[%c3_385, %c6_386, %c0_387] : memref<7x22x16xf32, #tpu.memory_space<vmem>>, vector<1x16x16xf32>
      %517 = vector.shape_cast %516 : vector<1x16x16xf32> to vector<16x16xf32>
      %c45 = arith.constant 45 : index
      %518 = memref.load %arg3[%c45] : memref<98xf32, #tpu.memory_space<smem>>
      %519 = vector.broadcast %518 : f32 to vector<16x16xf32>
      %520 = arith.mulf %517, %519 : vector<16x16xf32>
      %521 = arith.addf %497, %520 : vector<16x16xf32>
      %c4_388 = arith.constant 4 : index
      %c6_389 = arith.constant 6 : index
      %c0_390 = arith.constant 0 : index
      %522 = vector.load %arg8[%c4_388, %c6_389, %c0_390] : memref<7x22x16xf32, #tpu.memory_space<vmem>>, vector<1x16x16xf32>
      %523 = vector.shape_cast %522 : vector<1x16x16xf32> to vector<16x16xf32>
      %c46 = arith.constant 46 : index
      %524 = memref.load %arg3[%c46] : memref<98xf32, #tpu.memory_space<smem>>
      %525 = vector.broadcast %524 : f32 to vector<16x16xf32>
      %526 = arith.mulf %523, %525 : vector<16x16xf32>
      %527 = arith.addf %503, %526 : vector<16x16xf32>
      %c5_391 = arith.constant 5 : index
      %c6_392 = arith.constant 6 : index
      %c0_393 = arith.constant 0 : index
      %528 = vector.load %arg8[%c5_391, %c6_392, %c0_393] : memref<7x22x16xf32, #tpu.memory_space<vmem>>, vector<1x16x16xf32>
      %529 = vector.shape_cast %528 : vector<1x16x16xf32> to vector<16x16xf32>
      %c47 = arith.constant 47 : index
      %530 = memref.load %arg3[%c47] : memref<98xf32, #tpu.memory_space<smem>>
      %531 = vector.broadcast %530 : f32 to vector<16x16xf32>
      %532 = arith.mulf %529, %531 : vector<16x16xf32>
      %533 = arith.addf %509, %532 : vector<16x16xf32>
      %c6_394 = arith.constant 6 : index
      %c6_395 = arith.constant 6 : index
      %c0_396 = arith.constant 0 : index
      %534 = vector.load %arg8[%c6_394, %c6_395, %c0_396] : memref<7x22x16xf32, #tpu.memory_space<vmem>>, vector<1x16x16xf32>
      %535 = vector.shape_cast %534 : vector<1x16x16xf32> to vector<16x16xf32>
      %c48_397 = arith.constant 48 : index
      %536 = memref.load %arg3[%c48_397] : memref<98xf32, #tpu.memory_space<smem>>
      %537 = vector.broadcast %536 : f32 to vector<16x16xf32>
      %538 = arith.mulf %535, %537 : vector<16x16xf32>
      %539 = arith.addf %515, %538 : vector<16x16xf32>
      %c1_398 = arith.constant 1 : index
      %c0_399 = arith.constant 0 : index
      %c0_400 = arith.constant 0 : index
      %540 = vector.load %arg7[%c1_398, %c0_399, %c0_400] : memref<2x22x22xf32, #tpu.memory_space<vmem>>, vector<1x22x16xf32>
      %541 = vector.shape_cast %540 : vector<1x22x16xf32> to vector<22x16xf32>
      %c0_401 = arith.constant 0 : index
      %c0_402 = arith.constant 0 : index
      %c0_403 = arith.constant 0 : index
      %542 = vector.load %arg8[%c0_401, %c0_402, %c0_403] : memref<7x22x16xf32, #tpu.memory_space<vmem>>, vector<1x22x16xf32>
      %543 = vector.shape_cast %542 : vector<1x22x16xf32> to vector<22x16xf32>
      %544 = vector.shape_cast %541 : vector<22x16xf32> to vector<1x22x16xf32>
      tpu.vector_store %arg8[%c0_401, %c0_402, %c0_403], %544 {strides = array<i32>} : memref<7x22x16xf32, #tpu.memory_space<vmem>>, vector<1x22x16xf32>,
      %c1_404 = arith.constant 1 : index
      %c0_405 = arith.constant 0 : index
      %c1_406 = arith.constant 1 : index
      %545 = vector.load %arg7[%c1_404, %c0_405, %c1_406] : memref<2x22x22xf32, #tpu.memory_space<vmem>>, vector<1x22x16xf32>
      %546 = vector.shape_cast %545 : vector<1x22x16xf32> to vector<22x16xf32>
      %c1_407 = arith.constant 1 : index
      %c0_408 = arith.constant 0 : index
      %c0_409 = arith.constant 0 : index
      %547 = vector.load %arg8[%c1_407, %c0_408, %c0_409] : memref<7x22x16xf32, #tpu.memory_space<vmem>>, vector<1x22x16xf32>
      %548 = vector.shape_cast %547 : vector<1x22x16xf32> to vector<22x16xf32>
      %549 = vector.shape_cast %546 : vector<22x16xf32> to vector<1x22x16xf32>
      tpu.vector_store %arg8[%c1_407, %c0_408, %c0_409], %549 {strides = array<i32>} : memref<7x22x16xf32, #tpu.memory_space<vmem>>, vector<1x22x16xf32>,
      %c1_410 = arith.constant 1 : index
      %c0_411 = arith.constant 0 : index
      %c2_412 = arith.constant 2 : index
      %550 = vector.load %arg7[%c1_410, %c0_411, %c2_412] : memref<2x22x22xf32, #tpu.memory_space<vmem>>, vector<1x22x16xf32>
      %551 = vector.shape_cast %550 : vector<1x22x16xf32> to vector<22x16xf32>
      %c2_413 = arith.constant 2 : index
      %c0_414 = arith.constant 0 : index
      %c0_415 = arith.constant 0 : index
      %552 = vector.load %arg8[%c2_413, %c0_414, %c0_415] : memref<7x22x16xf32, #tpu.memory_space<vmem>>, vector<1x22x16xf32>
      %553 = vector.shape_cast %552 : vector<1x22x16xf32> to vector<22x16xf32>
      %554 = vector.shape_cast %551 : vector<22x16xf32> to vector<1x22x16xf32>
      tpu.vector_store %arg8[%c2_413, %c0_414, %c0_415], %554 {strides = array<i32>} : memref<7x22x16xf32, #tpu.memory_space<vmem>>, vector<1x22x16xf32>,
      %c1_416 = arith.constant 1 : index
      %c0_417 = arith.constant 0 : index
      %c3_418 = arith.constant 3 : index
      %555 = vector.load %arg7[%c1_416, %c0_417, %c3_418] : memref<2x22x22xf32, #tpu.memory_space<vmem>>, vector<1x22x16xf32>
      %556 = vector.shape_cast %555 : vector<1x22x16xf32> to vector<22x16xf32>
      %c3_419 = arith.constant 3 : index
      %c0_420 = arith.constant 0 : index
      %c0_421 = arith.constant 0 : index
      %557 = vector.load %arg8[%c3_419, %c0_420, %c0_421] : memref<7x22x16xf32, #tpu.memory_space<vmem>>, vector<1x22x16xf32>
      %558 = vector.shape_cast %557 : vector<1x22x16xf32> to vector<22x16xf32>
      %559 = vector.shape_cast %556 : vector<22x16xf32> to vector<1x22x16xf32>
      tpu.vector_store %arg8[%c3_419, %c0_420, %c0_421], %559 {strides = array<i32>} : memref<7x22x16xf32, #tpu.memory_space<vmem>>, vector<1x22x16xf32>,
      %c1_422 = arith.constant 1 : index
      %c0_423 = arith.constant 0 : index
      %c4_424 = arith.constant 4 : index
      %560 = vector.load %arg7[%c1_422, %c0_423, %c4_424] : memref<2x22x22xf32, #tpu.memory_space<vmem>>, vector<1x22x16xf32>
      %561 = vector.shape_cast %560 : vector<1x22x16xf32> to vector<22x16xf32>
      %c4_425 = arith.constant 4 : index
      %c0_426 = arith.constant 0 : index
      %c0_427 = arith.constant 0 : index
      %562 = vector.load %arg8[%c4_425, %c0_426, %c0_427] : memref<7x22x16xf32, #tpu.memory_space<vmem>>, vector<1x22x16xf32>
      %563 = vector.shape_cast %562 : vector<1x22x16xf32> to vector<22x16xf32>
      %564 = vector.shape_cast %561 : vector<22x16xf32> to vector<1x22x16xf32>
      tpu.vector_store %arg8[%c4_425, %c0_426, %c0_427], %564 {strides = array<i32>} : memref<7x22x16xf32, #tpu.memory_space<vmem>>, vector<1x22x16xf32>,
      %c1_428 = arith.constant 1 : index
      %c0_429 = arith.constant 0 : index
      %c5_430 = arith.constant 5 : index
      %565 = vector.load %arg7[%c1_428, %c0_429, %c5_430] : memref<2x22x22xf32, #tpu.memory_space<vmem>>, vector<1x22x16xf32>
      %566 = vector.shape_cast %565 : vector<1x22x16xf32> to vector<22x16xf32>
      %c5_431 = arith.constant 5 : index
      %c0_432 = arith.constant 0 : index
      %c0_433 = arith.constant 0 : index
      %567 = vector.load %arg8[%c5_431, %c0_432, %c0_433] : memref<7x22x16xf32, #tpu.memory_space<vmem>>, vector<1x22x16xf32>
      %568 = vector.shape_cast %567 : vector<1x22x16xf32> to vector<22x16xf32>
      %569 = vector.shape_cast %566 : vector<22x16xf32> to vector<1x22x16xf32>
      tpu.vector_store %arg8[%c5_431, %c0_432, %c0_433], %569 {strides = array<i32>} : memref<7x22x16xf32, #tpu.memory_space<vmem>>, vector<1x22x16xf32>,
      %c1_434 = arith.constant 1 : index
      %c0_435 = arith.constant 0 : index
      %c6_436 = arith.constant 6 : index
      %570 = vector.load %arg7[%c1_434, %c0_435, %c6_436] : memref<2x22x22xf32, #tpu.memory_space<vmem>>, vector<1x22x16xf32>
      %571 = vector.shape_cast %570 : vector<1x22x16xf32> to vector<22x16xf32>
      %c6_437 = arith.constant 6 : index
      %c0_438 = arith.constant 0 : index
      %c0_439 = arith.constant 0 : index
      %572 = vector.load %arg8[%c6_437, %c0_438, %c0_439] : memref<7x22x16xf32, #tpu.memory_space<vmem>>, vector<1x22x16xf32>
      %573 = vector.shape_cast %572 : vector<1x22x16xf32> to vector<22x16xf32>
      %574 = vector.shape_cast %571 : vector<22x16xf32> to vector<1x22x16xf32>
      tpu.vector_store %arg8[%c6_437, %c0_438, %c0_439], %574 {strides = array<i32>} : memref<7x22x16xf32, #tpu.memory_space<vmem>>, vector<1x22x16xf32>,
      %c0_440 = arith.constant 0 : index
      %c0_441 = arith.constant 0 : index
      %c0_442 = arith.constant 0 : index
      %575 = vector.load %arg8[%c0_440, %c0_441, %c0_442] : memref<7x22x16xf32, #tpu.memory_space<vmem>>, vector<1x16x16xf32>
      %576 = vector.shape_cast %575 : vector<1x16x16xf32> to vector<16x16xf32>
      %c49 = arith.constant 49 : index
      %577 = memref.load %arg3[%c49] : memref<98xf32, #tpu.memory_space<smem>>
      %578 = vector.broadcast %577 : f32 to vector<16x16xf32>
      %579 = arith.mulf %576, %578 : vector<16x16xf32>
      %580 = arith.addf %521, %579 : vector<16x16xf32>
      %c1_443 = arith.constant 1 : index
      %c0_444 = arith.constant 0 : index
      %c0_445 = arith.constant 0 : index
      %581 = vector.load %arg8[%c1_443, %c0_444, %c0_445] : memref<7x22x16xf32, #tpu.memory_space<vmem>>, vector<1x16x16xf32>
      %582 = vector.shape_cast %581 : vector<1x16x16xf32> to vector<16x16xf32>
      %c50 = arith.constant 50 : index
      %583 = memref.load %arg3[%c50] : memref<98xf32, #tpu.memory_space<smem>>
      %584 = vector.broadcast %583 : f32 to vector<16x16xf32>
      %585 = arith.mulf %582, %584 : vector<16x16xf32>
      %586 = arith.addf %527, %585 : vector<16x16xf32>
      %c2_446 = arith.constant 2 : index
      %c0_447 = arith.constant 0 : index
      %c0_448 = arith.constant 0 : index
      %587 = vector.load %arg8[%c2_446, %c0_447, %c0_448] : memref<7x22x16xf32, #tpu.memory_space<vmem>>, vector<1x16x16xf32>
      %588 = vector.shape_cast %587 : vector<1x16x16xf32> to vector<16x16xf32>
      %c51 = arith.constant 51 : index
      %589 = memref.load %arg3[%c51] : memref<98xf32, #tpu.memory_space<smem>>
      %590 = vector.broadcast %589 : f32 to vector<16x16xf32>
      %591 = arith.mulf %588, %590 : vector<16x16xf32>
      %592 = arith.addf %533, %591 : vector<16x16xf32>
      %c3_449 = arith.constant 3 : index
      %c0_450 = arith.constant 0 : index
      %c0_451 = arith.constant 0 : index
      %593 = vector.load %arg8[%c3_449, %c0_450, %c0_451] : memref<7x22x16xf32, #tpu.memory_space<vmem>>, vector<1x16x16xf32>
      %594 = vector.shape_cast %593 : vector<1x16x16xf32> to vector<16x16xf32>
      %c52 = arith.constant 52 : index
      %595 = memref.load %arg3[%c52] : memref<98xf32, #tpu.memory_space<smem>>
      %596 = vector.broadcast %595 : f32 to vector<16x16xf32>
      %597 = arith.mulf %594, %596 : vector<16x16xf32>
      %598 = arith.addf %539, %597 : vector<16x16xf32>
      %c4_452 = arith.constant 4 : index
      %c0_453 = arith.constant 0 : index
      %c0_454 = arith.constant 0 : index
      %599 = vector.load %arg8[%c4_452, %c0_453, %c0_454] : memref<7x22x16xf32, #tpu.memory_space<vmem>>, vector<1x16x16xf32>
      %600 = vector.shape_cast %599 : vector<1x16x16xf32> to vector<16x16xf32>
      %c53 = arith.constant 53 : index
      %601 = memref.load %arg3[%c53] : memref<98xf32, #tpu.memory_space<smem>>
      %602 = vector.broadcast %601 : f32 to vector<16x16xf32>
      %603 = arith.mulf %600, %602 : vector<16x16xf32>
      %604 = arith.addf %580, %603 : vector<16x16xf32>
      %c5_455 = arith.constant 5 : index
      %c0_456 = arith.constant 0 : index
      %c0_457 = arith.constant 0 : index
      %605 = vector.load %arg8[%c5_455, %c0_456, %c0_457] : memref<7x22x16xf32, #tpu.memory_space<vmem>>, vector<1x16x16xf32>
      %606 = vector.shape_cast %605 : vector<1x16x16xf32> to vector<16x16xf32>
      %c54 = arith.constant 54 : index
      %607 = memref.load %arg3[%c54] : memref<98xf32, #tpu.memory_space<smem>>
      %608 = vector.broadcast %607 : f32 to vector<16x16xf32>
      %609 = arith.mulf %606, %608 : vector<16x16xf32>
      %610 = arith.addf %586, %609 : vector<16x16xf32>
      %c6_458 = arith.constant 6 : index
      %c0_459 = arith.constant 0 : index
      %c0_460 = arith.constant 0 : index
      %611 = vector.load %arg8[%c6_458, %c0_459, %c0_460] : memref<7x22x16xf32, #tpu.memory_space<vmem>>, vector<1x16x16xf32>
      %612 = vector.shape_cast %611 : vector<1x16x16xf32> to vector<16x16xf32>
      %c55 = arith.constant 55 : index
      %613 = memref.load %arg3[%c55] : memref<98xf32, #tpu.memory_space<smem>>
      %614 = vector.broadcast %613 : f32 to vector<16x16xf32>
      %615 = arith.mulf %612, %614 : vector<16x16xf32>
      %616 = arith.addf %592, %615 : vector<16x16xf32>
      %c0_461 = arith.constant 0 : index
      %c1_462 = arith.constant 1 : index
      %c0_463 = arith.constant 0 : index
      %617 = vector.load %arg8[%c0_461, %c1_462, %c0_463] : memref<7x22x16xf32, #tpu.memory_space<vmem>>, vector<1x16x16xf32>
      %618 = vector.shape_cast %617 : vector<1x16x16xf32> to vector<16x16xf32>
      %c56 = arith.constant 56 : index
      %619 = memref.load %arg3[%c56] : memref<98xf32, #tpu.memory_space<smem>>
      %620 = vector.broadcast %619 : f32 to vector<16x16xf32>
      %621 = arith.mulf %618, %620 : vector<16x16xf32>
      %622 = arith.addf %598, %621 : vector<16x16xf32>
      %c1_464 = arith.constant 1 : index
      %c1_465 = arith.constant 1 : index
      %c0_466 = arith.constant 0 : index
      %623 = vector.load %arg8[%c1_464, %c1_465, %c0_466] : memref<7x22x16xf32, #tpu.memory_space<vmem>>, vector<1x16x16xf32>
      %624 = vector.shape_cast %623 : vector<1x16x16xf32> to vector<16x16xf32>
      %c57 = arith.constant 57 : index
      %625 = memref.load %arg3[%c57] : memref<98xf32, #tpu.memory_space<smem>>
      %626 = vector.broadcast %625 : f32 to vector<16x16xf32>
      %627 = arith.mulf %624, %626 : vector<16x16xf32>
      %628 = arith.addf %604, %627 : vector<16x16xf32>
      %c2_467 = arith.constant 2 : index
      %c1_468 = arith.constant 1 : index
      %c0_469 = arith.constant 0 : index
      %629 = vector.load %arg8[%c2_467, %c1_468, %c0_469] : memref<7x22x16xf32, #tpu.memory_space<vmem>>, vector<1x16x16xf32>
      %630 = vector.shape_cast %629 : vector<1x16x16xf32> to vector<16x16xf32>
      %c58 = arith.constant 58 : index
      %631 = memref.load %arg3[%c58] : memref<98xf32, #tpu.memory_space<smem>>
      %632 = vector.broadcast %631 : f32 to vector<16x16xf32>
      %633 = arith.mulf %630, %632 : vector<16x16xf32>
      %634 = arith.addf %610, %633 : vector<16x16xf32>
      %c3_470 = arith.constant 3 : index
      %c1_471 = arith.constant 1 : index
      %c0_472 = arith.constant 0 : index
      %635 = vector.load %arg8[%c3_470, %c1_471, %c0_472] : memref<7x22x16xf32, #tpu.memory_space<vmem>>, vector<1x16x16xf32>
      %636 = vector.shape_cast %635 : vector<1x16x16xf32> to vector<16x16xf32>
      %c59 = arith.constant 59 : index
      %637 = memref.load %arg3[%c59] : memref<98xf32, #tpu.memory_space<smem>>
      %638 = vector.broadcast %637 : f32 to vector<16x16xf32>
      %639 = arith.mulf %636, %638 : vector<16x16xf32>
      %640 = arith.addf %616, %639 : vector<16x16xf32>
      %c4_473 = arith.constant 4 : index
      %c1_474 = arith.constant 1 : index
      %c0_475 = arith.constant 0 : index
      %641 = vector.load %arg8[%c4_473, %c1_474, %c0_475] : memref<7x22x16xf32, #tpu.memory_space<vmem>>, vector<1x16x16xf32>
      %642 = vector.shape_cast %641 : vector<1x16x16xf32> to vector<16x16xf32>
      %c60 = arith.constant 60 : index
      %643 = memref.load %arg3[%c60] : memref<98xf32, #tpu.memory_space<smem>>
      %644 = vector.broadcast %643 : f32 to vector<16x16xf32>
      %645 = arith.mulf %642, %644 : vector<16x16xf32>
      %646 = arith.addf %622, %645 : vector<16x16xf32>
      %c5_476 = arith.constant 5 : index
      %c1_477 = arith.constant 1 : index
      %c0_478 = arith.constant 0 : index
      %647 = vector.load %arg8[%c5_476, %c1_477, %c0_478] : memref<7x22x16xf32, #tpu.memory_space<vmem>>, vector<1x16x16xf32>
      %648 = vector.shape_cast %647 : vector<1x16x16xf32> to vector<16x16xf32>
      %c61 = arith.constant 61 : index
      %649 = memref.load %arg3[%c61] : memref<98xf32, #tpu.memory_space<smem>>
      %650 = vector.broadcast %649 : f32 to vector<16x16xf32>
      %651 = arith.mulf %648, %650 : vector<16x16xf32>
      %652 = arith.addf %628, %651 : vector<16x16xf32>
      %c6_479 = arith.constant 6 : index
      %c1_480 = arith.constant 1 : index
      %c0_481 = arith.constant 0 : index
      %653 = vector.load %arg8[%c6_479, %c1_480, %c0_481] : memref<7x22x16xf32, #tpu.memory_space<vmem>>, vector<1x16x16xf32>
      %654 = vector.shape_cast %653 : vector<1x16x16xf32> to vector<16x16xf32>
      %c62 = arith.constant 62 : index
      %655 = memref.load %arg3[%c62] : memref<98xf32, #tpu.memory_space<smem>>
      %656 = vector.broadcast %655 : f32 to vector<16x16xf32>
      %657 = arith.mulf %654, %656 : vector<16x16xf32>
      %658 = arith.addf %634, %657 : vector<16x16xf32>
      %c0_482 = arith.constant 0 : index
      %c2_483 = arith.constant 2 : index
      %c0_484 = arith.constant 0 : index
      %659 = vector.load %arg8[%c0_482, %c2_483, %c0_484] : memref<7x22x16xf32, #tpu.memory_space<vmem>>, vector<1x16x16xf32>
      %660 = vector.shape_cast %659 : vector<1x16x16xf32> to vector<16x16xf32>
      %c63 = arith.constant 63 : index
      %661 = memref.load %arg3[%c63] : memref<98xf32, #tpu.memory_space<smem>>
      %662 = vector.broadcast %661 : f32 to vector<16x16xf32>
      %663 = arith.mulf %660, %662 : vector<16x16xf32>
      %664 = arith.addf %640, %663 : vector<16x16xf32>
      %c1_485 = arith.constant 1 : index
      %c2_486 = arith.constant 2 : index
      %c0_487 = arith.constant 0 : index
      %665 = vector.load %arg8[%c1_485, %c2_486, %c0_487] : memref<7x22x16xf32, #tpu.memory_space<vmem>>, vector<1x16x16xf32>
      %666 = vector.shape_cast %665 : vector<1x16x16xf32> to vector<16x16xf32>
      %c64_488 = arith.constant 64 : index
      %667 = memref.load %arg3[%c64_488] : memref<98xf32, #tpu.memory_space<smem>>
      %668 = vector.broadcast %667 : f32 to vector<16x16xf32>
      %669 = arith.mulf %666, %668 : vector<16x16xf32>
      %670 = arith.addf %646, %669 : vector<16x16xf32>
      %c2_489 = arith.constant 2 : index
      %c2_490 = arith.constant 2 : index
      %c0_491 = arith.constant 0 : index
      %671 = vector.load %arg8[%c2_489, %c2_490, %c0_491] : memref<7x22x16xf32, #tpu.memory_space<vmem>>, vector<1x16x16xf32>
      %672 = vector.shape_cast %671 : vector<1x16x16xf32> to vector<16x16xf32>
      %c65 = arith.constant 65 : index
      %673 = memref.load %arg3[%c65] : memref<98xf32, #tpu.memory_space<smem>>
      %674 = vector.broadcast %673 : f32 to vector<16x16xf32>
      %675 = arith.mulf %672, %674 : vector<16x16xf32>
      %676 = arith.addf %652, %675 : vector<16x16xf32>
      %c3_492 = arith.constant 3 : index
      %c2_493 = arith.constant 2 : index
      %c0_494 = arith.constant 0 : index
      %677 = vector.load %arg8[%c3_492, %c2_493, %c0_494] : memref<7x22x16xf32, #tpu.memory_space<vmem>>, vector<1x16x16xf32>
      %678 = vector.shape_cast %677 : vector<1x16x16xf32> to vector<16x16xf32>
      %c66 = arith.constant 66 : index
      %679 = memref.load %arg3[%c66] : memref<98xf32, #tpu.memory_space<smem>>
      %680 = vector.broadcast %679 : f32 to vector<16x16xf32>
      %681 = arith.mulf %678, %680 : vector<16x16xf32>
      %682 = arith.addf %658, %681 : vector<16x16xf32>
      %c4_495 = arith.constant 4 : index
      %c2_496 = arith.constant 2 : index
      %c0_497 = arith.constant 0 : index
      %683 = vector.load %arg8[%c4_495, %c2_496, %c0_497] : memref<7x22x16xf32, #tpu.memory_space<vmem>>, vector<1x16x16xf32>
      %684 = vector.shape_cast %683 : vector<1x16x16xf32> to vector<16x16xf32>
      %c67 = arith.constant 67 : index
      %685 = memref.load %arg3[%c67] : memref<98xf32, #tpu.memory_space<smem>>
      %686 = vector.broadcast %685 : f32 to vector<16x16xf32>
      %687 = arith.mulf %684, %686 : vector<16x16xf32>
      %688 = arith.addf %664, %687 : vector<16x16xf32>
      %c5_498 = arith.constant 5 : index
      %c2_499 = arith.constant 2 : index
      %c0_500 = arith.constant 0 : index
      %689 = vector.load %arg8[%c5_498, %c2_499, %c0_500] : memref<7x22x16xf32, #tpu.memory_space<vmem>>, vector<1x16x16xf32>
      %690 = vector.shape_cast %689 : vector<1x16x16xf32> to vector<16x16xf32>
      %c68 = arith.constant 68 : index
      %691 = memref.load %arg3[%c68] : memref<98xf32, #tpu.memory_space<smem>>
      %692 = vector.broadcast %691 : f32 to vector<16x16xf32>
      %693 = arith.mulf %690, %692 : vector<16x16xf32>
      %694 = arith.addf %670, %693 : vector<16x16xf32>
      %c6_501 = arith.constant 6 : index
      %c2_502 = arith.constant 2 : index
      %c0_503 = arith.constant 0 : index
      %695 = vector.load %arg8[%c6_501, %c2_502, %c0_503] : memref<7x22x16xf32, #tpu.memory_space<vmem>>, vector<1x16x16xf32>
      %696 = vector.shape_cast %695 : vector<1x16x16xf32> to vector<16x16xf32>
      %c69 = arith.constant 69 : index
      %697 = memref.load %arg3[%c69] : memref<98xf32, #tpu.memory_space<smem>>
      %698 = vector.broadcast %697 : f32 to vector<16x16xf32>
      %699 = arith.mulf %696, %698 : vector<16x16xf32>
      %700 = arith.addf %676, %699 : vector<16x16xf32>
      %c0_504 = arith.constant 0 : index
      %c3_505 = arith.constant 3 : index
      %c0_506 = arith.constant 0 : index
      %701 = vector.load %arg8[%c0_504, %c3_505, %c0_506] : memref<7x22x16xf32, #tpu.memory_space<vmem>>, vector<1x16x16xf32>
      %702 = vector.shape_cast %701 : vector<1x16x16xf32> to vector<16x16xf32>
      %c70 = arith.constant 70 : index
      %703 = memref.load %arg3[%c70] : memref<98xf32, #tpu.memory_space<smem>>
      %704 = vector.broadcast %703 : f32 to vector<16x16xf32>
      %705 = arith.mulf %702, %704 : vector<16x16xf32>
      %706 = arith.addf %682, %705 : vector<16x16xf32>
      %c1_507 = arith.constant 1 : index
      %c3_508 = arith.constant 3 : index
      %c0_509 = arith.constant 0 : index
      %707 = vector.load %arg8[%c1_507, %c3_508, %c0_509] : memref<7x22x16xf32, #tpu.memory_space<vmem>>, vector<1x16x16xf32>
      %708 = vector.shape_cast %707 : vector<1x16x16xf32> to vector<16x16xf32>
      %c71 = arith.constant 71 : index
      %709 = memref.load %arg3[%c71] : memref<98xf32, #tpu.memory_space<smem>>
      %710 = vector.broadcast %709 : f32 to vector<16x16xf32>
      %711 = arith.mulf %708, %710 : vector<16x16xf32>
      %712 = arith.addf %688, %711 : vector<16x16xf32>
      %c2_510 = arith.constant 2 : index
      %c3_511 = arith.constant 3 : index
      %c0_512 = arith.constant 0 : index
      %713 = vector.load %arg8[%c2_510, %c3_511, %c0_512] : memref<7x22x16xf32, #tpu.memory_space<vmem>>, vector<1x16x16xf32>
      %714 = vector.shape_cast %713 : vector<1x16x16xf32> to vector<16x16xf32>
      %c72 = arith.constant 72 : index
      %715 = memref.load %arg3[%c72] : memref<98xf32, #tpu.memory_space<smem>>
      %716 = vector.broadcast %715 : f32 to vector<16x16xf32>
      %717 = arith.mulf %714, %716 : vector<16x16xf32>
      %718 = arith.addf %694, %717 : vector<16x16xf32>
      %c3_513 = arith.constant 3 : index
      %c3_514 = arith.constant 3 : index
      %c0_515 = arith.constant 0 : index
      %719 = vector.load %arg8[%c3_513, %c3_514, %c0_515] : memref<7x22x16xf32, #tpu.memory_space<vmem>>, vector<1x16x16xf32>
      %720 = vector.shape_cast %719 : vector<1x16x16xf32> to vector<16x16xf32>
      %c73 = arith.constant 73 : index
      %721 = memref.load %arg3[%c73] : memref<98xf32, #tpu.memory_space<smem>>
      %722 = vector.broadcast %721 : f32 to vector<16x16xf32>
      %723 = arith.mulf %720, %722 : vector<16x16xf32>
      %724 = arith.addf %700, %723 : vector<16x16xf32>
      %c4_516 = arith.constant 4 : index
      %c3_517 = arith.constant 3 : index
      %c0_518 = arith.constant 0 : index
      %725 = vector.load %arg8[%c4_516, %c3_517, %c0_518] : memref<7x22x16xf32, #tpu.memory_space<vmem>>, vector<1x16x16xf32>
      %726 = vector.shape_cast %725 : vector<1x16x16xf32> to vector<16x16xf32>
      %c74 = arith.constant 74 : index
      %727 = memref.load %arg3[%c74] : memref<98xf32, #tpu.memory_space<smem>>
      %728 = vector.broadcast %727 : f32 to vector<16x16xf32>
      %729 = arith.mulf %726, %728 : vector<16x16xf32>
      %730 = arith.addf %706, %729 : vector<16x16xf32>
      %c5_519 = arith.constant 5 : index
      %c3_520 = arith.constant 3 : index
      %c0_521 = arith.constant 0 : index
      %731 = vector.load %arg8[%c5_519, %c3_520, %c0_521] : memref<7x22x16xf32, #tpu.memory_space<vmem>>, vector<1x16x16xf32>
      %732 = vector.shape_cast %731 : vector<1x16x16xf32> to vector<16x16xf32>
      %c75 = arith.constant 75 : index
      %733 = memref.load %arg3[%c75] : memref<98xf32, #tpu.memory_space<smem>>
      %734 = vector.broadcast %733 : f32 to vector<16x16xf32>
      %735 = arith.mulf %732, %734 : vector<16x16xf32>
      %736 = arith.addf %712, %735 : vector<16x16xf32>
      %c6_522 = arith.constant 6 : index
      %c3_523 = arith.constant 3 : index
      %c0_524 = arith.constant 0 : index
      %737 = vector.load %arg8[%c6_522, %c3_523, %c0_524] : memref<7x22x16xf32, #tpu.memory_space<vmem>>, vector<1x16x16xf32>
      %738 = vector.shape_cast %737 : vector<1x16x16xf32> to vector<16x16xf32>
      %c76 = arith.constant 76 : index
      %739 = memref.load %arg3[%c76] : memref<98xf32, #tpu.memory_space<smem>>
      %740 = vector.broadcast %739 : f32 to vector<16x16xf32>
      %741 = arith.mulf %738, %740 : vector<16x16xf32>
      %742 = arith.addf %718, %741 : vector<16x16xf32>
      %c0_525 = arith.constant 0 : index
      %c4_526 = arith.constant 4 : index
      %c0_527 = arith.constant 0 : index
      %743 = vector.load %arg8[%c0_525, %c4_526, %c0_527] : memref<7x22x16xf32, #tpu.memory_space<vmem>>, vector<1x16x16xf32>
      %744 = vector.shape_cast %743 : vector<1x16x16xf32> to vector<16x16xf32>
      %c77 = arith.constant 77 : index
      %745 = memref.load %arg3[%c77] : memref<98xf32, #tpu.memory_space<smem>>
      %746 = vector.broadcast %745 : f32 to vector<16x16xf32>
      %747 = arith.mulf %744, %746 : vector<16x16xf32>
      %748 = arith.addf %724, %747 : vector<16x16xf32>
      %c1_528 = arith.constant 1 : index
      %c4_529 = arith.constant 4 : index
      %c0_530 = arith.constant 0 : index
      %749 = vector.load %arg8[%c1_528, %c4_529, %c0_530] : memref<7x22x16xf32, #tpu.memory_space<vmem>>, vector<1x16x16xf32>
      %750 = vector.shape_cast %749 : vector<1x16x16xf32> to vector<16x16xf32>
      %c78 = arith.constant 78 : index
      %751 = memref.load %arg3[%c78] : memref<98xf32, #tpu.memory_space<smem>>
      %752 = vector.broadcast %751 : f32 to vector<16x16xf32>
      %753 = arith.mulf %750, %752 : vector<16x16xf32>
      %754 = arith.addf %730, %753 : vector<16x16xf32>
      %c2_531 = arith.constant 2 : index
      %c4_532 = arith.constant 4 : index
      %c0_533 = arith.constant 0 : index
      %755 = vector.load %arg8[%c2_531, %c4_532, %c0_533] : memref<7x22x16xf32, #tpu.memory_space<vmem>>, vector<1x16x16xf32>
      %756 = vector.shape_cast %755 : vector<1x16x16xf32> to vector<16x16xf32>
      %c79 = arith.constant 79 : index
      %757 = memref.load %arg3[%c79] : memref<98xf32, #tpu.memory_space<smem>>
      %758 = vector.broadcast %757 : f32 to vector<16x16xf32>
      %759 = arith.mulf %756, %758 : vector<16x16xf32>
      %760 = arith.addf %736, %759 : vector<16x16xf32>
      %c3_534 = arith.constant 3 : index
      %c4_535 = arith.constant 4 : index
      %c0_536 = arith.constant 0 : index
      %761 = vector.load %arg8[%c3_534, %c4_535, %c0_536] : memref<7x22x16xf32, #tpu.memory_space<vmem>>, vector<1x16x16xf32>
      %762 = vector.shape_cast %761 : vector<1x16x16xf32> to vector<16x16xf32>
      %c80_537 = arith.constant 80 : index
      %763 = memref.load %arg3[%c80_537] : memref<98xf32, #tpu.memory_space<smem>>
      %764 = vector.broadcast %763 : f32 to vector<16x16xf32>
      %765 = arith.mulf %762, %764 : vector<16x16xf32>
      %766 = arith.addf %742, %765 : vector<16x16xf32>
      %c4_538 = arith.constant 4 : index
      %c4_539 = arith.constant 4 : index
      %c0_540 = arith.constant 0 : index
      %767 = vector.load %arg8[%c4_538, %c4_539, %c0_540] : memref<7x22x16xf32, #tpu.memory_space<vmem>>, vector<1x16x16xf32>
      %768 = vector.shape_cast %767 : vector<1x16x16xf32> to vector<16x16xf32>
      %c81 = arith.constant 81 : index
      %769 = memref.load %arg3[%c81] : memref<98xf32, #tpu.memory_space<smem>>
      %770 = vector.broadcast %769 : f32 to vector<16x16xf32>
      %771 = arith.mulf %768, %770 : vector<16x16xf32>
      %772 = arith.addf %748, %771 : vector<16x16xf32>
      %c5_541 = arith.constant 5 : index
      %c4_542 = arith.constant 4 : index
      %c0_543 = arith.constant 0 : index
      %773 = vector.load %arg8[%c5_541, %c4_542, %c0_543] : memref<7x22x16xf32, #tpu.memory_space<vmem>>, vector<1x16x16xf32>
      %774 = vector.shape_cast %773 : vector<1x16x16xf32> to vector<16x16xf32>
      %c82 = arith.constant 82 : index
      %775 = memref.load %arg3[%c82] : memref<98xf32, #tpu.memory_space<smem>>
      %776 = vector.broadcast %775 : f32 to vector<16x16xf32>
      %777 = arith.mulf %774, %776 : vector<16x16xf32>
      %778 = arith.addf %754, %777 : vector<16x16xf32>
      %c6_544 = arith.constant 6 : index
      %c4_545 = arith.constant 4 : index
      %c0_546 = arith.constant 0 : index
      %779 = vector.load %arg8[%c6_544, %c4_545, %c0_546] : memref<7x22x16xf32, #tpu.memory_space<vmem>>, vector<1x16x16xf32>
      %780 = vector.shape_cast %779 : vector<1x16x16xf32> to vector<16x16xf32>
      %c83 = arith.constant 83 : index
      %781 = memref.load %arg3[%c83] : memref<98xf32, #tpu.memory_space<smem>>
      %782 = vector.broadcast %781 : f32 to vector<16x16xf32>
      %783 = arith.mulf %780, %782 : vector<16x16xf32>
      %784 = arith.addf %760, %783 : vector<16x16xf32>
      %c0_547 = arith.constant 0 : index
      %c5_548 = arith.constant 5 : index
      %c0_549 = arith.constant 0 : index
      %785 = vector.load %arg8[%c0_547, %c5_548, %c0_549] : memref<7x22x16xf32, #tpu.memory_space<vmem>>, vector<1x16x16xf32>
      %786 = vector.shape_cast %785 : vector<1x16x16xf32> to vector<16x16xf32>
      %c84 = arith.constant 84 : index
      %787 = memref.load %arg3[%c84] : memref<98xf32, #tpu.memory_space<smem>>
      %788 = vector.broadcast %787 : f32 to vector<16x16xf32>
      %789 = arith.mulf %786, %788 : vector<16x16xf32>
      %790 = arith.addf %766, %789 : vector<16x16xf32>
      %c1_550 = arith.constant 1 : index
      %c5_551 = arith.constant 5 : index
      %c0_552 = arith.constant 0 : index
      %791 = vector.load %arg8[%c1_550, %c5_551, %c0_552] : memref<7x22x16xf32, #tpu.memory_space<vmem>>, vector<1x16x16xf32>
      %792 = vector.shape_cast %791 : vector<1x16x16xf32> to vector<16x16xf32>
      %c85 = arith.constant 85 : index
      %793 = memref.load %arg3[%c85] : memref<98xf32, #tpu.memory_space<smem>>
      %794 = vector.broadcast %793 : f32 to vector<16x16xf32>
      %795 = arith.mulf %792, %794 : vector<16x16xf32>
      %796 = arith.addf %772, %795 : vector<16x16xf32>
      %c2_553 = arith.constant 2 : index
      %c5_554 = arith.constant 5 : index
      %c0_555 = arith.constant 0 : index
      %797 = vector.load %arg8[%c2_553, %c5_554, %c0_555] : memref<7x22x16xf32, #tpu.memory_space<vmem>>, vector<1x16x16xf32>
      %798 = vector.shape_cast %797 : vector<1x16x16xf32> to vector<16x16xf32>
      %c86 = arith.constant 86 : index
      %799 = memref.load %arg3[%c86] : memref<98xf32, #tpu.memory_space<smem>>
      %800 = vector.broadcast %799 : f32 to vector<16x16xf32>
      %801 = arith.mulf %798, %800 : vector<16x16xf32>
      %802 = arith.addf %778, %801 : vector<16x16xf32>
      %c3_556 = arith.constant 3 : index
      %c5_557 = arith.constant 5 : index
      %c0_558 = arith.constant 0 : index
      %803 = vector.load %arg8[%c3_556, %c5_557, %c0_558] : memref<7x22x16xf32, #tpu.memory_space<vmem>>, vector<1x16x16xf32>
      %804 = vector.shape_cast %803 : vector<1x16x16xf32> to vector<16x16xf32>
      %c87 = arith.constant 87 : index
      %805 = memref.load %arg3[%c87] : memref<98xf32, #tpu.memory_space<smem>>
      %806 = vector.broadcast %805 : f32 to vector<16x16xf32>
      %807 = arith.mulf %804, %806 : vector<16x16xf32>
      %808 = arith.addf %784, %807 : vector<16x16xf32>
      %c4_559 = arith.constant 4 : index
      %c5_560 = arith.constant 5 : index
      %c0_561 = arith.constant 0 : index
      %809 = vector.load %arg8[%c4_559, %c5_560, %c0_561] : memref<7x22x16xf32, #tpu.memory_space<vmem>>, vector<1x16x16xf32>
      %810 = vector.shape_cast %809 : vector<1x16x16xf32> to vector<16x16xf32>
      %c88 = arith.constant 88 : index
      %811 = memref.load %arg3[%c88] : memref<98xf32, #tpu.memory_space<smem>>
      %812 = vector.broadcast %811 : f32 to vector<16x16xf32>
      %813 = arith.mulf %810, %812 : vector<16x16xf32>
      %814 = arith.addf %790, %813 : vector<16x16xf32>
      %c5_562 = arith.constant 5 : index
      %c5_563 = arith.constant 5 : index
      %c0_564 = arith.constant 0 : index
      %815 = vector.load %arg8[%c5_562, %c5_563, %c0_564] : memref<7x22x16xf32, #tpu.memory_space<vmem>>, vector<1x16x16xf32>
      %816 = vector.shape_cast %815 : vector<1x16x16xf32> to vector<16x16xf32>
      %c89 = arith.constant 89 : index
      %817 = memref.load %arg3[%c89] : memref<98xf32, #tpu.memory_space<smem>>
      %818 = vector.broadcast %817 : f32 to vector<16x16xf32>
      %819 = arith.mulf %816, %818 : vector<16x16xf32>
      %820 = arith.addf %796, %819 : vector<16x16xf32>
      %c6_565 = arith.constant 6 : index
      %c5_566 = arith.constant 5 : index
      %c0_567 = arith.constant 0 : index
      %821 = vector.load %arg8[%c6_565, %c5_566, %c0_567] : memref<7x22x16xf32, #tpu.memory_space<vmem>>, vector<1x16x16xf32>
      %822 = vector.shape_cast %821 : vector<1x16x16xf32> to vector<16x16xf32>
      %c90 = arith.constant 90 : index
      %823 = memref.load %arg3[%c90] : memref<98xf32, #tpu.memory_space<smem>>
      %824 = vector.broadcast %823 : f32 to vector<16x16xf32>
      %825 = arith.mulf %822, %824 : vector<16x16xf32>
      %826 = arith.addf %802, %825 : vector<16x16xf32>
      %c0_568 = arith.constant 0 : index
      %c6_569 = arith.constant 6 : index
      %c0_570 = arith.constant 0 : index
      %827 = vector.load %arg8[%c0_568, %c6_569, %c0_570] : memref<7x22x16xf32, #tpu.memory_space<vmem>>, vector<1x16x16xf32>
      %828 = vector.shape_cast %827 : vector<1x16x16xf32> to vector<16x16xf32>
      %c91 = arith.constant 91 : index
      %829 = memref.load %arg3[%c91] : memref<98xf32, #tpu.memory_space<smem>>
      %830 = vector.broadcast %829 : f32 to vector<16x16xf32>
      %831 = arith.mulf %828, %830 : vector<16x16xf32>
      %832 = arith.addf %808, %831 : vector<16x16xf32>
      %c1_571 = arith.constant 1 : index
      %c6_572 = arith.constant 6 : index
      %c0_573 = arith.constant 0 : index
      %833 = vector.load %arg8[%c1_571, %c6_572, %c0_573] : memref<7x22x16xf32, #tpu.memory_space<vmem>>, vector<1x16x16xf32>
      %834 = vector.shape_cast %833 : vector<1x16x16xf32> to vector<16x16xf32>
      %c92 = arith.constant 92 : index
      %835 = memref.load %arg3[%c92] : memref<98xf32, #tpu.memory_space<smem>>
      %836 = vector.broadcast %835 : f32 to vector<16x16xf32>
      %837 = arith.mulf %834, %836 : vector<16x16xf32>
      %838 = arith.addf %814, %837 : vector<16x16xf32>
      %c2_574 = arith.constant 2 : index
      %c6_575 = arith.constant 6 : index
      %c0_576 = arith.constant 0 : index
      %839 = vector.load %arg8[%c2_574, %c6_575, %c0_576] : memref<7x22x16xf32, #tpu.memory_space<vmem>>, vector<1x16x16xf32>
      %840 = vector.shape_cast %839 : vector<1x16x16xf32> to vector<16x16xf32>
      %c93 = arith.constant 93 : index
      %841 = memref.load %arg3[%c93] : memref<98xf32, #tpu.memory_space<smem>>
      %842 = vector.broadcast %841 : f32 to vector<16x16xf32>
      %843 = arith.mulf %840, %842 : vector<16x16xf32>
      %844 = arith.addf %820, %843 : vector<16x16xf32>
      %c3_577 = arith.constant 3 : index
      %c6_578 = arith.constant 6 : index
      %c0_579 = arith.constant 0 : index
      %845 = vector.load %arg8[%c3_577, %c6_578, %c0_579] : memref<7x22x16xf32, #tpu.memory_space<vmem>>, vector<1x16x16xf32>
      %846 = vector.shape_cast %845 : vector<1x16x16xf32> to vector<16x16xf32>
      %c94 = arith.constant 94 : index
      %847 = memref.load %arg3[%c94] : memref<98xf32, #tpu.memory_space<smem>>
      %848 = vector.broadcast %847 : f32 to vector<16x16xf32>
      %849 = arith.mulf %846, %848 : vector<16x16xf32>
      %850 = arith.addf %826, %849 : vector<16x16xf32>
      %c4_580 = arith.constant 4 : index
      %c6_581 = arith.constant 6 : index
      %c0_582 = arith.constant 0 : index
      %851 = vector.load %arg8[%c4_580, %c6_581, %c0_582] : memref<7x22x16xf32, #tpu.memory_space<vmem>>, vector<1x16x16xf32>
      %852 = vector.shape_cast %851 : vector<1x16x16xf32> to vector<16x16xf32>
      %c95 = arith.constant 95 : index
      %853 = memref.load %arg3[%c95] : memref<98xf32, #tpu.memory_space<smem>>
      %854 = vector.broadcast %853 : f32 to vector<16x16xf32>
      %855 = arith.mulf %852, %854 : vector<16x16xf32>
      %856 = arith.addf %832, %855 : vector<16x16xf32>
      %c5_583 = arith.constant 5 : index
      %c6_584 = arith.constant 6 : index
      %c0_585 = arith.constant 0 : index
      %857 = vector.load %arg8[%c5_583, %c6_584, %c0_585] : memref<7x22x16xf32, #tpu.memory_space<vmem>>, vector<1x16x16xf32>
      %858 = vector.shape_cast %857 : vector<1x16x16xf32> to vector<16x16xf32>
      %c96_586 = arith.constant 96 : index
      %859 = memref.load %arg3[%c96_586] : memref<98xf32, #tpu.memory_space<smem>>
      %860 = vector.broadcast %859 : f32 to vector<16x16xf32>
      %861 = arith.mulf %858, %860 : vector<16x16xf32>
      %862 = arith.addf %838, %861 : vector<16x16xf32>
      %c6_587 = arith.constant 6 : index
      %c6_588 = arith.constant 6 : index
      %c0_589 = arith.constant 0 : index
      %863 = vector.load %arg8[%c6_587, %c6_588, %c0_589] : memref<7x22x16xf32, #tpu.memory_space<vmem>>, vector<1x16x16xf32>
      %864 = vector.shape_cast %863 : vector<1x16x16xf32> to vector<16x16xf32>
      %c97 = arith.constant 97 : index
      %865 = memref.load %arg3[%c97] : memref<98xf32, #tpu.memory_space<smem>>
      %866 = vector.broadcast %865 : f32 to vector<16x16xf32>
      %867 = arith.mulf %864, %866 : vector<16x16xf32>
      %868 = arith.addf %844, %867 : vector<16x16xf32>
      %869 = arith.addf %862, %868 : vector<16x16xf32>
      %870 = arith.addf %850, %856 : vector<16x16xf32>
      %871 = arith.addf %869, %870 : vector<16x16xf32>
      %872 = arith.negf %871 : vector<16x16xf32>
      %873 = math.exp %872 : vector<16x16xf32>
      %cst_590 = arith.constant 1.000000e+00 : f32
      %874 = vector.broadcast %cst_590 : f32 to vector<16x16xf32>
      %875 = arith.addf %874, %873 : vector<16x16xf32>
      %876 = arith.divf %874, %875 : vector<16x16xf32>
      %c0_591 = arith.constant 0 : index
      %c0_592 = arith.constant 0 : index
      %c0_593 = arith.constant 0 : index
      %877 = vector.load %arg4[%c0_591, %c0_592, %c0_593] : memref<1x16x16xf32, #tpu.memory_space<vmem>>, vector<1x16x16xf32>
      %878 = vector.shape_cast %877 : vector<1x16x16xf32> to vector<16x16xf32>
      %879 = vector.shape_cast %876 : vector<16x16xf32> to vector<1x16x16xf32>
      tpu.vector_store %arg4[%c0_591, %c0_592, %c0_593], %879 {strides = array<i32>} : memref<1x16x16xf32, #tpu.memory_space<vmem>>, vector<1x16x16xf32>,
    } else {
    }
    return
  }
  func.func @transform_0(%arg0: i32, %arg1: i32) -> (i32, i32, i32) {
    %c0_i32 = arith.constant 0 : i32
    %c0_i32_0 = arith.constant 0 : i32
    return %arg0, %arg1, %c0_i32 : i32, i32, i32
  }
  func.func @transform_1(%arg0: i32, %arg1: i32) -> i32 {
    %c0_i32 = arith.constant 0 : i32
    %c0_i32_0 = arith.constant 0 : i32
    return %c0_i32 : i32
  }
  func.func @transform_2(%arg0: i32, %arg1: i32) -> (i32, i32, i32) {
    %c0_i32 = arith.constant 0 : i32
    %c0_i32_0 = arith.constant 0 : i32
    %c0_i32_1 = arith.constant 0 : i32
    return %arg0, %c0_i32, %c0_i32_0 : i32, i32, i32
  }
}

</mosaic_0001>

<llo_original>
// kernel: tpu_custom_call.1
$region0: #{tpu_custom_call.1}
  #allocation0 [shape = 'u32[]', space=smem, size = 0x4, offset = 0x4, fixed_abs, tag = 'smem constant byte address 0x4 - core index']
  #allocation1 [shape = 'u32[144,128]{1,0:T(1,128)}', space=vmem, size = 0x12000, scoped, tag = 'internal scratch']
  #allocation2 [shape = 'f32[1,256]{1,0:T(1,128)}', space=vmem, size = 0x400, scoped, tag = 'scratch operand']
  #allocation3 [shape = 'f32[1,256]{1,0:T(1,128)}', space=vmem, size = 0x400, scoped, tag = 'scratch operand']
  #allocation4 [shape = 'f32[2,22,22]{2,1,0:T(8,128)}', space=vmem, size = 0x6000, scoped, tag = 'scratch operand']
  #allocation5 [shape = 'f32[7,22,16]{2,1,0:T(8,128)}', space=vmem, size = 0x15000, scoped, tag = 'scratch operand']
  %s0 = inlined_call_operand.hbm [shape: f32[2,4,256], index: 0, kind: input, shape index: {}]
  %s1 = inlined_call_operand.vmem [shape: f32[98], index: 1, kind: input, shape index: {}]
  %s2 = inlined_call_operand.hbm [shape: f32[2,16,16], index: 2, kind: output, shape index: {}]
  %s3 = sld [smem:[#allocation0]]
  $region61: #{tpu_custom_call.1} parent=0
    _
  %s5 = ssub.s32 1, %s3
  %s6 = scalar_select 0, %s5, %s3
  $region1: #{tpu_custom_call.1} parent=0
    #allocation6 [shape = 'u8[8192]{0}', space=vmem, size = 0x2000, scoped, tag = 'input window, operand 0']
    #allocation7 [shape = 's32[2]{0}', space=sflag, size = 0x8, scoped, tag = 'scoped memory for tpu_custom_call.1']
    #allocation8 [shape = 's32[2]{0}', space=sflag, size = 0x8, scoped, tag = 'scoped memory for tpu_custom_call.1']
    #allocation9 [shape = 's32[2]{0}', space=sflag, size = 0x8, scoped, tag = 'scoped memory for tpu_custom_call.1']
    #allocation10 [shape = 'u8[512]{0}', space=smem, size = 0x200, scoped, tag = 'input window, operand 1, single buffered']
    #allocation11 [shape = 'u8[16384]{0}', space=vmem, size = 0x4000, scoped, tag = 'output window, operand 0']
    %7 = vsyncpa [#allocation7], 0
    %s8 = scalar_lea.sflag [#allocation7], 1
    %9 = vsyncpa %s8, 0
    %10 = vsyncpa [#allocation9], 0
    %11 = vsyncpa [#allocation8], 0
    %s12 = scalar_lea.sflag [#allocation8], 1
    %13 = vsyncpa %s12, 0
    loop: start=0, step=1, limit=4
    $region2: #{tpu_custom_call.1} parent=1 // loop_pre_header
      _
    $region3: #{tpu_custom_call.1} parent=1 // loop_header
      %s15 = sphi 0, %s19
      %p16 = scmp.ge.s32.totalorder %s15, 4
      %s22 = sphi 0, %s34
      %s23 = sphi 0, %s30
      %s24 = sphi 0, %s22
      %s25 = sphi 0, %s23
      %s26 = sphi 0, %s24
      %s27 = sphi 0, %s25
      %s39 = sphi 0, %s41
      %s42 = sphi 0, %s39
      %s43 = sphi 0, %s42
      %s59 = sphi 0, %s43
      %s63 = sphi 0, %s63
      %s65 = sphi 0, %s63
      %s66 = sphi 0, %s65
      %s80 = sphi 0, %s66
      %s86 = sphi 0, %s88
      %s89 = sphi 0, %s86
      %s90 = sphi 0, %s89
      %s106 = sphi 0, %s90
    $region4: #{tpu_custom_call.1} parent=1 // loop_header_branch
      %18 = sbr.rel (%p16) target = $region8
    $region5: #{tpu_custom_call.1} parent=1 // loop_body
      %s20 = ssub.s32 %s15, 1
      %s21 = ssub.s32 %s15, 2
      %s28 = sadd.s32 1, %s23
      %p29 = scmp.ge.s32.totalorder %s28, 1
      %s30 = scalar_select %p29, 0, %s28
      %s31 = sadd.s32 1, %s22
      %s32 = scalar_select %p29, %s31, %s22
      %p33 = scmp.ge.s32.totalorder %s32, 2
      %s34 = scalar_select %p33, 0, %s32
      %s35 = ssub.s32 %s22, %s34
      %s36 = ssub.s32 %s23, %s30
      %s37 = sor.u32 %s35, %s36
      %p38 = scmp.eq.s32.totalorder %s37, 0
      %s40 = sadd.s32 %s39, 1
      %s41 = scalar_select %p38, %s39, %s40
      %p44 = pneg %p38
      %p45 = scmp.eq.s32.totalorder %s15, 1
      %p46 = por %p44, %p45
      %p47 = scmp.ne.s32.totalorder %s39, %s42
      %p48 = scmp.eq.s32.totalorder %s15, 0
      %p49 = por %p47, %p48
      %p50 = scmp.ne.s32.totalorder %s39, %s42
      %p51 = scmp.eq.s32.totalorder %s20, 1
      %p52 = por %p50, %p51
      %p53 = scmp.ne.s32.totalorder %s42, %s43
      %p54 = scmp.eq.s32.totalorder %s20, 0
      %p55 = por %p53, %p54
      %p56 = scmp.ne.s32.totalorder %s42, %s43
      %p57 = scmp.eq.s32.totalorder %s21, 1
      %p58 = por %p56, %p57
      %p60 = scmp.ne.s32.totalorder %s43, %s59
      %p61 = scmp.eq.s32.totalorder %s21, 0
      %p62 = por %p60, %p61
      %s64 = sadd.s32 %s63, 1
      %p67 = scmp.eq.s32.totalorder %s15, 1
      %p68 = scmp.ne.s32.totalorder %s63, %s65
      %p69 = scmp.eq.s32.totalorder %s15, 0
      %p70 = por %p68, %p69
      %p71 = scmp.ne.s32.totalorder %s63, %s65
      %p72 = scmp.eq.s32.totalorder %s20, 1
      %p73 = por %p71, %p72
      %p74 = scmp.ne.s32.totalorder %s65, %s66
      %p75 = scmp.eq.s32.totalorder %s20, 0
      %p76 = por %p74, %p75
      %p77 = scmp.ne.s32.totalorder %s65, %s66
      %p78 = scmp.eq.s32.totalorder %s21, 1
      %p79 = por %p77, %p78
      %p81 = scmp.ne.s32.totalorder %s66, %s80
      %p82 = scmp.eq.s32.totalorder %s21, 0
      %p83 = por %p81, %p82
      %s84 = ssub.s32 %s22, %s34
      %p85 = scmp.eq.s32.totalorder %s84, 0
      %s87 = sadd.s32 %s86, 1
      %s88 = scalar_select %p85, %s86, %s87
      %p91 = pneg %p85
      %p92 = scmp.eq.s32.totalorder %s15, 1
      %p93 = por %p91, %p92
      %p94 = scmp.ne.s32.totalorder %s86, %s89
      %p95 = scmp.eq.s32.totalorder %s15, 0
      %p96 = por %p94, %p95
      %p97 = scmp.ne.s32.totalorder %s86, %s89
      %p98 = scmp.eq.s32.totalorder %s20, 1
      %p99 = por %p97, %p98
      %p100 = scmp.ne.s32.totalorder %s89, %s90
      %p101 = scmp.eq.s32.totalorder %s20, 0
      %p102 = por %p100, %p101
      %p103 = scmp.ne.s32.totalorder %s89, %s90
      %p104 = scmp.eq.s32.totalorder %s21, 1
      %p105 = por %p103, %p104
      %p107 = scmp.ne.s32.totalorder %s90, %s106
      %p108 = scmp.eq.s32.totalorder %s21, 0
      %p109 = por %p107, %p108
      %p110 = scmp.le.s32.totalorder 1, %s15
      %p111 = scmp.lt.s32.totalorder %s15, 3
      %p112 = pnand %p110, %p111
      %p113 = pneg %p112
      // Predicated region
      $region9: #{tpu_custom_call.1} parent=5 // pred_check
        _
      $region10: #{tpu_custom_call.1} parent=5 // pred_check_branch
        %115 = sbr.rel (%p112) target = $region12
      $region11: #{tpu_custom_call.1} parent=5 // pred_region
        %s116 = ssub.s32 %s15, 1
        // Predicated region
        $region13: #{tpu_custom_call.1} parent=11 // pred_check
          %p117 = pneg %p76
        $region14: #{tpu_custom_call.1} parent=11 // pred_check_branch
          %119 = sbr.rel (%p117) target = $region16
        $region15: #{tpu_custom_call.1} parent=11 // pred_region
          %s121 = ssub.s32 16, 16
          %122 = vsyncadd [#allocation9], %s121
          %s124 = sshll.u32 %s1, 4
          %s125 = int_to_ptr.vmem [resolvable:$true] %s124
          %127 = dma.vmem_to_smem %s125, 16, [#allocation10], [#allocation9]
        $region16: #{tpu_custom_call.1} parent=11 // pred_fallthru
          _
      $region12: #{tpu_custom_call.1} parent=5 // pred_fallthru
        _
      %p128 = scmp.lt.s32.totalorder %s15, 2
      // Predicated region
      $region17: #{tpu_custom_call.1} parent=5 // pred_check
        %p129 = pneg %p128
      $region18: #{tpu_custom_call.1} parent=5 // pred_check_branch
        %131 = sbr.rel (%p129) target = $region20
      $region19: #{tpu_custom_call.1} parent=5 // pred_region
        // Predicated region
        $region21: #{tpu_custom_call.1} parent=19 // pred_check
          %p132 = pneg %p49
        $region22: #{tpu_custom_call.1} parent=19 // pred_check_branch
          %134 = sbr.rel (%p132) target = $region24
        $region23: #{tpu_custom_call.1} parent=19 // pred_region
          %s135 = sand.u32 %s39, 1
          %s136 = scalar_lea.sflag [#allocation7], %s135
          %s137 = sand.u32 %s39, 1
          %s138 = smul.addr %s137, 8
          %s139 = scalar_lea.vmem [#allocation6], %s138
          %s141 = ssub.s32 128, 128
          %142 = vsyncadd %s136, %s141
          %s143 = smul.addr %s23, 2
          %s144 = smul.addr %s22, 2
          %s145 = sadd.s32 %s143, %s144
          %s146 = smul.addr %s145, 64
          %s147 = scalar_lea.hbm %s0, %s146
          %s149 = sshll.u32 %s139, 4
          %s150 = int_to_ptr.vmem [resolvable:$true] %s149
          %152 = dma.hbm_to_vmem [thread:$0]  %s147, 128, %s150, %s136
        $region24: #{tpu_custom_call.1} parent=19 // pred_fallthru
          _
      $region20: #{tpu_custom_call.1} parent=5 // pred_fallthru
        _
      %p153 = scmp.le.s32.totalorder 1, %s15
      %p154 = scmp.lt.s32.totalorder %s15, 3
      %p155 = pnand %p153, %p154
      %p156 = pneg %p155
      // Predicated region
      $region25: #{tpu_custom_call.1} parent=5 // pred_check
        _
      $region26: #{tpu_custom_call.1} parent=5 // pred_check_branch
        %158 = sbr.rel (%p155) target = $region28
      $region27: #{tpu_custom_call.1} parent=5 // pred_region
        %s159 = ssub.s32 %s15, 1
        %s160 = sand.u32 %s42, 1
        %s161 = scalar_lea.sflag [#allocation7], %s160
        %s162 = sand.u32 %s42, 1
        %s163 = smul.addr %s162, 8
        %s164 = scalar_lea.vmem [#allocation6], %s163
        // Predicated region
        $region29: #{tpu_custom_call.1} parent=27 // pred_check
          %p165 = pneg %p55
        $region30: #{tpu_custom_call.1} parent=27 // pred_check_branch
          %167 = sbr.rel (%p165) target = $region32
        $region31: #{tpu_custom_call.1} parent=27 // pred_region
          %168 = dma.done %s161, 128
        $region32: #{tpu_custom_call.1} parent=27 // pred_fallthru
          _
        // Predicated region
        $region33: #{tpu_custom_call.1} parent=27 // pred_check
          %p169 = pneg %p76
        $region34: #{tpu_custom_call.1} parent=27 // pred_check_branch
          %171 = sbr.rel (%p169) target = $region36
        $region35: #{tpu_custom_call.1} parent=27 // pred_region
          %172 = dma.done [#allocation9], 16
        $region36: #{tpu_custom_call.1} parent=27 // pred_fallthru
          _
        %173 = sfence
        %s174 = sand.u32 %s42, 1
        %s175 = scalar_lea.sflag [#allocation7], %s174
        %s176 = sand.u32 %s42, 1
        %s177 = smul.addr %s176, 8
        %s178 = scalar_lea.vmem [#allocation6], %s177
        %p179 = pneg %p55
        %p180 = pneg %p52
        %p181 = pneg %p76
        %p182 = pneg %p73
        %p183 = pneg %p102
        %p184 = pneg %p99
        %s185 = sand.u32 %s89, 1
        %s186 = scalar_lea.sflag [#allocation8], %s185
        %s187 = sand.u32 %s89, 1
        %s188 = smul.addr %s187, 16
        %s189 = scalar_lea.vmem [#allocation11], %s188
        %v190 = vld [vmem:[%s164] sm:$0xff]
        %v192 = vcombine.high %v190, %v190
        %vm194 = vcmask 1043456
        %v195 = vsel %vm194, %v190, 0.0
        %v196 = vrot.slane %v195, 4
        %v197 = vadd.f32 %v195, %v196
        %v198 = vrot.slane %v197, 2
        %v199 = vadd.f32 %v197, %v198
        %v200 = vrot.slane %v199, 1
        %v201 = vadd.f32 %v199, %v200
        %v202 = vsel %vm194, %v192, 0.0
        %v203 = vrot.slane %v202, 4
        %v204 = vadd.f32 %v202, %v203
        %v205 = vrot.slane %v204, 2
        %v206 = vadd.f32 %v204, %v205
        %v207 = vrot.slane %v206, 1
        %v208 = vadd.f32 %v206, %v207
        %v209 = vsel %vm194, %v190, -inf
        %v210 = vrot.slane %v209, 4
        %v211 = vmax.f32 %v209, %v210
        %v212 = vrot.slane %v211, 2
        %v213 = vmax.f32 %v211, %v212
        %v214 = vrot.slane %v213, 1
        %v215 = vmax.f32 %v213, %v214
        %v216 = vsel %vm194, %v192, -inf
        %v217 = vrot.slane %v216, 4
        %v218 = vmax.f32 %v216, %v217
        %v219 = vrot.slane %v218, 2
        %v220 = vmax.f32 %v218, %v219
        %v221 = vrot.slane %v220, 1
        %v222 = vmax.f32 %v220, %v221
        %p223 = scmp.eq.s32.totalorder %s25, 0
        // Predicated region
        $region37: #{tpu_custom_call.1} parent=27 // pred_check
          %p224 = pneg %p223
        $region38: #{tpu_custom_call.1} parent=27 // pred_check_branch
          %226 = sbr.rel (%p224) target = $region40
        $region39: #{tpu_custom_call.1} parent=27 // pred_region
          %v229 = vcombine.low %v201, %v208
          %v231 = vunpack.c.l.s4 1966171168
          %v232 = vunpack.c.0.s8 %v231
          %v233 = vlaneseq
          %v234 = vshrl.u32 %v233, 7
          %v235 = vsub.s32 %v232, %v234
          %v236 = vrot.slane %v229, %v235
          %v238 = vunpack.c.l.s4 1966171168
          %v239 = vunpack.c.0.s8 %v238
          %v240 = vlaneseq
          %v241 = vshrl.u32 %v240, 7
          %v242 = vsub.s32 %v239, %v241
          %v243 = vrot.slane %v236, %v242
          %v245 = vlaneseq
          %vm246 = vcmp.ge.s32.totalorder %v245, 0
          %vm247 = vcmp.lt.s32.totalorder %v245, 256
          %vm248 = vmand %vm246, %vm247
          %249 = vst.msk [vmem:[#allocation2] sm:$0x3] %vm248, %v243
          %v252 = vcombine.low %v215, %v222
          %v254 = vunpack.c.l.s4 1966171168
          %v255 = vunpack.c.0.s8 %v254
          %v256 = vlaneseq
          %v257 = vshrl.u32 %v256, 7
          %v258 = vsub.s32 %v255, %v257
          %v259 = vrot.slane %v252, %v258
          %v261 = vunpack.c.l.s4 1966171168
          %v262 = vunpack.c.0.s8 %v261
          %v263 = vlaneseq
          %v264 = vshrl.u32 %v263, 7
          %v265 = vsub.s32 %v262, %v264
          %v266 = vrot.slane %v259, %v265
          %268 = vst.msk [vmem:[#allocation3] sm:$0x3] %vm248, %v266
        $region40: #{tpu_custom_call.1} parent=27 // pred_fallthru
          _
        %p269 = scmp.gt.s32.totalorder %s25, 0
        // Predicated region
        $region41: #{tpu_custom_call.1} parent=27 // pred_check
          %p270 = pneg %p269
        $region42: #{tpu_custom_call.1} parent=27 // pred_check_branch
          %272 = sbr.rel (%p270) target = $region44
        $region43: #{tpu_custom_call.1} parent=27 // pred_region
          %v273 = vld [vmem:[#allocation2] sm:$0x3]
          %v276 = vcombine.low %v201, %v208
          %v278 = vunpack.c.l.s4 1966171168
          %v279 = vunpack.c.0.s8 %v278
          %v280 = vlaneseq
          %v281 = vshrl.u32 %v280, 7
          %v282 = vsub.s32 %v279, %v281
          %v283 = vrot.slane %v276, %v282
          %v285 = vunpack.c.l.s4 1966171168
          %v286 = vunpack.c.0.s8 %v285
          %v287 = vlaneseq
          %v288 = vshrl.u32 %v287, 7
          %v289 = vsub.s32 %v286, %v288
          %v290 = vrot.slane %v283, %v289
          %v292 = vadd.f32 %v273, %v290
          %v293 = vlaneseq
          %vm294 = vcmp.ge.s32.totalorder %v293, 0
          %vm295 = vcmp.lt.s32.totalorder %v293, 256
          %vm296 = vmand %vm294, %vm295
          %297 = vst.msk [vmem:[#allocation2] sm:$0x3] %vm296, %v292
          %v298 = vld [vmem:[#allocation3] sm:$0x3]
          %v301 = vcombine.low %v215, %v222
          %v303 = vunpack.c.l.s4 1966171168
          %v304 = vunpack.c.0.s8 %v303
          %v305 = vlaneseq
          %v306 = vshrl.u32 %v305, 7
          %v307 = vsub.s32 %v304, %v306
          %v308 = vrot.slane %v301, %v307
          %v310 = vunpack.c.l.s4 1966171168
          %v311 = vunpack.c.0.s8 %v310
          %v312 = vlaneseq
          %v313 = vshrl.u32 %v312, 7
          %v314 = vsub.s32 %v311, %v313
          %v315 = vrot.slane %v308, %v314
          %v317 = vmax.f32 %v298, %v315
          %318 = vst.msk [vmem:[#allocation3] sm:$0x3] %vm296, %v317
        $region44: #{tpu_custom_call.1} parent=27 // pred_fallthru
          _
        // Predicated region
        $region45: #{tpu_custom_call.1} parent=27 // pred_check
          %p319 = pneg %p223
        $region46: #{tpu_custom_call.1} parent=27 // pred_check_branch
          %321 = sbr.rel (%p319) target = $region48
        $region47: #{tpu_custom_call.1} parent=27 // pred_region
          %vm322 = vcmask 174080
          %323 = vst.msk [vmem:[#allocation4] sm:$0x7] %vm322, 0.0
          %324 = vst.msk [vmem:[#allocation4 + $0x13] sm:$0x7] %vm322, 0.0
          %vm325 = vcmask 23552
          %326 = vst.msk [vmem:[#allocation4] sm:$0xff] %vm325, 0.0
          %327 = vst.msk [vmem:[#allocation4 + $0x8] sm:$0xff] %vm325, 0.0
          %vm328 = vcmask 21504
          %329 = vst.msk [vmem:[#allocation4 + $0x10] sm:$0x3f] %vm328, 0.0
          %vm330 = vcmask 179352
          %331 = vst.msk [vmem:[#allocation4] sm:$0xff] %vm330, 0.0
          %332 = vst.msk [vmem:[#allocation4 + $0x8] sm:$0xff] %vm330, 0.0
          %vm333 = vcmask 177304
          %334 = vst.msk [vmem:[#allocation4 + $0x10] sm:$0x3f] %vm333, 0.0
          %s335 = scalar_lea.vmem [#allocation4], 24
          %336 = vst.msk [vmem:[%s335] sm:$0x7] %vm322, 0.0
          %337 = vst.msk [vmem:[%s335 + $0x13] sm:$0x7] %vm322, 0.0
          %338 = vst.msk [vmem:[%s335] sm:$0xff] %vm325, 0.0
          %339 = vst.msk [vmem:[%s335 + $0x8] sm:$0xff] %vm325, 0.0
          %340 = vst.msk [vmem:[%s335 + $0x10] sm:$0x3f] %vm328, 0.0
          %341 = vst.msk [vmem:[%s335] sm:$0xff] %vm330, 0.0
          %342 = vst.msk [vmem:[%s335 + $0x8] sm:$0xff] %vm330, 0.0
          %343 = vst.msk [vmem:[%s335 + $0x10] sm:$0x3f] %vm333, 0.0
          %v344 = vld [vmem:[#allocation2] sm:$0x1]
          %v345 = vmul.f32 %v344, 0.25
          %v346 = vld [vmem:[#allocation3] sm:$0x1]
          %v348 = vlaneseq
          %v349 = vshrl.u32 %v348, 7
          %v350 = vsub.s32 0, %v349
          %v351 = vrot.slane %v345, %v350
          %352 = vrot.lane.b32.xlu0 %v351, 3
          %v353 = vpop.permute.xlu0 %352
          %vm355 = vcmask 147480
          %356 = vst.msk [vmem:[#allocation4 + $0x3] sm:$0x1] %vm355, %v353
          %v358 = vlaneseq
          %v359 = vshrl.u32 %v358, 7
          %v360 = vsub.s32 0, %v359
          %v361 = vrot.slane %v346, %v360
          %362 = vrot.lane.b32.xlu0 %v361, 3
          %v363 = vpop.permute.xlu0 %362
          %365 = vst.msk [vmem:[%s335 + $0x3] sm:$0x1] %vm355, %v363
          %v366 = vld [vmem:[#allocation2] sm:$0x1]
          %v367 = vmul.f32 %v366, 0.25
          %v368 = vld [vmem:[#allocation3] sm:$0x1]
          %v370 = vlaneseq
          %v371 = vshrl.u32 %v370, 7
          %v372 = vsub.s32 0, %v371
          %v373 = vrot.slane %v367, %v372
          %374 = vrot.lane.b32.xlu0 %v373, 115
          %v375 = vpop.permute.xlu0 %374
          %377 = vst.msk [vmem:[#allocation4 + $0x4] sm:$0x1] %vm355, %v375
          %v379 = vlaneseq
          %v380 = vshrl.u32 %v379, 7
          %v381 = vsub.s32 0, %v380
          %v382 = vrot.slane %v368, %v381
          %383 = vrot.lane.b32.xlu0 %v382, 115
          %v384 = vpop.permute.xlu0 %383
          %386 = vst.msk [vmem:[%s335 + $0x4] sm:$0x1] %vm355, %v384
          %v387 = vld [vmem:[#allocation2] sm:$0x1]
          %v388 = vmul.f32 %v387, 0.25
          %v389 = vld [vmem:[#allocation3] sm:$0x1]
          %v391 = vlaneseq
          %v392 = vshrl.u32 %v391, 7
          %v393 = vsub.s32 0, %v392
          %v394 = vrot.slane %v388, %v393
          %395 = vrot.lane.b32.xlu0 %v394, 99
          %v396 = vpop.permute.xlu0 %395
          %398 = vst.msk [vmem:[#allocation4 + $0x5] sm:$0x1] %vm355, %v396
          %v400 = vlaneseq
          %v401 = vshrl.u32 %v400, 7
          %v402 = vsub.s32 0, %v401
          %v403 = vrot.slane %v389, %v402
          %404 = vrot.lane.b32.xlu0 %v403, 99
          %v405 = vpop.permute.xlu0 %404
          %407 = vst.msk [vmem:[%s335 + $0x5] sm:$0x1] %vm355, %v405
          %v408 = vld [vmem:[#allocation2] sm:$0x1]
          %v409 = vmul.f32 %v408, 0.25
          %v410 = vld [vmem:[#allocation3] sm:$0x1]
          %v412 = vlaneseq
          %v413 = vshrl.u32 %v412, 7
          %v414 = vsub.s32 0, %v413
          %v415 = vrot.slane %v409, %v414
          %416 = vrot.lane.b32.xlu0 %v415, 83
          %v417 = vpop.permute.xlu0 %416
          %419 = vst.msk [vmem:[#allocation4 + $0x6] sm:$0x1] %vm355, %v417
          %v421 = vlaneseq
          %v422 = vshrl.u32 %v421, 7
          %v423 = vsub.s32 0, %v422
          %v424 = vrot.slane %v410, %v423
          %425 = vrot.lane.b32.xlu0 %v424, 83
          %v426 = vpop.permute.xlu0 %425
          %428 = vst.msk [vmem:[%s335 + $0x6] sm:$0x1] %vm355, %v426
          %v429 = vld [vmem:[#allocation2] sm:$0x1]
          %v430 = vmul.f32 %v429, 0.25
          %v431 = vld [vmem:[#allocation3] sm:$0x1]
          %v433 = vlaneseq
          %v434 = vshrl.u32 %v433, 7
          %v435 = vsub.s32 0, %v434
          %v436 = vrot.slane %v430, %v435
          %437 = vrot.lane.b32.xlu0 %v436, 67
          %v438 = vpop.permute.xlu0 %437
          %440 = vst.msk [vmem:[#allocation4 + $0x7] sm:$0x1] %vm355, %v438
          %v442 = vlaneseq
          %v443 = vshrl.u32 %v442, 7
          %v444 = vsub.s32 0, %v443
          %v445 = vrot.slane %v431, %v444
          %446 = vrot.lane.b32.xlu0 %v445, 67
          %v447 = vpop.permute.xlu0 %446
          %449 = vst.msk [vmem:[%s335 + $0x7] sm:$0x1] %vm355, %v447
          %v450 = vld [vmem:[#allocation2] sm:$0x1]
          %v451 = vmul.f32 %v450, 0.25
          %v452 = vld [vmem:[#allocation3] sm:$0x1]
          %v454 = vlaneseq
          %v455 = vshrl.u32 %v454, 7
          %v456 = vsub.s32 0, %v455
          %v457 = vrot.slane %v451, %v456
          %458 = vrot.lane.b32.xlu0 %v457, 51
          %v459 = vpop.permute.xlu0 %458
          %461 = vst.msk [vmem:[#allocation4 + $0x8] sm:$0x1] %vm355, %v459
          %v463 = vlaneseq
          %v464 = vshrl.u32 %v463, 7
          %v465 = vsub.s32 0, %v464
          %v466 = vrot.slane %v452, %v465
          %467 = vrot.lane.b32.xlu0 %v466, 51
          %v468 = vpop.permute.xlu0 %467
          %470 = vst.msk [vmem:[%s335 + $0x8] sm:$0x1] %vm355, %v468
          %v471 = vld [vmem:[#allocation2] sm:$0x1]
          %v472 = vmul.f32 %v471, 0.25
          %v473 = vld [vmem:[#allocation3] sm:$0x1]
          %v475 = vlaneseq
          %v476 = vshrl.u32 %v475, 7
          %v477 = vsub.s32 0, %v476
          %v478 = vrot.slane %v472, %v477
          %479 = vrot.lane.b32.xlu0 %v478, 35
          %v480 = vpop.permute.xlu0 %479
          %482 = vst.msk [vmem:[#allocation4 + $0x9] sm:$0x1] %vm355, %v480
          %v484 = vlaneseq
          %v485 = vshrl.u32 %v484, 7
          %v486 = vsub.s32 0, %v485
          %v487 = vrot.slane %v473, %v486
          %488 = vrot.lane.b32.xlu0 %v487, 35
          %v489 = vpop.permute.xlu0 %488
          %491 = vst.msk [vmem:[%s335 + $0x9] sm:$0x1] %vm355, %v489
          %v492 = vld [vmem:[#allocation2] sm:$0x1]
          %v493 = vmul.f32 %v492, 0.25
          %v494 = vld [vmem:[#allocation3] sm:$0x1]
          %v496 = vlaneseq
          %v497 = vshrl.u32 %v496, 7
          %v498 = vsub.s32 0, %v497
          %v499 = vrot.slane %v493, %v498
          %500 = vrot.lane.b32.xlu0 %v499, 19
          %v501 = vpop.permute.xlu0 %500
          %503 = vst.msk [vmem:[#allocation4 + $0xa] sm:$0x1] %vm355, %v501
          %v505 = vlaneseq
          %v506 = vshrl.u32 %v505, 7
          %v507 = vsub.s32 0, %v506
          %v508 = vrot.slane %v494, %v507
          %509 = vrot.lane.b32.xlu0 %v508, 19
          %v510 = vpop.permute.xlu0 %509
          %512 = vst.msk [vmem:[%s335 + $0xa] sm:$0x1] %vm355, %v510
          %v513 = vld [vmem:[#allocation2 + $0x1] sm:$0x1]
          %v514 = vmul.f32 %v513, 0.25
          %v515 = vld [vmem:[#allocation3 + $0x1] sm:$0x1]
          %v517 = vlaneseq
          %v518 = vshrl.u32 %v517, 7
          %v519 = vsub.s32 0, %v518
          %v520 = vrot.slane %v514, %v519
          %521 = vrot.lane.b32.xlu0 %v520, 3
          %v522 = vpop.permute.xlu0 %521
          %524 = vst.msk [vmem:[#allocation4 + $0xb] sm:$0x1] %vm355, %v522
          %v526 = vlaneseq
          %v527 = vshrl.u32 %v526, 7
          %v528 = vsub.s32 0, %v527
          %v529 = vrot.slane %v515, %v528
          %530 = vrot.lane.b32.xlu0 %v529, 3
          %v531 = vpop.permute.xlu0 %530
          %533 = vst.msk [vmem:[%s335 + $0xb] sm:$0x1] %vm355, %v531
          %v534 = vld [vmem:[#allocation2 + $0x1] sm:$0x1]
          %v535 = vmul.f32 %v534, 0.25
          %v536 = vld [vmem:[#allocation3 + $0x1] sm:$0x1]
          %v538 = vlaneseq
          %v539 = vshrl.u32 %v538, 7
          %v540 = vsub.s32 0, %v539
          %v541 = vrot.slane %v535, %v540
          %542 = vrot.lane.b32.xlu0 %v541, 115
          %v543 = vpop.permute.xlu0 %542
          %545 = vst.msk [vmem:[#allocation4 + $0xc] sm:$0x1] %vm355, %v543
          %v547 = vlaneseq
          %v548 = vshrl.u32 %v547, 7
          %v549 = vsub.s32 0, %v548
          %v550 = vrot.slane %v536, %v549
          %551 = vrot.lane.b32.xlu0 %v550, 115
          %v552 = vpop.permute.xlu0 %551
          %554 = vst.msk [vmem:[%s335 + $0xc] sm:$0x1] %vm355, %v552
          %v555 = vld [vmem:[#allocation2 + $0x1] sm:$0x1]
          %v556 = vmul.f32 %v555, 0.25
          %v557 = vld [vmem:[#allocation3 + $0x1] sm:$0x1]
          %v559 = vlaneseq
          %v560 = vshrl.u32 %v559, 7
          %v561 = vsub.s32 0, %v560
          %v562 = vrot.slane %v556, %v561
          %563 = vrot.lane.b32.xlu0 %v562, 99
          %v564 = vpop.permute.xlu0 %563
          %566 = vst.msk [vmem:[#allocation4 + $0xd] sm:$0x1] %vm355, %v564
          %v568 = vlaneseq
          %v569 = vshrl.u32 %v568, 7
          %v570 = vsub.s32 0, %v569
          %v571 = vrot.slane %v557, %v570
          %572 = vrot.lane.b32.xlu0 %v571, 99
          %v573 = vpop.permute.xlu0 %572
          %575 = vst.msk [vmem:[%s335 + $0xd] sm:$0x1] %vm355, %v573
          %v576 = vld [vmem:[#allocation2 + $0x1] sm:$0x1]
          %v577 = vmul.f32 %v576, 0.25
          %v578 = vld [vmem:[#allocation3 + $0x1] sm:$0x1]
          %v580 = vlaneseq
          %v581 = vshrl.u32 %v580, 7
          %v582 = vsub.s32 0, %v581
          %v583 = vrot.slane %v577, %v582
          %584 = vrot.lane.b32.xlu0 %v583, 83
          %v585 = vpop.permute.xlu0 %584
          %587 = vst.msk [vmem:[#allocation4 + $0xe] sm:$0x1] %vm355, %v585
          %v589 = vlaneseq
          %v590 = vshrl.u32 %v589, 7
          %v591 = vsub.s32 0, %v590
          %v592 = vrot.slane %v578, %v591
          %593 = vrot.lane.b32.xlu0 %v592, 83
          %v594 = vpop.permute.xlu0 %593
          %596 = vst.msk [vmem:[%s335 + $0xe] sm:$0x1] %vm355, %v594
          %v597 = vld [vmem:[#allocation2 + $0x1] sm:$0x1]
          %v598 = vmul.f32 %v597, 0.25
          %v599 = vld [vmem:[#allocation3 + $0x1] sm:$0x1]
          %v601 = vlaneseq
          %v602 = vshrl.u32 %v601, 7
          %v603 = vsub.s32 0, %v602
          %v604 = vrot.slane %v598, %v603
          %605 = vrot.lane.b32.xlu0 %v604, 67
          %v606 = vpop.permute.xlu0 %605
          %608 = vst.msk [vmem:[#allocation4 + $0xf] sm:$0x1] %vm355, %v606
          %v610 = vlaneseq
          %v611 = vshrl.u32 %v610, 7
          %v612 = vsub.s32 0, %v611
          %v613 = vrot.slane %v599, %v612
          %614 = vrot.lane.b32.xlu0 %v613, 67
          %v615 = vpop.permute.xlu0 %614
          %617 = vst.msk [vmem:[%s335 + $0xf] sm:$0x1] %vm355, %v615
          %v618 = vld [vmem:[#allocation2 + $0x1] sm:$0x1]
          %v619 = vmul.f32 %v618, 0.25
          %v620 = vld [vmem:[#allocation3 + $0x1] sm:$0x1]
          %v622 = vlaneseq
          %v623 = vshrl.u32 %v622, 7
          %v624 = vsub.s32 0, %v623
          %v625 = vrot.slane %v619, %v624
          %626 = vrot.lane.b32.xlu0 %v625, 51
          %v627 = vpop.permute.xlu0 %626
          %629 = vst.msk [vmem:[#allocation4 + $0x10] sm:$0x1] %vm355, %v627
          %v631 = vlaneseq
          %v632 = vshrl.u32 %v631, 7
          %v633 = vsub.s32 0, %v632
          %v634 = vrot.slane %v620, %v633
          %635 = vrot.lane.b32.xlu0 %v634, 51
          %v636 = vpop.permute.xlu0 %635
          %638 = vst.msk [vmem:[%s335 + $0x10] sm:$0x1] %vm355, %v636
          %v639 = vld [vmem:[#allocation2 + $0x1] sm:$0x1]
          %v640 = vmul.f32 %v639, 0.25
          %v641 = vld [vmem:[#allocation3 + $0x1] sm:$0x1]
          %v643 = vlaneseq
          %v644 = vshrl.u32 %v643, 7
          %v645 = vsub.s32 0, %v644
          %v646 = vrot.slane %v640, %v645
          %647 = vrot.lane.b32.xlu0 %v646, 35
          %v648 = vpop.permute.xlu0 %647
          %650 = vst.msk [vmem:[#allocation4 + $0x11] sm:$0x1] %vm355, %v648
          %v652 = vlaneseq
          %v653 = vshrl.u32 %v652, 7
          %v654 = vsub.s32 0, %v653
          %v655 = vrot.slane %v641, %v654
          %656 = vrot.lane.b32.xlu0 %v655, 35
          %v657 = vpop.permute.xlu0 %656
          %659 = vst.msk [vmem:[%s335 + $0x11] sm:$0x1] %vm355, %v657
          %v660 = vld [vmem:[#allocation2 + $0x1] sm:$0x1]
          %v661 = vmul.f32 %v660, 0.25
          %v662 = vld [vmem:[#allocation3 + $0x1] sm:$0x1]
          %v664 = vlaneseq
          %v665 = vshrl.u32 %v664, 7
          %v666 = vsub.s32 0, %v665
          %v667 = vrot.slane %v661, %v666
          %668 = vrot.lane.b32.xlu0 %v667, 19
          %v669 = vpop.permute.xlu0 %668
          %671 = vst.msk [vmem:[#allocation4 + $0x12] sm:$0x1] %vm355, %v669
          %v673 = vlaneseq
          %v674 = vshrl.u32 %v673, 7
          %v675 = vsub.s32 0, %v674
          %v676 = vrot.slane %v662, %v675
          %677 = vrot.lane.b32.xlu0 %v676, 19
          %v678 = vpop.permute.xlu0 %677
          %680 = vst.msk [vmem:[%s335 + $0x12] sm:$0x1] %vm355, %v678
          %v681 = vld [vmem:[#allocation4] sm:$0xff]
          %v682 = vld [vmem:[#allocation4 + $0x8] sm:$0xff]
          %v683 = vld [vmem:[#allocation4 + $0x10] sm:$0x3f]
          %vm684 = vcmask 130048
          %685 = vst.msk [vmem:[#allocation5] sm:$0xff] %vm684, %v681
          %686 = vst.msk [vmem:[#allocation5 + $0x8] sm:$0xff] %vm684, %v682
          %vm687 = vcmask 128000
          %688 = vst.msk [vmem:[#allocation5 + $0x10] sm:$0x3f] %vm687, %v683
          %v689 = vld [vmem:[#allocation4] sm:$0xff]
          %v690 = vld [vmem:[#allocation4 + $0x8] sm:$0xff]
          %v691 = vld [vmem:[#allocation4 + $0x10] sm:$0x3f]
          %695 = vrot.lane.b32.xlu0 %v689, 127
          %v696 = vpop.permute.xlu0 %695
          %697 = vrot.lane.b32.xlu0 %v690, 127
          %v698 = vpop.permute.xlu0 %697
          %699 = vrot.lane.b32.xlu0 %v691, 127
          %v700 = vpop.permute.xlu0 %699
          %s704 = scalar_lea.vmem [#allocation5], 24
          %705 = vst.msk [vmem:[%s704] sm:$0xff] %vm684, %v696
          %706 = vst.msk [vmem:[%s704 + $0x8] sm:$0xff] %vm684, %v698
          %707 = vst.msk [vmem:[%s704 + $0x10] sm:$0x3f] %vm687, %v700
          %v708 = vld [vmem:[#allocation4] sm:$0xff]
          %v709 = vld [vmem:[#allocation4 + $0x8] sm:$0xff]
          %v710 = vld [vmem:[#allocation4 + $0x10] sm:$0x3f]
          %714 = vrot.lane.b32.xlu0 %v708, 126
          %v715 = vpop.permute.xlu0 %714
          %716 = vrot.lane.b32.xlu0 %v709, 126
          %v717 = vpop.permute.xlu0 %716
          %718 = vrot.lane.b32.xlu0 %v710, 126
          %v719 = vpop.permute.xlu0 %718
          %s723 = scalar_lea.vmem [#allocation5], 48
          %724 = vst.msk [vmem:[%s723] sm:$0xff] %vm684, %v715
          %725 = vst.msk [vmem:[%s723 + $0x8] sm:$0xff] %vm684, %v717
          %726 = vst.msk [vmem:[%s723 + $0x10] sm:$0x3f] %vm687, %v719
          %v727 = vld [vmem:[#allocation4] sm:$0xff]
          %v728 = vld [vmem:[#allocation4 + $0x8] sm:$0xff]
          %v729 = vld [vmem:[#allocation4 + $0x10] sm:$0x3f]
          %733 = vrot.lane.b32.xlu0 %v727, 125
          %v734 = vpop.permute.xlu0 %733
          %735 = vrot.lane.b32.xlu0 %v728, 125
          %v736 = vpop.permute.xlu0 %735
          %737 = vrot.lane.b32.xlu0 %v729, 125
          %v738 = vpop.permute.xlu0 %737
          %s742 = scalar_lea.vmem [#allocation5], 72
          %743 = vst.msk [vmem:[%s742] sm:$0xff] %vm684, %v734
          %744 = vst.msk [vmem:[%s742 + $0x8] sm:$0xff] %vm684, %v736
          %745 = vst.msk [vmem:[%s742 + $0x10] sm:$0x3f] %vm687, %v738
          %v746 = vld [vmem:[#allocation4] sm:$0xff]
          %v747 = vld [vmem:[#allocation4 + $0x8] sm:$0xff]
          %v748 = vld [vmem:[#allocation4 + $0x10] sm:$0x3f]
          %752 = vrot.lane.b32.xlu0 %v746, 124
          %v753 = vpop.permute.xlu0 %752
          %754 = vrot.lane.b32.xlu0 %v747, 124
          %v755 = vpop.permute.xlu0 %754
          %756 = vrot.lane.b32.xlu0 %v748, 124
          %v757 = vpop.permute.xlu0 %756
          %s761 = scalar_lea.vmem [#allocation5], 96
          %762 = vst.msk [vmem:[%s761] sm:$0xff] %vm684, %v753
          %763 = vst.msk [vmem:[%s761 + $0x8] sm:$0xff] %vm684, %v755
          %764 = vst.msk [vmem:[%s761 + $0x10] sm:$0x3f] %vm687, %v757
          %v765 = vld [vmem:[#allocation4] sm:$0xff]
          %v766 = vld [vmem:[#allocation4 + $0x8] sm:$0xff]
          %v767 = vld [vmem:[#allocation4 + $0x10] sm:$0x3f]
          %771 = vrot.lane.b32.xlu0 %v765, 123
          %v772 = vpop.permute.xlu0 %771
          %773 = vrot.lane.b32.xlu0 %v766, 123
          %v774 = vpop.permute.xlu0 %773
          %775 = vrot.lane.b32.xlu0 %v767, 123
          %v776 = vpop.permute.xlu0 %775
          %s780 = scalar_lea.vmem [#allocation5], 120
          %781 = vst.msk [vmem:[%s780] sm:$0xff] %vm684, %v772
          %782 = vst.msk [vmem:[%s780 + $0x8] sm:$0xff] %vm684, %v774
          %783 = vst.msk [vmem:[%s780 + $0x10] sm:$0x3f] %vm687, %v776
          %v784 = vld [vmem:[#allocation4] sm:$0xff]
          %v785 = vld [vmem:[#allocation4 + $0x8] sm:$0xff]
          %v786 = vld [vmem:[#allocation4 + $0x10] sm:$0x3f]
          %790 = vrot.lane.b32.xlu0 %v784, 122
          %v791 = vpop.permute.xlu0 %790
          %792 = vrot.lane.b32.xlu0 %v785, 122
          %v793 = vpop.permute.xlu0 %792
          %794 = vrot.lane.b32.xlu0 %v786, 122
          %v795 = vpop.permute.xlu0 %794
          %s799 = scalar_lea.vmem [#allocation5], 144
          %800 = vst.msk [vmem:[%s799] sm:$0xff] %vm684, %v791
          %801 = vst.msk [vmem:[%s799 + $0x8] sm:$0xff] %vm684, %v793
          %802 = vst.msk [vmem:[%s799 + $0x10] sm:$0x3f] %vm687, %v795
          %v803 = vld [vmem:[#allocation5] sm:$0xff]
          %v804 = vld [vmem:[#allocation5 + $0x8] sm:$0xff]
          %s805 = sld [smem:[#allocation10]]
          %v806 = vstv %s805
          %v807 = vmul.f32 %v803, %v806
          %v808 = vmul.f32 %v804, %v806
          %v809 = vadd.f32 %v807, 0.0
          %v810 = vadd.f32 %v808, 0.0
          %v811 = vld [vmem:[%s704] sm:$0xff]
          %v812 = vld [vmem:[%s704 + $0x8] sm:$0xff]
          %s813 = sld [smem:[#allocation10 + $0x1]]
          %v814 = vstv %s813
          %v815 = vmul.f32 %v811, %v814
          %v816 = vmul.f32 %v812, %v814
          %v817 = vadd.f32 %v815, 0.0
          %v818 = vadd.f32 %v816, 0.0
          %v819 = vld [vmem:[%s723] sm:$0xff]
          %v820 = vld [vmem:[%s723 + $0x8] sm:$0xff]
          %s821 = sld [smem:[#allocation10 + $0x2]]
          %v822 = vstv %s821
          %v823 = vmul.f32 %v819, %v822
          %v824 = vmul.f32 %v820, %v822
          %v825 = vadd.f32 %v823, 0.0
          %v826 = vadd.f32 %v824, 0.0
          %v827 = vld [vmem:[%s742] sm:$0xff]
          %v828 = vld [vmem:[%s742 + $0x8] sm:$0xff]
          %s829 = sld [smem:[#allocation10 + $0x3]]
          %v830 = vstv %s829
          %v831 = vmul.f32 %v827, %v830
          %v832 = vmul.f32 %v828, %v830
          %v833 = vadd.f32 %v831, 0.0
          %v834 = vadd.f32 %v832, 0.0
          %v835 = vld [vmem:[%s761] sm:$0xff]
          %v836 = vld [vmem:[%s761 + $0x8] sm:$0xff]
          %s837 = sld [smem:[#allocation10 + $0x4]]
          %v838 = vstv %s837
          %v839 = vmul.f32 %v835, %v838
          %v840 = vmul.f32 %v836, %v838
          %v841 = vadd.f32 %v809, %v839
          %v842 = vadd.f32 %v810, %v840
          %v843 = vld [vmem:[%s780] sm:$0xff]
          %v844 = vld [vmem:[%s780 + $0x8] sm:$0xff]
          %s845 = sld [smem:[#allocation10 + $0x5]]
          %v846 = vstv %s845
          %v847 = vmul.f32 %v843, %v846
          %v848 = vmul.f32 %v844, %v846
          %v849 = vadd.f32 %v817, %v847
          %v850 = vadd.f32 %v818, %v848
          %v851 = vld [vmem:[%s799] sm:$0xff]
          %v852 = vld [vmem:[%s799 + $0x8] sm:$0xff]
          %s853 = sld [smem:[#allocation10 + $0x6]]
          %v854 = vstv %s853
          %v855 = vmul.f32 %v851, %v854
          %v856 = vmul.f32 %v852, %v854
          %v857 = vadd.f32 %v825, %v855
          %v858 = vadd.f32 %v826, %v856
          %v859 = vld [vmem:[#allocation5 + $0x1] sm:$0xff]
          %v860 = vld [vmem:[#allocation5 + $0x9] sm:$0xff]
          %s861 = sld [smem:[#allocation10 + $0x7]]
          %v862 = vstv %s861
          %v863 = vmul.f32 %v859, %v862
          %v864 = vmul.f32 %v860, %v862
          %v865 = vadd.f32 %v833, %v863
          %v866 = vadd.f32 %v834, %v864
          %v867 = vld [vmem:[%s704 + $0x1] sm:$0xff]
          %v868 = vld [vmem:[%s704 + $0x9] sm:$0xff]
          %s869 = sld [smem:[#allocation10 + $0x8]]
          %v870 = vstv %s869
          %v871 = vmul.f32 %v867, %v870
          %v872 = vmul.f32 %v868, %v870
          %v873 = vadd.f32 %v841, %v871
          %v874 = vadd.f32 %v842, %v872
          %v875 = vld [vmem:[%s723 + $0x1] sm:$0xff]
          %v876 = vld [vmem:[%s723 + $0x9] sm:$0xff]
          %s877 = sld [smem:[#allocation10 + $0x9]]
          %v878 = vstv %s877
          %v879 = vmul.f32 %v875, %v878
          %v880 = vmul.f32 %v876, %v878
          %v881 = vadd.f32 %v849, %v879
          %v882 = vadd.f32 %v850, %v880
          %v883 = vld [vmem:[%s742 + $0x1] sm:$0xff]
          %v884 = vld [vmem:[%s742 + $0x9] sm:$0xff]
          %s885 = sld [smem:[#allocation10 + $0xa]]
          %v886 = vstv %s885
          %v887 = vmul.f32 %v883, %v886
          %v888 = vmul.f32 %v884, %v886
          %v889 = vadd.f32 %v857, %v887
          %v890 = vadd.f32 %v858, %v888
          %v891 = vld [vmem:[%s761 + $0x1] sm:$0xff]
          %v892 = vld [vmem:[%s761 + $0x9] sm:$0xff]
          %s893 = sld [smem:[#allocation10 + $0xb]]
          %v894 = vstv %s893
          %v895 = vmul.f32 %v891, %v894
          %v896 = vmul.f32 %v892, %v894
          %v897 = vadd.f32 %v865, %v895
          %v898 = vadd.f32 %v866, %v896
          %v899 = vld [vmem:[%s780 + $0x1] sm:$0xff]
          %v900 = vld [vmem:[%s780 + $0x9] sm:$0xff]
          %s901 = sld [smem:[#allocation10 + $0xc]]
          %v902 = vstv %s901
          %v903 = vmul.f32 %v899, %v902
          %v904 = vmul.f32 %v900, %v902
          %v905 = vadd.f32 %v873, %v903
          %v906 = vadd.f32 %v874, %v904
          %v907 = vld [vmem:[%s799 + $0x1] sm:$0xff]
          %v908 = vld [vmem:[%s799 + $0x9] sm:$0xff]
          %s909 = sld [smem:[#allocation10 + $0xd]]
          %v910 = vstv %s909
          %v911 = vmul.f32 %v907, %v910
          %v912 = vmul.f32 %v908, %v910
          %v913 = vadd.f32 %v881, %v911
          %v914 = vadd.f32 %v882, %v912
          %v915 = vld [vmem:[#allocation5 + $0x2] sm:$0xff]
          %v916 = vld [vmem:[#allocation5 + $0xa] sm:$0xff]
          %s917 = sld [smem:[#allocation10 + $0xe]]
          %v918 = vstv %s917
          %v919 = vmul.f32 %v915, %v918
          %v920 = vmul.f32 %v916, %v918
          %v921 = vadd.f32 %v889, %v919
          %v922 = vadd.f32 %v890, %v920
          %v923 = vld [vmem:[%s704 + $0x2] sm:$0xff]
          %v924 = vld [vmem:[%s704 + $0xa] sm:$0xff]
          %s925 = sld [smem:[#allocation10 + $0xf]]
          %v926 = vstv %s925
          %v927 = vmul.f32 %v923, %v926
          %v928 = vmul.f32 %v924, %v926
          %v929 = vadd.f32 %v897, %v927
          %v930 = vadd.f32 %v898, %v928
          %v931 = vld [vmem:[%s723 + $0x2] sm:$0xff]
          %v932 = vld [vmem:[%s723 + $0xa] sm:$0xff]
          %s933 = sld [smem:[#allocation10 + $0x10]]
          %v934 = vstv %s933
          %v935 = vmul.f32 %v931, %v934
          %v936 = vmul.f32 %v932, %v934
          %v937 = vadd.f32 %v905, %v935
          %v938 = vadd.f32 %v906, %v936
          %v939 = vld [vmem:[%s742 + $0x2] sm:$0xff]
          %v940 = vld [vmem:[%s742 + $0xa] sm:$0xff]
          %s941 = sld [smem:[#allocation10 + $0x11]]
          %v942 = vstv %s941
          %v943 = vmul.f32 %v939, %v942
          %v944 = vmul.f32 %v940, %v942
          %v945 = vadd.f32 %v913, %v943
          %v946 = vadd.f32 %v914, %v944
          %v947 = vld [vmem:[%s761 + $0x2] sm:$0xff]
          %v948 = vld [vmem:[%s761 + $0xa] sm:$0xff]
          %s949 = sld [smem:[#allocation10 + $0x12]]
          %v950 = vstv %s949
          %v951 = vmul.f32 %v947, %v950
          %v952 = vmul.f32 %v948, %v950
          %v953 = vadd.f32 %v921, %v951
          %v954 = vadd.f32 %v922, %v952
          %v955 = vld [vmem:[%s780 + $0x2] sm:$0xff]
          %v956 = vld [vmem:[%s780 + $0xa] sm:$0xff]
          %s957 = sld [smem:[#allocation10 + $0x13]]
          %v958 = vstv %s957
          %v959 = vmul.f32 %v955, %v958
          %v960 = vmul.f32 %v956, %v958
          %v961 = vadd.f32 %v929, %v959
          %v962 = vadd.f32 %v930, %v960
          %v963 = vld [vmem:[%s799 + $0x2] sm:$0xff]
          %v964 = vld [vmem:[%s799 + $0xa] sm:$0xff]
          %s965 = sld [smem:[#allocation10 + $0x14]]
          %v966 = vstv %s965
          %v967 = vmul.f32 %v963, %v966
          %v968 = vmul.f32 %v964, %v966
          %v969 = vadd.f32 %v937, %v967
          %v970 = vadd.f32 %v938, %v968
          %v971 = vld [vmem:[#allocation5 + $0x3] sm:$0xff]
          %v972 = vld [vmem:[#allocation5 + $0xb] sm:$0xff]
          %s973 = sld [smem:[#allocation10 + $0x15]]
          %v974 = vstv %s973
          %v975 = vmul.f32 %v971, %v974
          %v976 = vmul.f32 %v972, %v974
          %v977 = vadd.f32 %v945, %v975
          %v978 = vadd.f32 %v946, %v976
          %v979 = vld [vmem:[%s704 + $0x3] sm:$0xff]
          %v980 = vld [vmem:[%s704 + $0xb] sm:$0xff]
          %s981 = sld [smem:[#allocation10 + $0x16]]
          %v982 = vstv %s981
          %v983 = vmul.f32 %v979, %v982
          %v984 = vmul.f32 %v980, %v982
          %v985 = vadd.f32 %v953, %v983
          %v986 = vadd.f32 %v954, %v984
          %v987 = vld [vmem:[%s723 + $0x3] sm:$0xff]
          %v988 = vld [vmem:[%s723 + $0xb] sm:$0xff]
          %s989 = sld [smem:[#allocation10 + $0x17]]
          %v990 = vstv %s989
          %v991 = vmul.f32 %v987, %v990
          %v992 = vmul.f32 %v988, %v990
          %v993 = vadd.f32 %v961, %v991
          %v994 = vadd.f32 %v962, %v992
          %v995 = vld [vmem:[%s742 + $0x3] sm:$0xff]
          %v996 = vld [vmem:[%s742 + $0xb] sm:$0xff]
          %s997 = sld [smem:[#allocation10 + $0x18]]
          %v998 = vstv %s997
          %v999 = vmul.f32 %v995, %v998
          %v1000 = vmul.f32 %v996, %v998
          %v1001 = vadd.f32 %v969, %v999
          %v1002 = vadd.f32 %v970, %v1000
          %v1003 = vld [vmem:[%s761 + $0x3] sm:$0xff]
          %v1004 = vld [vmem:[%s761 + $0xb] sm:$0xff]
          %s1005 = sld [smem:[#allocation10 + $0x19]]
          %v1006 = vstv %s1005
          %v1007 = vmul.f32 %v1003, %v1006
          %v1008 = vmul.f32 %v1004, %v1006
          %v1009 = vadd.f32 %v977, %v1007
          %v1010 = vadd.f32 %v978, %v1008
          %v1011 = vld [vmem:[%s780 + $0x3] sm:$0xff]
          %v1012 = vld [vmem:[%s780 + $0xb] sm:$0xff]
          %s1013 = sld [smem:[#allocation10 + $0x1a]]
          %v1014 = vstv %s1013
          %v1015 = vmul.f32 %v1011, %v1014
          %v1016 = vmul.f32 %v1012, %v1014
          %v1017 = vadd.f32 %v985, %v1015
          %v1018 = vadd.f32 %v986, %v1016
          %v1019 = vld [vmem:[%s799 + $0x3] sm:$0xff]
          %v1020 = vld [vmem:[%s799 + $0xb] sm:$0xff]
          %s1021 = sld [smem:[#allocation10 + $0x1b]]
          %v1022 = vstv %s1021
          %v1023 = vmul.f32 %v1019, %v1022
          %v1024 = vmul.f32 %v1020, %v1022
          %v1025 = vadd.f32 %v993, %v1023
          %v1026 = vadd.f32 %v994, %v1024
          %v1027 = vld [vmem:[#allocation5 + $0x4] sm:$0xff]
          %v1028 = vld [vmem:[#allocation5 + $0xc] sm:$0xff]
          %s1029 = sld [smem:[#allocation10 + $0x1c]]
          %v1030 = vstv %s1029
          %v1031 = vmul.f32 %v1027, %v1030
          %v1032 = vmul.f32 %v1028, %v1030
          %v1033 = vadd.f32 %v1001, %v1031
          %v1034 = vadd.f32 %v1002, %v1032
          %v1035 = vld [vmem:[%s704 + $0x4] sm:$0xff]
          %v1036 = vld [vmem:[%s704 + $0xc] sm:$0xff]
          %s1037 = sld [smem:[#allocation10 + $0x1d]]
          %v1038 = vstv %s1037
          %v1039 = vmul.f32 %v1035, %v1038
          %v1040 = vmul.f32 %v1036, %v1038
          %v1041 = vadd.f32 %v1009, %v1039
          %v1042 = vadd.f32 %v1010, %v1040
          %v1043 = vld [vmem:[%s723 + $0x4] sm:$0xff]
          %v1044 = vld [vmem:[%s723 + $0xc] sm:$0xff]
          %s1045 = sld [smem:[#allocation10 + $0x1e]]
          %v1046 = vstv %s1045
          %v1047 = vmul.f32 %v1043, %v1046
          %v1048 = vmul.f32 %v1044, %v1046
          %v1049 = vadd.f32 %v1017, %v1047
          %v1050 = vadd.f32 %v1018, %v1048
          %v1051 = vld [vmem:[%s742 + $0x4] sm:$0xff]
          %v1052 = vld [vmem:[%s742 + $0xc] sm:$0xff]
          %s1053 = sld [smem:[#allocation10 + $0x1f]]
          %v1054 = vstv %s1053
          %v1055 = vmul.f32 %v1051, %v1054
          %v1056 = vmul.f32 %v1052, %v1054
          %v1057 = vadd.f32 %v1025, %v1055
          %v1058 = vadd.f32 %v1026, %v1056
          %v1059 = vld [vmem:[%s761 + $0x4] sm:$0xff]
          %v1060 = vld [vmem:[%s761 + $0xc] sm:$0xff]
          %s1061 = sld [smem:[#allocation10 + $0x20]]
          %v1062 = vstv %s1061
          %v1063 = vmul.f32 %v1059, %v1062
          %v1064 = vmul.f32 %v1060, %v1062
          %v1065 = vadd.f32 %v1033, %v1063
          %v1066 = vadd.f32 %v1034, %v1064
          %v1067 = vld [vmem:[%s780 + $0x4] sm:$0xff]
          %v1068 = vld [vmem:[%s780 + $0xc] sm:$0xff]
          %s1069 = sld [smem:[#allocation10 + $0x21]]
          %v1070 = vstv %s1069
          %v1071 = vmul.f32 %v1067, %v1070
          %v1072 = vmul.f32 %v1068, %v1070
          %v1073 = vadd.f32 %v1041, %v1071
          %v1074 = vadd.f32 %v1042, %v1072
          %v1075 = vld [vmem:[%s799 + $0x4] sm:$0xff]
          %v1076 = vld [vmem:[%s799 + $0xc] sm:$0xff]
          %s1077 = sld [smem:[#allocation10 + $0x22]]
          %v1078 = vstv %s1077
          %v1079 = vmul.f32 %v1075, %v1078
          %v1080 = vmul.f32 %v1076, %v1078
          %v1081 = vadd.f32 %v1049, %v1079
          %v1082 = vadd.f32 %v1050, %v1080
          %v1083 = vld [vmem:[#allocation5 + $0x5] sm:$0xff]
          %v1084 = vld [vmem:[#allocation5 + $0xd] sm:$0xff]
          %s1085 = sld [smem:[#allocation10 + $0x23]]
          %v1086 = vstv %s1085
          %v1087 = vmul.f32 %v1083, %v1086
          %v1088 = vmul.f32 %v1084, %v1086
          %v1089 = vadd.f32 %v1057, %v1087
          %v1090 = vadd.f32 %v1058, %v1088
          %v1091 = vld [vmem:[%s704 + $0x5] sm:$0xff]
          %v1092 = vld [vmem:[%s704 + $0xd] sm:$0xff]
          %s1093 = sld [smem:[#allocation10 + $0x24]]
          %v1094 = vstv %s1093
          %v1095 = vmul.f32 %v1091, %v1094
          %v1096 = vmul.f32 %v1092, %v1094
          %v1097 = vadd.f32 %v1065, %v1095
          %v1098 = vadd.f32 %v1066, %v1096
          %v1099 = vld [vmem:[%s723 + $0x5] sm:$0xff]
          %v1100 = vld [vmem:[%s723 + $0xd] sm:$0xff]
          %s1101 = sld [smem:[#allocation10 + $0x25]]
          %v1102 = vstv %s1101
          %v1103 = vmul.f32 %v1099, %v1102
          %v1104 = vmul.f32 %v1100, %v1102
          %v1105 = vadd.f32 %v1073, %v1103
          %v1106 = vadd.f32 %v1074, %v1104
          %v1107 = vld [vmem:[%s742 + $0x5] sm:$0xff]
          %v1108 = vld [vmem:[%s742 + $0xd] sm:$0xff]
          %s1109 = sld [smem:[#allocation10 + $0x26]]
          %v1110 = vstv %s1109
          %v1111 = vmul.f32 %v1107, %v1110
          %v1112 = vmul.f32 %v1108, %v1110
          %v1113 = vadd.f32 %v1081, %v1111
          %v1114 = vadd.f32 %v1082, %v1112
          %v1115 = vld [vmem:[%s761 + $0x5] sm:$0xff]
          %v1116 = vld [vmem:[%s761 + $0xd] sm:$0xff]
          %s1117 = sld [smem:[#allocation10 + $0x27]]
          %v1118 = vstv %s1117
          %v1119 = vmul.f32 %v1115, %v1118
          %v1120 = vmul.f32 %v1116, %v1118
          %v1121 = vadd.f32 %v1089, %v1119
          %v1122 = vadd.f32 %v1090, %v1120
          %v1123 = vld [vmem:[%s780 + $0x5] sm:$0xff]
          %v1124 = vld [vmem:[%s780 + $0xd] sm:$0xff]
          %s1125 = sld [smem:[#allocation10 + $0x28]]
          %v1126 = vstv %s1125
          %v1127 = vmul.f32 %v1123, %v1126
          %v1128 = vmul.f32 %v1124, %v1126
          %v1129 = vadd.f32 %v1097, %v1127
          %v1130 = vadd.f32 %v1098, %v1128
          %v1131 = vld [vmem:[%s799 + $0x5] sm:$0xff]
          %v1132 = vld [vmem:[%s799 + $0xd] sm:$0xff]
          %s1133 = sld [smem:[#allocation10 + $0x29]]
          %v1134 = vstv %s1133
          %v1135 = vmul.f32 %v1131, %v1134
          %v1136 = vmul.f32 %v1132, %v1134
          %v1137 = vadd.f32 %v1105, %v1135
          %v1138 = vadd.f32 %v1106, %v1136
          %v1139 = vld [vmem:[#allocation5 + $0x6] sm:$0xff]
          %v1140 = vld [vmem:[#allocation5 + $0xe] sm:$0xff]
          %s1141 = sld [smem:[#allocation10 + $0x2a]]
          %v1142 = vstv %s1141
          %v1143 = vmul.f32 %v1139, %v1142
          %v1144 = vmul.f32 %v1140, %v1142
          %v1145 = vadd.f32 %v1113, %v1143
          %v1146 = vadd.f32 %v1114, %v1144
          %v1147 = vld [vmem:[%s704 + $0x6] sm:$0xff]
          %v1148 = vld [vmem:[%s704 + $0xe] sm:$0xff]
          %s1149 = sld [smem:[#allocation10 + $0x2b]]
          %v1150 = vstv %s1149
          %v1151 = vmul.f32 %v1147, %v1150
          %v1152 = vmul.f32 %v1148, %v1150
          %v1153 = vadd.f32 %v1121, %v1151
          %v1154 = vadd.f32 %v1122, %v1152
          %v1155 = vld [vmem:[%s723 + $0x6] sm:$0xff]
          %v1156 = vld [vmem:[%s723 + $0xe] sm:$0xff]
          %s1157 = sld [smem:[#allocation10 + $0x2c]]
          %v1158 = vstv %s1157
          %v1159 = vmul.f32 %v1155, %v1158
          %v1160 = vmul.f32 %v1156, %v1158
          %v1161 = vadd.f32 %v1129, %v1159
          %v1162 = vadd.f32 %v1130, %v1160
          %v1163 = vld [vmem:[%s742 + $0x6] sm:$0xff]
          %v1164 = vld [vmem:[%s742 + $0xe] sm:$0xff]
          %s1165 = sld [smem:[#allocation10 + $0x2d]]
          %v1166 = vstv %s1165
          %v1167 = vmul.f32 %v1163, %v1166
          %v1168 = vmul.f32 %v1164, %v1166
          %v1169 = vadd.f32 %v1137, %v1167
          %v1170 = vadd.f32 %v1138, %v1168
          %v1171 = vld [vmem:[%s761 + $0x6] sm:$0xff]
          %v1172 = vld [vmem:[%s761 + $0xe] sm:$0xff]
          %s1173 = sld [smem:[#allocation10 + $0x2e]]
          %v1174 = vstv %s1173
          %v1175 = vmul.f32 %v1171, %v1174
          %v1176 = vmul.f32 %v1172, %v1174
          %v1177 = vadd.f32 %v1145, %v1175
          %v1178 = vadd.f32 %v1146, %v1176
          %v1179 = vld [vmem:[%s780 + $0x6] sm:$0xff]
          %v1180 = vld [vmem:[%s780 + $0xe] sm:$0xff]
          %s1181 = sld [smem:[#allocation10 + $0x2f]]
          %v1182 = vstv %s1181
          %v1183 = vmul.f32 %v1179, %v1182
          %v1184 = vmul.f32 %v1180, %v1182
          %v1185 = vadd.f32 %v1153, %v1183
          %v1186 = vadd.f32 %v1154, %v1184
          %v1187 = vld [vmem:[%s799 + $0x6] sm:$0xff]
          %v1188 = vld [vmem:[%s799 + $0xe] sm:$0xff]
          %s1189 = sld [smem:[#allocation10 + $0x30]]
          %v1190 = vstv %s1189
          %v1191 = vmul.f32 %v1187, %v1190
          %v1192 = vmul.f32 %v1188, %v1190
          %v1193 = vadd.f32 %v1161, %v1191
          %v1194 = vadd.f32 %v1162, %v1192
          %v1195 = vld [vmem:[%s335] sm:$0xff]
          %v1196 = vld [vmem:[%s335 + $0x8] sm:$0xff]
          %v1197 = vld [vmem:[%s335 + $0x10] sm:$0x3f]
          %1198 = vst.msk [vmem:[#allocation5] sm:$0xff] %vm684, %v1195
          %1199 = vst.msk [vmem:[#allocation5 + $0x8] sm:$0xff] %vm684, %v1196
          %1200 = vst.msk [vmem:[#allocation5 + $0x10] sm:$0x3f] %vm687, %v1197
          %v1201 = vld [vmem:[%s335] sm:$0xff]
          %v1202 = vld [vmem:[%s335 + $0x8] sm:$0xff]
          %v1203 = vld [vmem:[%s335 + $0x10] sm:$0x3f]
          %1207 = vrot.lane.b32.xlu0 %v1201, 127
          %v1208 = vpop.permute.xlu0 %1207
          %1209 = vrot.lane.b32.xlu0 %v1202, 127
          %v1210 = vpop.permute.xlu0 %1209
          %1211 = vrot.lane.b32.xlu0 %v1203, 127
          %v1212 = vpop.permute.xlu0 %1211
          %1216 = vst.msk [vmem:[%s704] sm:$0xff] %vm684, %v1208
          %1217 = vst.msk [vmem:[%s704 + $0x8] sm:$0xff] %vm684, %v1210
          %1218 = vst.msk [vmem:[%s704 + $0x10] sm:$0x3f] %vm687, %v1212
          %v1219 = vld [vmem:[%s335] sm:$0xff]
          %v1220 = vld [vmem:[%s335 + $0x8] sm:$0xff]
          %v1221 = vld [vmem:[%s335 + $0x10] sm:$0x3f]
          %1225 = vrot.lane.b32.xlu0 %v1219, 126
          %v1226 = vpop.permute.xlu0 %1225
          %1227 = vrot.lane.b32.xlu0 %v1220, 126
          %v1228 = vpop.permute.xlu0 %1227
          %1229 = vrot.lane.b32.xlu0 %v1221, 126
          %v1230 = vpop.permute.xlu0 %1229
          %1234 = vst.msk [vmem:[%s723] sm:$0xff] %vm684, %v1226
          %1235 = vst.msk [vmem:[%s723 + $0x8] sm:$0xff] %vm684, %v1228
          %1236 = vst.msk [vmem:[%s723 + $0x10] sm:$0x3f] %vm687, %v1230
          %v1237 = vld [vmem:[%s335] sm:$0xff]
          %v1238 = vld [vmem:[%s335 + $0x8] sm:$0xff]
          %v1239 = vld [vmem:[%s335 + $0x10] sm:$0x3f]
          %1243 = vrot.lane.b32.xlu0 %v1237, 125
          %v1244 = vpop.permute.xlu0 %1243
          %1245 = vrot.lane.b32.xlu0 %v1238, 125
          %v1246 = vpop.permute.xlu0 %1245
          %1247 = vrot.lane.b32.xlu0 %v1239, 125
          %v1248 = vpop.permute.xlu0 %1247
          %1252 = vst.msk [vmem:[%s742] sm:$0xff] %vm684, %v1244
          %1253 = vst.msk [vmem:[%s742 + $0x8] sm:$0xff] %vm684, %v1246
          %1254 = vst.msk [vmem:[%s742 + $0x10] sm:$0x3f] %vm687, %v1248
          %v1255 = vld [vmem:[%s335] sm:$0xff]
          %v1256 = vld [vmem:[%s335 + $0x8] sm:$0xff]
          %v1257 = vld [vmem:[%s335 + $0x10] sm:$0x3f]
          %1261 = vrot.lane.b32.xlu0 %v1255, 124
          %v1262 = vpop.permute.xlu0 %1261
          %1263 = vrot.lane.b32.xlu0 %v1256, 124
          %v1264 = vpop.permute.xlu0 %1263
          %1265 = vrot.lane.b32.xlu0 %v1257, 124
          %v1266 = vpop.permute.xlu0 %1265
          %1270 = vst.msk [vmem:[%s761] sm:$0xff] %vm684, %v1262
          %1271 = vst.msk [vmem:[%s761 + $0x8] sm:$0xff] %vm684, %v1264
          %1272 = vst.msk [vmem:[%s761 + $0x10] sm:$0x3f] %vm687, %v1266
          %v1273 = vld [vmem:[%s335] sm:$0xff]
          %v1274 = vld [vmem:[%s335 + $0x8] sm:$0xff]
          %v1275 = vld [vmem:[%s335 + $0x10] sm:$0x3f]
          %1279 = vrot.lane.b32.xlu0 %v1273, 123
          %v1280 = vpop.permute.xlu0 %1279
          %1281 = vrot.lane.b32.xlu0 %v1274, 123
          %v1282 = vpop.permute.xlu0 %1281
          %1283 = vrot.lane.b32.xlu0 %v1275, 123
          %v1284 = vpop.permute.xlu0 %1283
          %1288 = vst.msk [vmem:[%s780] sm:$0xff] %vm684, %v1280
          %1289 = vst.msk [vmem:[%s780 + $0x8] sm:$0xff] %vm684, %v1282
          %1290 = vst.msk [vmem:[%s780 + $0x10] sm:$0x3f] %vm687, %v1284
          %v1291 = vld [vmem:[%s335] sm:$0xff]
          %v1292 = vld [vmem:[%s335 + $0x8] sm:$0xff]
          %v1293 = vld [vmem:[%s335 + $0x10] sm:$0x3f]
          %1297 = vrot.lane.b32.xlu0 %v1291, 122
          %v1298 = vpop.permute.xlu0 %1297
          %1299 = vrot.lane.b32.xlu0 %v1292, 122
          %v1300 = vpop.permute.xlu0 %1299
          %1301 = vrot.lane.b32.xlu0 %v1293, 122
          %v1302 = vpop.permute.xlu0 %1301
          %1306 = vst.msk [vmem:[%s799] sm:$0xff] %vm684, %v1298
          %1307 = vst.msk [vmem:[%s799 + $0x8] sm:$0xff] %vm684, %v1300
          %1308 = vst.msk [vmem:[%s799 + $0x10] sm:$0x3f] %vm687, %v1302
          %v1309 = vld [vmem:[#allocation5] sm:$0xff]
          %v1310 = vld [vmem:[#allocation5 + $0x8] sm:$0xff]
          %s1311 = sld [smem:[#allocation10 + $0x31]]
          %v1312 = vstv %s1311
          %v1313 = vmul.f32 %v1309, %v1312
          %v1314 = vmul.f32 %v1310, %v1312
          %v1315 = vadd.f32 %v1169, %v1313
          %v1316 = vadd.f32 %v1170, %v1314
          %v1317 = vld [vmem:[%s704] sm:$0xff]
          %v1318 = vld [vmem:[%s704 + $0x8] sm:$0xff]
          %s1319 = sld [smem:[#allocation10 + $0x32]]
          %v1320 = vstv %s1319
          %v1321 = vmul.f32 %v1317, %v1320
          %v1322 = vmul.f32 %v1318, %v1320
          %v1323 = vadd.f32 %v1177, %v1321
          %v1324 = vadd.f32 %v1178, %v1322
          %v1325 = vld [vmem:[%s723] sm:$0xff]
          %v1326 = vld [vmem:[%s723 + $0x8] sm:$0xff]
          %s1327 = sld [smem:[#allocation10 + $0x33]]
          %v1328 = vstv %s1327
          %v1329 = vmul.f32 %v1325, %v1328
          %v1330 = vmul.f32 %v1326, %v1328
          %v1331 = vadd.f32 %v1185, %v1329
          %v1332 = vadd.f32 %v1186, %v1330
          %v1333 = vld [vmem:[%s742] sm:$0xff]
          %v1334 = vld [vmem:[%s742 + $0x8] sm:$0xff]
          %s1335 = sld [smem:[#allocation10 + $0x34]]
          %v1336 = vstv %s1335
          %v1337 = vmul.f32 %v1333, %v1336
          %v1338 = vmul.f32 %v1334, %v1336
          %v1339 = vadd.f32 %v1193, %v1337
          %v1340 = vadd.f32 %v1194, %v1338
          %v1341 = vld [vmem:[%s761] sm:$0xff]
          %v1342 = vld [vmem:[%s761 + $0x8] sm:$0xff]
          %s1343 = sld [smem:[#allocation10 + $0x35]]
          %v1344 = vstv %s1343
          %v1345 = vmul.f32 %v1341, %v1344
          %v1346 = vmul.f32 %v1342, %v1344
          %v1347 = vadd.f32 %v1315, %v1345
          %v1348 = vadd.f32 %v1316, %v1346
          %v1349 = vld [vmem:[%s780] sm:$0xff]
          %v1350 = vld [vmem:[%s780 + $0x8] sm:$0xff]
          %s1351 = sld [smem:[#allocation10 + $0x36]]
          %v1352 = vstv %s1351
          %v1353 = vmul.f32 %v1349, %v1352
          %v1354 = vmul.f32 %v1350, %v1352
          %v1355 = vadd.f32 %v1323, %v1353
          %v1356 = vadd.f32 %v1324, %v1354
          %v1357 = vld [vmem:[%s799] sm:$0xff]
          %v1358 = vld [vmem:[%s799 + $0x8] sm:$0xff]
          %s1359 = sld [smem:[#allocation10 + $0x37]]
          %v1360 = vstv %s1359
          %v1361 = vmul.f32 %v1357, %v1360
          %v1362 = vmul.f32 %v1358, %v1360
          %v1363 = vadd.f32 %v1331, %v1361
          %v1364 = vadd.f32 %v1332, %v1362
          %v1365 = vld [vmem:[#allocation5 + $0x1] sm:$0xff]
          %v1366 = vld [vmem:[#allocation5 + $0x9] sm:$0xff]
          %s1367 = sld [smem:[#allocation10 + $0x38]]
          %v1368 = vstv %s1367
          %v1369 = vmul.f32 %v1365, %v1368
          %v1370 = vmul.f32 %v1366, %v1368
          %v1371 = vadd.f32 %v1339, %v1369
          %v1372 = vadd.f32 %v1340, %v1370
          %v1373 = vld [vmem:[%s704 + $0x1] sm:$0xff]
          %v1374 = vld [vmem:[%s704 + $0x9] sm:$0xff]
          %s1375 = sld [smem:[#allocation10 + $0x39]]
          %v1376 = vstv %s1375
          %v1377 = vmul.f32 %v1373, %v1376
          %v1378 = vmul.f32 %v1374, %v1376
          %v1379 = vadd.f32 %v1347, %v1377
          %v1380 = vadd.f32 %v1348, %v1378
          %v1381 = vld [vmem:[%s723 + $0x1] sm:$0xff]
          %v1382 = vld [vmem:[%s723 + $0x9] sm:$0xff]
          %s1383 = sld [smem:[#allocation10 + $0x3a]]
          %v1384 = vstv %s1383
          %v1385 = vmul.f32 %v1381, %v1384
          %v1386 = vmul.f32 %v1382, %v1384
          %v1387 = vadd.f32 %v1355, %v1385
          %v1388 = vadd.f32 %v1356, %v1386
          %v1389 = vld [vmem:[%s742 + $0x1] sm:$0xff]
          %v1390 = vld [vmem:[%s742 + $0x9] sm:$0xff]
          %s1391 = sld [smem:[#allocation10 + $0x3b]]
          %v1392 = vstv %s1391
          %v1393 = vmul.f32 %v1389, %v1392
          %v1394 = vmul.f32 %v1390, %v1392
          %v1395 = vadd.f32 %v1363, %v1393
          %v1396 = vadd.f32 %v1364, %v1394
          %v1397 = vld [vmem:[%s761 + $0x1] sm:$0xff]
          %v1398 = vld [vmem:[%s761 + $0x9] sm:$0xff]
          %s1399 = sld [smem:[#allocation10 + $0x3c]]
          %v1400 = vstv %s1399
          %v1401 = vmul.f32 %v1397, %v1400
          %v1402 = vmul.f32 %v1398, %v1400
          %v1403 = vadd.f32 %v1371, %v1401
          %v1404 = vadd.f32 %v1372, %v1402
          %v1405 = vld [vmem:[%s780 + $0x1] sm:$0xff]
          %v1406 = vld [vmem:[%s780 + $0x9] sm:$0xff]
          %s1407 = sld [smem:[#allocation10 + $0x3d]]
          %v1408 = vstv %s1407
          %v1409 = vmul.f32 %v1405, %v1408
          %v1410 = vmul.f32 %v1406, %v1408
          %v1411 = vadd.f32 %v1379, %v1409
          %v1412 = vadd.f32 %v1380, %v1410
          %v1413 = vld [vmem:[%s799 + $0x1] sm:$0xff]
          %v1414 = vld [vmem:[%s799 + $0x9] sm:$0xff]
          %s1415 = sld [smem:[#allocation10 + $0x3e]]
          %v1416 = vstv %s1415
          %v1417 = vmul.f32 %v1413, %v1416
          %v1418 = vmul.f32 %v1414, %v1416
          %v1419 = vadd.f32 %v1387, %v1417
          %v1420 = vadd.f32 %v1388, %v1418
          %v1421 = vld [vmem:[#allocation5 + $0x2] sm:$0xff]
          %v1422 = vld [vmem:[#allocation5 + $0xa] sm:$0xff]
          %s1423 = sld [smem:[#allocation10 + $0x3f]]
          %v1424 = vstv %s1423
          %v1425 = vmul.f32 %v1421, %v1424
          %v1426 = vmul.f32 %v1422, %v1424
          %v1427 = vadd.f32 %v1395, %v1425
          %v1428 = vadd.f32 %v1396, %v1426
          %v1429 = vld [vmem:[%s704 + $0x2] sm:$0xff]
          %v1430 = vld [vmem:[%s704 + $0xa] sm:$0xff]
          %s1431 = sld [smem:[#allocation10 + $0x40]]
          %v1432 = vstv %s1431
          %v1433 = vmul.f32 %v1429, %v1432
          %v1434 = vmul.f32 %v1430, %v1432
          %v1435 = vadd.f32 %v1403, %v1433
          %v1436 = vadd.f32 %v1404, %v1434
          %v1437 = vld [vmem:[%s723 + $0x2] sm:$0xff]
          %v1438 = vld [vmem:[%s723 + $0xa] sm:$0xff]
          %s1439 = sld [smem:[#allocation10 + $0x41]]
          %v1440 = vstv %s1439
          %v1441 = vmul.f32 %v1437, %v1440
          %v1442 = vmul.f32 %v1438, %v1440
          %v1443 = vadd.f32 %v1411, %v1441
          %v1444 = vadd.f32 %v1412, %v1442
          %v1445 = vld [vmem:[%s742 + $0x2] sm:$0xff]
          %v1446 = vld [vmem:[%s742 + $0xa] sm:$0xff]
          %s1447 = sld [smem:[#allocation10 + $0x42]]
          %v1448 = vstv %s1447
          %v1449 = vmul.f32 %v1445, %v1448
          %v1450 = vmul.f32 %v1446, %v1448
          %v1451 = vadd.f32 %v1419, %v1449
          %v1452 = vadd.f32 %v1420, %v1450
          %v1453 = vld [vmem:[%s761 + $0x2] sm:$0xff]
          %v1454 = vld [vmem:[%s761 + $0xa] sm:$0xff]
          %s1455 = sld [smem:[#allocation10 + $0x43]]
          %v1456 = vstv %s1455
          %v1457 = vmul.f32 %v1453, %v1456
          %v1458 = vmul.f32 %v1454, %v1456
          %v1459 = vadd.f32 %v1427, %v1457
          %v1460 = vadd.f32 %v1428, %v1458
          %v1461 = vld [vmem:[%s780 + $0x2] sm:$0xff]
          %v1462 = vld [vmem:[%s780 + $0xa] sm:$0xff]
          %s1463 = sld [smem:[#allocation10 + $0x44]]
          %v1464 = vstv %s1463
          %v1465 = vmul.f32 %v1461, %v1464
          %v1466 = vmul.f32 %v1462, %v1464
          %v1467 = vadd.f32 %v1435, %v1465
          %v1468 = vadd.f32 %v1436, %v1466
          %v1469 = vld [vmem:[%s799 + $0x2] sm:$0xff]
          %v1470 = vld [vmem:[%s799 + $0xa] sm:$0xff]
          %s1471 = sld [smem:[#allocation10 + $0x45]]
          %v1472 = vstv %s1471
          %v1473 = vmul.f32 %v1469, %v1472
          %v1474 = vmul.f32 %v1470, %v1472
          %v1475 = vadd.f32 %v1443, %v1473
          %v1476 = vadd.f32 %v1444, %v1474
          %v1477 = vld [vmem:[#allocation5 + $0x3] sm:$0xff]
          %v1478 = vld [vmem:[#allocation5 + $0xb] sm:$0xff]
          %s1479 = sld [smem:[#allocation10 + $0x46]]
          %v1480 = vstv %s1479
          %v1481 = vmul.f32 %v1477, %v1480
          %v1482 = vmul.f32 %v1478, %v1480
          %v1483 = vadd.f32 %v1451, %v1481
          %v1484 = vadd.f32 %v1452, %v1482
          %v1485 = vld [vmem:[%s704 + $0x3] sm:$0xff]
          %v1486 = vld [vmem:[%s704 + $0xb] sm:$0xff]
          %s1487 = sld [smem:[#allocation10 + $0x47]]
          %v1488 = vstv %s1487
          %v1489 = vmul.f32 %v1485, %v1488
          %v1490 = vmul.f32 %v1486, %v1488
          %v1491 = vadd.f32 %v1459, %v1489
          %v1492 = vadd.f32 %v1460, %v1490
          %v1493 = vld [vmem:[%s723 + $0x3] sm:$0xff]
          %v1494 = vld [vmem:[%s723 + $0xb] sm:$0xff]
          %s1495 = sld [smem:[#allocation10 + $0x48]]
          %v1496 = vstv %s1495
          %v1497 = vmul.f32 %v1493, %v1496
          %v1498 = vmul.f32 %v1494, %v1496
          %v1499 = vadd.f32 %v1467, %v1497
          %v1500 = vadd.f32 %v1468, %v1498
          %v1501 = vld [vmem:[%s742 + $0x3] sm:$0xff]
          %v1502 = vld [vmem:[%s742 + $0xb] sm:$0xff]
          %s1503 = sld [smem:[#allocation10 + $0x49]]
          %v1504 = vstv %s1503
          %v1505 = vmul.f32 %v1501, %v1504
          %v1506 = vmul.f32 %v1502, %v1504
          %v1507 = vadd.f32 %v1475, %v1505
          %v1508 = vadd.f32 %v1476, %v1506
          %v1509 = vld [vmem:[%s761 + $0x3] sm:$0xff]
          %v1510 = vld [vmem:[%s761 + $0xb] sm:$0xff]
          %s1511 = sld [smem:[#allocation10 + $0x4a]]
          %v1512 = vstv %s1511
          %v1513 = vmul.f32 %v1509, %v1512
          %v1514 = vmul.f32 %v1510, %v1512
          %v1515 = vadd.f32 %v1483, %v1513
          %v1516 = vadd.f32 %v1484, %v1514
          %v1517 = vld [vmem:[%s780 + $0x3] sm:$0xff]
          %v1518 = vld [vmem:[%s780 + $0xb] sm:$0xff]
          %s1519 = sld [smem:[#allocation10 + $0x4b]]
          %v1520 = vstv %s1519
          %v1521 = vmul.f32 %v1517, %v1520
          %v1522 = vmul.f32 %v1518, %v1520
          %v1523 = vadd.f32 %v1491, %v1521
          %v1524 = vadd.f32 %v1492, %v1522
          %v1525 = vld [vmem:[%s799 + $0x3] sm:$0xff]
          %v1526 = vld [vmem:[%s799 + $0xb] sm:$0xff]
          %s1527 = sld [smem:[#allocation10 + $0x4c]]
          %v1528 = vstv %s1527
          %v1529 = vmul.f32 %v1525, %v1528
          %v1530 = vmul.f32 %v1526, %v1528
          %v1531 = vadd.f32 %v1499, %v1529
          %v1532 = vadd.f32 %v1500, %v1530
          %v1533 = vld [vmem:[#allocation5 + $0x4] sm:$0xff]
          %v1534 = vld [vmem:[#allocation5 + $0xc] sm:$0xff]
          %s1535 = sld [smem:[#allocation10 + $0x4d]]
          %v1536 = vstv %s1535
          %v1537 = vmul.f32 %v1533, %v1536
          %v1538 = vmul.f32 %v1534, %v1536
          %v1539 = vadd.f32 %v1507, %v1537
          %v1540 = vadd.f32 %v1508, %v1538
          %v1541 = vld [vmem:[%s704 + $0x4] sm:$0xff]
          %v1542 = vld [vmem:[%s704 + $0xc] sm:$0xff]
          %s1543 = sld [smem:[#allocation10 + $0x4e]]
          %v1544 = vstv %s1543
          %v1545 = vmul.f32 %v1541, %v1544
          %v1546 = vmul.f32 %v1542, %v1544
          %v1547 = vadd.f32 %v1515, %v1545
          %v1548 = vadd.f32 %v1516, %v1546
          %v1549 = vld [vmem:[%s723 + $0x4] sm:$0xff]
          %v1550 = vld [vmem:[%s723 + $0xc] sm:$0xff]
          %s1551 = sld [smem:[#allocation10 + $0x4f]]
          %v1552 = vstv %s1551
          %v1553 = vmul.f32 %v1549, %v1552
          %v1554 = vmul.f32 %v1550, %v1552
          %v1555 = vadd.f32 %v1523, %v1553
          %v1556 = vadd.f32 %v1524, %v1554
          %v1557 = vld [vmem:[%s742 + $0x4] sm:$0xff]
          %v1558 = vld [vmem:[%s742 + $0xc] sm:$0xff]
          %s1559 = sld [smem:[#allocation10 + $0x50]]
          %v1560 = vstv %s1559
          %v1561 = vmul.f32 %v1557, %v1560
          %v1562 = vmul.f32 %v1558, %v1560
          %v1563 = vadd.f32 %v1531, %v1561
          %v1564 = vadd.f32 %v1532, %v1562
          %v1565 = vld [vmem:[%s761 + $0x4] sm:$0xff]
          %v1566 = vld [vmem:[%s761 + $0xc] sm:$0xff]
          %s1567 = sld [smem:[#allocation10 + $0x51]]
          %v1568 = vstv %s1567
          %v1569 = vmul.f32 %v1565, %v1568
          %v1570 = vmul.f32 %v1566, %v1568
          %v1571 = vadd.f32 %v1539, %v1569
          %v1572 = vadd.f32 %v1540, %v1570
          %v1573 = vld [vmem:[%s780 + $0x4] sm:$0xff]
          %v1574 = vld [vmem:[%s780 + $0xc] sm:$0xff]
          %s1575 = sld [smem:[#allocation10 + $0x52]]
          %v1576 = vstv %s1575
          %v1577 = vmul.f32 %v1573, %v1576
          %v1578 = vmul.f32 %v1574, %v1576
          %v1579 = vadd.f32 %v1547, %v1577
          %v1580 = vadd.f32 %v1548, %v1578
          %v1581 = vld [vmem:[%s799 + $0x4] sm:$0xff]
          %v1582 = vld [vmem:[%s799 + $0xc] sm:$0xff]
          %s1583 = sld [smem:[#allocation10 + $0x53]]
          %v1584 = vstv %s1583
          %v1585 = vmul.f32 %v1581, %v1584
          %v1586 = vmul.f32 %v1582, %v1584
          %v1587 = vadd.f32 %v1555, %v1585
          %v1588 = vadd.f32 %v1556, %v1586
          %v1589 = vld [vmem:[#allocation5 + $0x5] sm:$0xff]
          %v1590 = vld [vmem:[#allocation5 + $0xd] sm:$0xff]
          %s1591 = sld [smem:[#allocation10 + $0x54]]
          %v1592 = vstv %s1591
          %v1593 = vmul.f32 %v1589, %v1592
          %v1594 = vmul.f32 %v1590, %v1592
          %v1595 = vadd.f32 %v1563, %v1593
          %v1596 = vadd.f32 %v1564, %v1594
          %v1597 = vld [vmem:[%s704 + $0x5] sm:$0xff]
          %v1598 = vld [vmem:[%s704 + $0xd] sm:$0xff]
          %s1599 = sld [smem:[#allocation10 + $0x55]]
          %v1600 = vstv %s1599
          %v1601 = vmul.f32 %v1597, %v1600
          %v1602 = vmul.f32 %v1598, %v1600
          %v1603 = vadd.f32 %v1571, %v1601
          %v1604 = vadd.f32 %v1572, %v1602
          %v1605 = vld [vmem:[%s723 + $0x5] sm:$0xff]
          %v1606 = vld [vmem:[%s723 + $0xd] sm:$0xff]
          %s1607 = sld [smem:[#allocation10 + $0x56]]
          %v1608 = vstv %s1607
          %v1609 = vmul.f32 %v1605, %v1608
          %v1610 = vmul.f32 %v1606, %v1608
          %v1611 = vadd.f32 %v1579, %v1609
          %v1612 = vadd.f32 %v1580, %v1610
          %v1613 = vld [vmem:[%s742 + $0x5] sm:$0xff]
          %v1614 = vld [vmem:[%s742 + $0xd] sm:$0xff]
          %s1615 = sld [smem:[#allocation10 + $0x57]]
          %v1616 = vstv %s1615
          %v1617 = vmul.f32 %v1613, %v1616
          %v1618 = vmul.f32 %v1614, %v1616
          %v1619 = vadd.f32 %v1587, %v1617
          %v1620 = vadd.f32 %v1588, %v1618
          %v1621 = vld [vmem:[%s761 + $0x5] sm:$0xff]
          %v1622 = vld [vmem:[%s761 + $0xd] sm:$0xff]
          %s1623 = sld [smem:[#allocation10 + $0x58]]
          %v1624 = vstv %s1623
          %v1625 = vmul.f32 %v1621, %v1624
          %v1626 = vmul.f32 %v1622, %v1624
          %v1627 = vadd.f32 %v1595, %v1625
          %v1628 = vadd.f32 %v1596, %v1626
          %v1629 = vld [vmem:[%s780 + $0x5] sm:$0xff]
          %v1630 = vld [vmem:[%s780 + $0xd] sm:$0xff]
          %s1631 = sld [smem:[#allocation10 + $0x59]]
          %v1632 = vstv %s1631
          %v1633 = vmul.f32 %v1629, %v1632
          %v1634 = vmul.f32 %v1630, %v1632
          %v1635 = vadd.f32 %v1603, %v1633
          %v1636 = vadd.f32 %v1604, %v1634
          %v1637 = vld [vmem:[%s799 + $0x5] sm:$0xff]
          %v1638 = vld [vmem:[%s799 + $0xd] sm:$0xff]
          %s1639 = sld [smem:[#allocation10 + $0x5a]]
          %v1640 = vstv %s1639
          %v1641 = vmul.f32 %v1637, %v1640
          %v1642 = vmul.f32 %v1638, %v1640
          %v1643 = vadd.f32 %v1611, %v1641
          %v1644 = vadd.f32 %v1612, %v1642
          %v1645 = vld [vmem:[#allocation5 + $0x6] sm:$0xff]
          %v1646 = vld [vmem:[#allocation5 + $0xe] sm:$0xff]
          %s1647 = sld [smem:[#allocation10 + $0x5b]]
          %v1648 = vstv %s1647
          %v1649 = vmul.f32 %v1645, %v1648
          %v1650 = vmul.f32 %v1646, %v1648
          %v1651 = vadd.f32 %v1619, %v1649
          %v1652 = vadd.f32 %v1620, %v1650
          %v1653 = vld [vmem:[%s704 + $0x6] sm:$0xff]
          %v1654 = vld [vmem:[%s704 + $0xe] sm:$0xff]
          %s1655 = sld [smem:[#allocation10 + $0x5c]]
          %v1656 = vstv %s1655
          %v1657 = vmul.f32 %v1653, %v1656
          %v1658 = vmul.f32 %v1654, %v1656
          %v1659 = vadd.f32 %v1627, %v1657
          %v1660 = vadd.f32 %v1628, %v1658
          %v1661 = vld [vmem:[%s723 + $0x6] sm:$0xff]
          %v1662 = vld [vmem:[%s723 + $0xe] sm:$0xff]
          %s1663 = sld [smem:[#allocation10 + $0x5d]]
          %v1664 = vstv %s1663
          %v1665 = vmul.f32 %v1661, %v1664
          %v1666 = vmul.f32 %v1662, %v1664
          %v1667 = vadd.f32 %v1635, %v1665
          %v1668 = vadd.f32 %v1636, %v1666
          %v1669 = vld [vmem:[%s742 + $0x6] sm:$0xff]
          %v1670 = vld [vmem:[%s742 + $0xe] sm:$0xff]
          %s1671 = sld [smem:[#allocation10 + $0x5e]]
          %v1672 = vstv %s1671
          %v1673 = vmul.f32 %v1669, %v1672
          %v1674 = vmul.f32 %v1670, %v1672
          %v1675 = vadd.f32 %v1643, %v1673
          %v1676 = vadd.f32 %v1644, %v1674
          %v1677 = vld [vmem:[%s761 + $0x6] sm:$0xff]
          %v1678 = vld [vmem:[%s761 + $0xe] sm:$0xff]
          %s1679 = sld [smem:[#allocation10 + $0x5f]]
          %v1680 = vstv %s1679
          %v1681 = vmul.f32 %v1677, %v1680
          %v1682 = vmul.f32 %v1678, %v1680
          %v1683 = vadd.f32 %v1651, %v1681
          %v1684 = vadd.f32 %v1652, %v1682
          %v1685 = vld [vmem:[%s780 + $0x6] sm:$0xff]
          %v1686 = vld [vmem:[%s780 + $0xe] sm:$0xff]
          %s1687 = sld [smem:[#allocation10 + $0x60]]
          %v1688 = vstv %s1687
          %v1689 = vmul.f32 %v1685, %v1688
          %v1690 = vmul.f32 %v1686, %v1688
          %v1691 = vadd.f32 %v1659, %v1689
          %v1692 = vadd.f32 %v1660, %v1690
          %v1693 = vld [vmem:[%s799 + $0x6] sm:$0xff]
          %v1694 = vld [vmem:[%s799 + $0xe] sm:$0xff]
          %s1695 = sld [smem:[#allocation10 + $0x61]]
          %v1696 = vstv %s1695
          %v1697 = vmul.f32 %v1693, %v1696
          %v1698 = vmul.f32 %v1694, %v1696
          %v1699 = vadd.f32 %v1667, %v1697
          %v1700 = vadd.f32 %v1668, %v1698
          %v1701 = vadd.f32 %v1691, %v1699
          %v1702 = vadd.f32 %v1692, %v1700
          %v1703 = vadd.f32 %v1675, %v1683
          %v1704 = vadd.f32 %v1676, %v1684
          %v1705 = vadd.f32 %v1701, %v1703
          %v1706 = vadd.f32 %v1702, %v1704
          %v1707 = vxor.u32 %v1705, 2147483648
          %v1708 = vxor.u32 %v1706, 2147483648
          %v1709 = vmul.f32 %v1707, 1.442695
          %v1710 = vpow.pop %v1709
          %v1711 = vmul.f32 %v1708, 1.442695
          %v1712 = vpow.pop %v1711
          %v1713 = vadd.f32 %v1710, 1.0
          %v1714 = vadd.f32 %v1712, 1.0
          %v1715 = vrcp.pop %v1713
          %v1716 = vmul.f32 1.0, %v1715
          %v1717 = vrcp.pop %v1714
          %v1718 = vmul.f32 1.0, %v1717
          %1719 = vst.msk [vmem:[%s189] sm:$0xff] %vm684, %v1716
          %1720 = vst.msk [vmem:[%s189 + $0x8] sm:$0xff] %vm684, %v1718
        $region48: #{tpu_custom_call.1} parent=27 // pred_fallthru
          _
        %s1721 = sand.u32 %s89, 1
        %s1722 = scalar_lea.sflag [#allocation8], %s1721
        %s1723 = sand.u32 %s89, 1
        %s1724 = smul.addr %s1723, 16
        %s1725 = scalar_lea.vmem [#allocation11], %s1724
        // Predicated region
        $region49: #{tpu_custom_call.1} parent=27 // pred_check
          %p1726 = pneg %p99
        $region50: #{tpu_custom_call.1} parent=27 // pred_check_branch
          %1728 = sbr.rel (%p1726) target = $region52
        $region51: #{tpu_custom_call.1} parent=27 // pred_region
          %s1730 = ssub.s32 256, 256
          %1731 = vsyncadd %s1722, %s1730
          %s1732 = smul.addr %s24, 2
          %s1733 = smul.addr %s1732, 128
          %s1734 = scalar_lea.hbm %s2, %s1733
          %s1735 = sshll.u32 %s1725, 4
          %s1736 = int_to_ptr.vmem [resolvable:$true] %s1735
          %1741 = dma.vmem_to_hbm [thread:$0]  %s1736, 256, %s1734, %s1722, 128, 128, 8
        $region52: #{tpu_custom_call.1} parent=27 // pred_fallthru
          _
      $region28: #{tpu_custom_call.1} parent=5 // pred_fallthru
        _
      %p1742 = scmp.le.s32.totalorder 2, %s15
      // Predicated region
      $region53: #{tpu_custom_call.1} parent=5 // pred_check
        %p1743 = pneg %p1742
      $region54: #{tpu_custom_call.1} parent=5 // pred_check_branch
        %1745 = sbr.rel (%p1743) target = $region56
      $region55: #{tpu_custom_call.1} parent=5 // pred_region
        %s1746 = ssub.s32 %s15, 2
        // Predicated region
        $region57: #{tpu_custom_call.1} parent=55 // pred_check
          %p1747 = pneg %p105
        $region58: #{tpu_custom_call.1} parent=55 // pred_check_branch
          %1749 = sbr.rel (%p1747) target = $region60
        $region59: #{tpu_custom_call.1} parent=55 // pred_region
          %s1750 = sand.u32 %s90, 1
          %s1751 = scalar_lea.sflag [#allocation8], %s1750
          %s1752 = sand.u32 %s90, 1
          %s1753 = smul.addr %s1752, 16
          %s1754 = scalar_lea.vmem [#allocation11], %s1753
          %1755 = dma.done %s1751, 256
        $region60: #{tpu_custom_call.1} parent=55 // pred_fallthru
          _
      $region56: #{tpu_custom_call.1} parent=5 // pred_fallthru
        _
    $region6: #{tpu_custom_call.1} parent=1 // loop_footer
      %s19 = sadd.s32 1, %s15
    $region7: #{tpu_custom_call.1} parent=1 // loop_footer_branch
      %14 = sbr.rel target = $region3
    $region8: #{tpu_custom_call.1} parent=1 // loop_exit
      _
    %1756 = vsyncpa [#allocation7], 1
    %s1757 = scalar_lea.sflag [#allocation7], 1
    %1758 = vsyncpa %s1757, 1
    %1759 = vsyncpa [#allocation8], 1
    %s1760 = scalar_lea.sflag [#allocation8], 1
    %1761 = vsyncpa %s1760, 1
    %1762 = vsyncpa [#allocation9], 1
    %s1763 = scalar_lea.sflag [#allocation9], 1
    %1764 = vsyncpa %s1763, 1

</llo_original>
